<compile_context>
chip_gen: v7x
topology: tpu7x:2x2x1
jax: 0.10.0
libtpu: 0.0.40
codegen_flags: <defaults>
</compile_context>

<pallas_src>
import functools

import jax
import jax.numpy as jnp
from jax.experimental import pallas as pl
from jax.experimental.pallas import tpu as pltpu


def _gelu_exact(x):
    # nn.GELU() default = exact erf-based GELU
    return 0.5 * x * (1.0 + jax.lax.erf(x * (1.0 / jnp.sqrt(2.0))))


def _layernorm(x, gamma, beta, eps=1e-5):
    mu = jnp.mean(x, axis=-1, keepdims=True)
    var = jnp.mean(jnp.square(x - mu), axis=-1, keepdims=True)
    return (x - mu) * jax.lax.rsqrt(var + eps) * gamma + beta


def mixmlp_kernel(depth, *refs):
    """One batch element per grid step.

    refs = [x_tok, We, be, (12 params per mixer block)*depth,
            Wu_wide, bu, Wv_wide, bv, u_out, v_out]
    """
    n_in = 3 + 12 * depth + 4
    it = iter(refs[:n_in])
    u_ref, v_ref = refs[n_in], refs[n_in + 1]

    x = next(it)[0]                         # (N, F) bf16  (block is (1, N, F))
    We = next(it)[...]                      # (F, D) bf16
    be = next(it)[...]                      # (1, D) f32
    N = x.shape[0]

    # patch embedding: Linear(p1*p2*C, dim) + LeakyReLU(0.1)
    h = jnp.dot(x, We, preferred_element_type=jnp.float32) + be     # (N, D) f32
    h = jnp.maximum(h, 0.1 * h)

    for _ in range(depth):
        g1, bt1 = next(it)[...], next(it)[...]     # LayerNorm(dim): (1, D)
        W1t, b1c = next(it)[...], next(it)[...]    # (M, N) bf16, (M, 1) f32
        W2t, b2c = next(it)[...], next(it)[...]    # (N, M) bf16, (N, 1) f32
        g2, bt2 = next(it)[...], next(it)[...]     # LayerNorm(dim): (1, D)
        W3, b3 = next(it)[...], next(it)[...]      # (D, E) bf16, (1, E) f32
        W4, b4 = next(it)[...], next(it)[...]      # (E, D) bf16, (1, D) f32

        # --- token-mixing MLP (contraction over the patch axis, no transposes) ---
        y = _layernorm(h, g1, bt1).astype(jnp.bfloat16)              # (N, D)
        t = jnp.dot(W1t, y, preferred_element_type=jnp.float32) + b1c   # (M, D)
        t = _gelu_exact(t).astype(jnp.bfloat16)                      # Dropout(0.0) = id
        h = h + jnp.dot(W2t, t, preferred_element_type=jnp.float32) + b2c

        # --- channel-mixing MLP ---
        y = _layernorm(h, g2, bt2).astype(jnp.bfloat16)              # (N, D)
        t = jnp.dot(y, W3, preferred_element_type=jnp.float32) + b3     # (N, E)
        t = _gelu_exact(t).astype(jnp.bfloat16)
        h = h + jnp.dot(t, W4, preferred_element_type=jnp.float32) + b4

    Wu_w = next(it)[...]                    # (D, half*HW) bf16
    bu = next(it)[...]                      # (1, HW) f32
    Wv_w = next(it)[...]
    bv = next(it)[...]

    half = N // 2
    HW = bu.shape[-1]
    hb = h.astype(jnp.bfloat16)             # (N, D)

    # flat split == first N/2 patches vs last N/2 patches.
    # One wide MXU matmul per head; then pick the "diagonal" 256-wide column
    # blocks (static, 128-aligned lane slices) and sum over patches.
    Tu = jnp.dot(hb[:half, :], Wu_w, preferred_element_type=jnp.float32)  # (half, half*HW)
    Tv = jnp.dot(hb[half:, :], Wv_w, preferred_element_type=jnp.float32)

    u = bu
    v = bv
    for n in range(half):
        u = u + Tu[n:n + 1, n * HW:(n + 1) * HW]
        v = v + Tv[n:n + 1, n * HW:(n + 1) * HW]

    u_ref[...] = u[None]                    # (1, 1, HW)
    v_ref[...] = v[None]


def init_params(key, image_size, patch_size, dim, depth, in_ch=5, ef=4):
    """PyTorch-like parameter layout: W as (in, out), biases as (1, out)."""
    H, W = image_size
    p1, p2 = patch_size
    N = (H // p1) * (W // p2)
    F = p1 * p2 * in_ch
    keys = iter(jax.random.split(key, 8 + 8 * depth))

    def lin(k, fan_in, fan_out):
        w = jax.random.normal(k, (fan_in, fan_out), jnp.float32) * 0.02
        b = jnp.zeros((1, fan_out), jnp.float32)
        return [w, b]

    params = []
    params += lin(next(keys), F, dim)                       # patch embedding
    for _ in range(depth):
        params += [jnp.ones((1, dim), jnp.float32), jnp.zeros((1, dim), jnp.float32)]
        params += lin(next(keys), N, N * ef)                # token mix up
        params += lin(next(keys), N * ef, N)                # token mix down
        params += [jnp.ones((1, dim), jnp.float32), jnp.zeros((1, dim), jnp.float32)]
        params += lin(next(keys), dim, dim * ef)            # channel mix up
        params += lin(next(keys), dim * ef, dim)            # channel mix down
    params += lin(next(keys), N * dim // 2, H * W)          # u_layer
    params += lin(next(keys), N * dim // 2, H * W)          # v_layer
    return params


@functools.partial(jax.jit, static_argnames=("patch_size", "depth"))
def mixmlp_forward(x, params, *, patch_size, depth):
    B, C, H, W = x.shape
    p1, p2 = patch_size
    hh, ww = H // p1, W // p2
    N = hh * ww
    HW = H * W
    F = p1 * p2 * C

    # patchify: 'b c (h p1) (w p2) -> b (h w) (p1 p2 c)'
    x_tok = x.reshape(B, C, hh, p1, ww, p2).transpose(0, 2, 4, 3, 5, 1)
    x_tok = x_tok.reshape(B, N, F).astype(jnp.bfloat16)

    # --- wrapper-side (free) parameter repacking for the kernel ---
    it = iter(params)
    We, be = next(it).astype(jnp.bfloat16), next(it)
    kernel_inputs = [x_tok, We, be]
    for _ in range(depth):
        g1, bt1 = next(it), next(it)
        W1, b1 = next(it), next(it)
        W2, b2 = next(it), next(it)
        g2, bt2 = next(it), next(it)
        W3, b3 = next(it), next(it)
        W4, b4 = next(it), next(it)
        kernel_inputs += [
            g1, bt1,
            W1.T.astype(jnp.bfloat16), b1.reshape(-1, 1),   # token mix up (pre-transposed)
            W2.T.astype(jnp.bfloat16), b2.reshape(-1, 1),   # token mix down (pre-transposed)
            g2, bt2,
            W3.astype(jnp.bfloat16), b3,                    # channel mix up
            W4.astype(jnp.bfloat16), b4,                    # channel mix down
        ]
    Wu, bu = next(it), next(it)
    Wv, bv = next(it), next(it)
    half = N // 2
    D = Wu.shape[0] // half

    def head_w(Wh):
        # (half*D, HW) -> (D, half*HW) with Wh_wide[d, n*HW + o] = Wh[n*D + d, o]
        return (Wh.reshape(half, D, HW).transpose(1, 0, 2)
                  .reshape(D, half * HW).astype(jnp.bfloat16))

    kernel_inputs += [head_w(Wu), bu, head_w(Wv), bv]

    # --- BlockSpecs: batch-split x/outputs; every parameter is a full block ---
    in_specs = [pl.BlockSpec((1, N, F), lambda i: (i, 0, 0))]
    for p in kernel_inputs[1:]:
        in_specs.append(pl.BlockSpec(p.shape, lambda i, _nd=p.ndim: (0,) * _nd))

    out_shape = (jax.ShapeDtypeStruct((B, 1, HW), jnp.float32),
                 jax.ShapeDtypeStruct((B, 1, HW), jnp.float32))
    out_specs = (pl.BlockSpec((1, 1, HW), lambda i: (i, 0, 0)),
                 pl.BlockSpec((1, 1, HW), lambda i: (i, 0, 0)))

    kernel = functools.partial(mixmlp_kernel, depth)
    u, v = pl.pallas_call(
        kernel,
        grid=(B,),
        in_specs=in_specs,
        out_specs=out_specs,
        out_shape=out_shape,
        compiler_params=pltpu.CompilerParams(
            dimension_semantics=("parallel",),          # megacore split over batch (v7x)
            vmem_limit_bytes=32 * 1024 * 1024,
        ),
    )(*kernel_inputs)
    return u[:, 0, :], v[:, 0, :]


def mixmlp_reference(x, params, *, patch_size, depth):
    """Plain-JAX f32 reference mirroring the PyTorch forward (torch.view flatten + split)."""
    B, C, H, W = x.shape
    p1, p2 = patch_size
    hh, ww = H // p1, W // p2
    N = hh * ww
    x_tok = x.reshape(B, C, hh, p1, ww, p2).transpose(0, 2, 4, 3, 5, 1)
    x_tok = x_tok.reshape(B, N, p1 * p2 * C).astype(jnp.float32)

    it = iter(params)
    We, be = next(it), next(it)
    h = x_tok @ We + be[0]
    h = jnp.where(h > 0, h, 0.1 * h)
    for _ in range(depth):
        g1, bt1 = next(it)[0], next(it)[0]
        W1, b1 = next(it), next(it)[0]
        W2, b2 = next(it), next(it)[0]
        g2, bt2 = next(it)[0], next(it)[0]
        W3, b3 = next(it), next(it)[0]
        W4, b4 = next(it), next(it)[0]
        t = jnp.swapaxes(_layernorm(h, g1, bt1), 1, 2)
        t = _gelu_exact(t @ W1 + b1) @ W2 + b2
        h = h + jnp.swapaxes(t, 1, 2)
        y = _layernorm(h, g2, bt2)
        h = h + (_gelu_exact(y @ W3 + b3) @ W4 + b4)
    Wu, bu = next(it), next(it)[0]
    Wv, bv = next(it), next(it)[0]
    flat = h.reshape(B, -1)
    half = flat.shape[1] // 2
    u = flat[:, :half] @ Wu + bu
    v = flat[:, half:] @ Wv + bv
    return u, v


if __name__ == "__main__":
    image_size = (16, 16)
    patch_size = (4, 4)
    dim = 32
    depth = 2
    B, C = 2, 5  # input channels fixed to 5 by Linear(p1*p2*5, dim) in the module

    key = jax.random.PRNGKey(0)
    kx, kp = jax.random.split(key)
    x = jax.random.normal(kx, (B, C, image_size[0], image_size[1]), jnp.float32)
    params = init_params(kp, image_size, patch_size, dim, depth, in_ch=C)

    u, v = mixmlp_forward(x, params, patch_size=patch_size, depth=depth)
    jax.block_until_ready((u, v))

    u_ref, v_ref = mixmlp_reference(x, params, patch_size=patch_size, depth=depth)
    assert u.shape == (B, image_size[0] * image_size[1])
    assert v.shape == (B, image_size[0] * image_size[1])
    # bf16 MXU inputs with f32 accumulation -> compare to f32 reference at a
    # bf16-appropriate tolerance.
    assert jnp.allclose(u, u_ref, atol=2e-2, rtol=2e-2), float(jnp.max(jnp.abs(u - u_ref)))
    assert jnp.allclose(v, v_ref, atol=2e-2, rtol=2e-2), float(jnp.max(jnp.abs(v - v_ref)))
    print("KERNEL_OK")
</pallas_src>

<mosaic_0001>
module attributes {stable_mosaic.version = 11 : i64} {
  func.func @mixmlp_kernel(%arg0: i32, %arg1: memref<1x16x80xbf16, #tpu.memory_space<vmem>>, %arg2: memref<80x32xbf16, #tpu.memory_space<vmem>>, %arg3: memref<1x32xf32, #tpu.memory_space<vmem>>, %arg4: memref<1x32xf32, #tpu.memory_space<vmem>>, %arg5: memref<1x32xf32, #tpu.memory_space<vmem>>, %arg6: memref<64x16xbf16, #tpu.memory_space<vmem>>, %arg7: memref<64x1xf32, #tpu.memory_space<vmem>>, %arg8: memref<16x64xbf16, #tpu.memory_space<vmem>>, %arg9: memref<16x1xf32, #tpu.memory_space<vmem>>, %arg10: memref<1x32xf32, #tpu.memory_space<vmem>>, %arg11: memref<1x32xf32, #tpu.memory_space<vmem>>, %arg12: memref<32x128xbf16, #tpu.memory_space<vmem>>, %arg13: memref<1x128xf32, #tpu.memory_space<vmem>>, %arg14: memref<128x32xbf16, #tpu.memory_space<vmem>>, %arg15: memref<1x32xf32, #tpu.memory_space<vmem>>, %arg16: memref<1x32xf32, #tpu.memory_space<vmem>>, %arg17: memref<1x32xf32, #tpu.memory_space<vmem>>, %arg18: memref<64x16xbf16, #tpu.memory_space<vmem>>, %arg19: memref<64x1xf32, #tpu.memory_space<vmem>>, %arg20: memref<16x64xbf16, #tpu.memory_space<vmem>>, %arg21: memref<16x1xf32, #tpu.memory_space<vmem>>, %arg22: memref<1x32xf32, #tpu.memory_space<vmem>>, %arg23: memref<1x32xf32, #tpu.memory_space<vmem>>, %arg24: memref<32x128xbf16, #tpu.memory_space<vmem>>, %arg25: memref<1x128xf32, #tpu.memory_space<vmem>>, %arg26: memref<128x32xbf16, #tpu.memory_space<vmem>>, %arg27: memref<1x32xf32, #tpu.memory_space<vmem>>, %arg28: memref<32x2048xbf16, #tpu.memory_space<vmem>>, %arg29: memref<1x256xf32, #tpu.memory_space<vmem>>, %arg30: memref<32x2048xbf16, #tpu.memory_space<vmem>>, %arg31: memref<1x256xf32, #tpu.memory_space<vmem>>, %arg32: memref<1x1x256xf32, #tpu.memory_space<vmem>>, %arg33: memref<1x1x256xf32, #tpu.memory_space<vmem>>) attributes {dimension_semantics = [#tpu.dimension_semantics<parallel>], iteration_bounds = array<i64: 2>, scalar_prefetch = 0 : i64, scratch_operands = 0 : i64, tpu.core_type = #tpu.core_type<tc>, window_params = [{transform_indices = @transform_0, window_bounds = array<i64: 1, 16, 80>}, {pipeline_mode = #tpu.pipeline_mode<synchronous>, transform_indices = @transform_1, window_bounds = array<i64: 80, 32>}, {pipeline_mode = #tpu.pipeline_mode<synchronous>, transform_indices = @transform_2, window_bounds = array<i64: 1, 32>}, {pipeline_mode = #tpu.pipeline_mode<synchronous>, transform_indices = @transform_3, window_bounds = array<i64: 1, 32>}, {pipeline_mode = #tpu.pipeline_mode<synchronous>, transform_indices = @transform_4, window_bounds = array<i64: 1, 32>}, {pipeline_mode = #tpu.pipeline_mode<synchronous>, transform_indices = @transform_5, window_bounds = array<i64: 64, 16>}, {pipeline_mode = #tpu.pipeline_mode<synchronous>, transform_indices = @transform_6, window_bounds = array<i64: 64, 1>}, {pipeline_mode = #tpu.pipeline_mode<synchronous>, transform_indices = @transform_7, window_bounds = array<i64: 16, 64>}, {pipeline_mode = #tpu.pipeline_mode<synchronous>, transform_indices = @transform_8, window_bounds = array<i64: 16, 1>}, {pipeline_mode = #tpu.pipeline_mode<synchronous>, transform_indices = @transform_9, window_bounds = array<i64: 1, 32>}, {pipeline_mode = #tpu.pipeline_mode<synchronous>, transform_indices = @transform_10, window_bounds = array<i64: 1, 32>}, {pipeline_mode = #tpu.pipeline_mode<synchronous>, transform_indices = @transform_11, window_bounds = array<i64: 32, 128>}, {pipeline_mode = #tpu.pipeline_mode<synchronous>, transform_indices = @transform_12, window_bounds = array<i64: 1, 128>}, {pipeline_mode = #tpu.pipeline_mode<synchronous>, transform_indices = @transform_13, window_bounds = array<i64: 128, 32>}, {pipeline_mode = #tpu.pipeline_mode<synchronous>, transform_indices = @transform_14, window_bounds = array<i64: 1, 32>}, {pipeline_mode = #tpu.pipeline_mode<synchronous>, transform_indices = @transform_15, window_bounds = array<i64: 1, 32>}, {pipeline_mode = #tpu.pipeline_mode<synchronous>, transform_indices = @transform_16, window_bounds = array<i64: 1, 32>}, {pipeline_mode = #tpu.pipeline_mode<synchronous>, transform_indices = @transform_17, window_bounds = array<i64: 64, 16>}, {pipeline_mode = #tpu.pipeline_mode<synchronous>, transform_indices = @transform_18, window_bounds = array<i64: 64, 1>}, {pipeline_mode = #tpu.pipeline_mode<synchronous>, transform_indices = @transform_19, window_bounds = array<i64: 16, 64>}, {pipeline_mode = #tpu.pipeline_mode<synchronous>, transform_indices = @transform_20, window_bounds = array<i64: 16, 1>}, {pipeline_mode = #tpu.pipeline_mode<synchronous>, transform_indices = @transform_21, window_bounds = array<i64: 1, 32>}, {pipeline_mode = #tpu.pipeline_mode<synchronous>, transform_indices = @transform_22, window_bounds = array<i64: 1, 32>}, {pipeline_mode = #tpu.pipeline_mode<synchronous>, transform_indices = @transform_23, window_bounds = array<i64: 32, 128>}, {pipeline_mode = #tpu.pipeline_mode<synchronous>, transform_indices = @transform_24, window_bounds = array<i64: 1, 128>}, {pipeline_mode = #tpu.pipeline_mode<synchronous>, transform_indices = @transform_25, window_bounds = array<i64: 128, 32>}, {pipeline_mode = #tpu.pipeline_mode<synchronous>, transform_indices = @transform_26, window_bounds = array<i64: 1, 32>}, {pipeline_mode = #tpu.pipeline_mode<synchronous>, transform_indices = @transform_27, window_bounds = array<i64: 32, 2048>}, {pipeline_mode = #tpu.pipeline_mode<synchronous>, transform_indices = @transform_28, window_bounds = array<i64: 1, 256>}, {pipeline_mode = #tpu.pipeline_mode<synchronous>, transform_indices = @transform_29, window_bounds = array<i64: 32, 2048>}, {pipeline_mode = #tpu.pipeline_mode<synchronous>, transform_indices = @transform_30, window_bounds = array<i64: 1, 256>}, {transform_indices = @transform_31, window_bounds = array<i64: 1, 1, 256>}, {transform_indices = @transform_32, window_bounds = array<i64: 1, 1, 256>}]} {
    %c0 = arith.constant 0 : index
    %c0_0 = arith.constant 0 : index
    %c0_1 = arith.constant 0 : index
    %0 = vector.load %arg1[%c0, %c0_0, %c0_1] : memref<1x16x80xbf16, #tpu.memory_space<vmem>>, vector<1x16x80xbf16>
    %1 = vector.shape_cast %0 : vector<1x16x80xbf16> to vector<16x80xbf16>
    %c0_2 = arith.constant 0 : index
    %c0_3 = arith.constant 0 : index
    %2 = vector.load %arg2[%c0_2, %c0_3] : memref<80x32xbf16, #tpu.memory_space<vmem>>, vector<80x32xbf16>
    %c0_4 = arith.constant 0 : index
    %c0_5 = arith.constant 0 : index
    %3 = vector.load %arg3[%c0_4, %c0_5] : memref<1x32xf32, #tpu.memory_space<vmem>>, vector<1x32xf32>
    %cst = arith.constant dense<0.000000e+00> : vector<16x32xf32>
    %4 = tpu.matmul %1, %2, %cst {dimension_numbers = #tpu.dot_dimension_numbers<[1], [0], [0], [1], [0, 0, 1, 1], [], []>} : vector<16x80xbf16>, vector<80x32xbf16>, vector<16x32xf32> -> vector<16x32xf32>
    %5 = vector.broadcast %3 : vector<1x32xf32> to vector<16x32xf32>
    %6 = arith.addf %4, %5 : vector<16x32xf32>
    %cst_6 = arith.constant 1.000000e-01 : f32
    %7 = vector.broadcast %cst_6 : f32 to vector<16x32xf32>
    %8 = arith.mulf %7, %6 : vector<16x32xf32>
    %9 = arith.maximumf %6, %8 : vector<16x32xf32>
    %c0_7 = arith.constant 0 : index
    %c0_8 = arith.constant 0 : index
    %10 = vector.load %arg4[%c0_7, %c0_8] : memref<1x32xf32, #tpu.memory_space<vmem>>, vector<1x32xf32>
    %c0_9 = arith.constant 0 : index
    %c0_10 = arith.constant 0 : index
    %11 = vector.load %arg5[%c0_9, %c0_10] : memref<1x32xf32, #tpu.memory_space<vmem>>, vector<1x32xf32>
    %c0_11 = arith.constant 0 : index
    %c0_12 = arith.constant 0 : index
    %12 = vector.load %arg6[%c0_11, %c0_12] : memref<64x16xbf16, #tpu.memory_space<vmem>>, vector<64x16xbf16>
    %c0_13 = arith.constant 0 : index
    %c0_14 = arith.constant 0 : index
    %13 = vector.load %arg7[%c0_13, %c0_14] : memref<64x1xf32, #tpu.memory_space<vmem>>, vector<64x1xf32>
    %c0_15 = arith.constant 0 : index
    %c0_16 = arith.constant 0 : index
    %14 = vector.load %arg8[%c0_15, %c0_16] : memref<16x64xbf16, #tpu.memory_space<vmem>>, vector<16x64xbf16>
    %c0_17 = arith.constant 0 : index
    %c0_18 = arith.constant 0 : index
    %15 = vector.load %arg9[%c0_17, %c0_18] : memref<16x1xf32, #tpu.memory_space<vmem>>, vector<16x1xf32>
    %c0_19 = arith.constant 0 : index
    %c0_20 = arith.constant 0 : index
    %16 = vector.load %arg10[%c0_19, %c0_20] : memref<1x32xf32, #tpu.memory_space<vmem>>, vector<1x32xf32>
    %c0_21 = arith.constant 0 : index
    %c0_22 = arith.constant 0 : index
    %17 = vector.load %arg11[%c0_21, %c0_22] : memref<1x32xf32, #tpu.memory_space<vmem>>, vector<1x32xf32>
    %c0_23 = arith.constant 0 : index
    %c0_24 = arith.constant 0 : index
    %18 = vector.load %arg12[%c0_23, %c0_24] : memref<32x128xbf16, #tpu.memory_space<vmem>>, vector<32x128xbf16>
    %c0_25 = arith.constant 0 : index
    %c0_26 = arith.constant 0 : index
    %19 = vector.load %arg13[%c0_25, %c0_26] : memref<1x128xf32, #tpu.memory_space<vmem>>, vector<1x128xf32>
    %c0_27 = arith.constant 0 : index
    %c0_28 = arith.constant 0 : index
    %20 = vector.load %arg14[%c0_27, %c0_28] : memref<128x32xbf16, #tpu.memory_space<vmem>>, vector<128x32xbf16>
    %c0_29 = arith.constant 0 : index
    %c0_30 = arith.constant 0 : index
    %21 = vector.load %arg15[%c0_29, %c0_30] : memref<1x32xf32, #tpu.memory_space<vmem>>, vector<1x32xf32>
    %cst_31 = arith.constant dense<0.000000e+00> : vector<16xf32>
    %22 = vector.multi_reduction <add>, %9, %cst_31 [1] : vector<16x32xf32> to vector<16xf32>
    %23 = vector.shape_cast %22 : vector<16xf32> to vector<16x1xf32>
    %cst_32 = arith.constant 3.200000e+01 : f32
    %24 = vector.broadcast %cst_32 : f32 to vector<16x1xf32>
    %25 = arith.divf %23, %24 : vector<16x1xf32>
    %26 = vector.broadcast %25 : vector<16x1xf32> to vector<16x32xf32>
    %27 = arith.subf %9, %26 : vector<16x32xf32>
    %28 = arith.mulf %27, %27 : vector<16x32xf32>
    %cst_33 = arith.constant dense<0.000000e+00> : vector<16xf32>
    %29 = vector.multi_reduction <add>, %28, %cst_33 [1] : vector<16x32xf32> to vector<16xf32>
    %30 = vector.shape_cast %29 : vector<16xf32> to vector<16x1xf32>
    %cst_34 = arith.constant 3.200000e+01 : f32
    %31 = vector.broadcast %cst_34 : f32 to vector<16x1xf32>
    %32 = arith.divf %30, %31 : vector<16x1xf32>
    %33 = vector.broadcast %25 : vector<16x1xf32> to vector<16x32xf32>
    %34 = arith.subf %9, %33 : vector<16x32xf32>
    %cst_35 = arith.constant 9.99999974E-6 : f32
    %35 = vector.broadcast %cst_35 : f32 to vector<16x1xf32>
    %36 = arith.addf %32, %35 : vector<16x1xf32>
    %37 = math.rsqrt %36 : vector<16x1xf32>
    %38 = vector.broadcast %37 : vector<16x1xf32> to vector<16x32xf32>
    %39 = arith.mulf %34, %38 : vector<16x32xf32>
    %40 = vector.broadcast %10 : vector<1x32xf32> to vector<16x32xf32>
    %41 = arith.mulf %39, %40 : vector<16x32xf32>
    %42 = vector.broadcast %11 : vector<1x32xf32> to vector<16x32xf32>
    %43 = arith.addf %41, %42 : vector<16x32xf32>
    %44 = arith.truncf %43 : vector<16x32xf32> to vector<16x32xbf16>
    %cst_36 = arith.constant dense<0.000000e+00> : vector<64x32xf32>
    %45 = tpu.matmul %12, %44, %cst_36 {dimension_numbers = #tpu.dot_dimension_numbers<[1], [0], [0], [1], [0, 0, 1, 1], [], []>} : vector<64x16xbf16>, vector<16x32xbf16>, vector<64x32xf32> -> vector<64x32xf32>
    %46 = vector.broadcast %13 : vector<64x1xf32> to vector<64x32xf32>
    %47 = arith.addf %45, %46 : vector<64x32xf32>
    %cst_37 = arith.constant 5.000000e-01 : f32
    %48 = vector.broadcast %cst_37 : f32 to vector<64x32xf32>
    %49 = arith.mulf %48, %47 : vector<64x32xf32>
    %cst_38 = arith.constant 2.000000e+00 : f32
    %50 = math.sqrt %cst_38 : f32
    %cst_39 = arith.constant 1.000000e+00 : f32
    %51 = arith.divf %cst_39, %50 : f32
    %52 = vector.broadcast %51 : f32 to vector<64x32xf32>
    %53 = arith.mulf %47, %52 : vector<64x32xf32>
    %54 = math.erf %53 : vector<64x32xf32>
    %cst_40 = arith.constant 1.000000e+00 : f32
    %55 = vector.broadcast %cst_40 : f32 to vector<64x32xf32>
    %56 = arith.addf %55, %54 : vector<64x32xf32>
    %57 = arith.mulf %49, %56 : vector<64x32xf32>
    %58 = arith.truncf %57 : vector<64x32xf32> to vector<64x32xbf16>
    %cst_41 = arith.constant dense<0.000000e+00> : vector<16x32xf32>
    %59 = tpu.matmul %14, %58, %cst_41 {dimension_numbers = #tpu.dot_dimension_numbers<[1], [0], [0], [1], [0, 0, 1, 1], [], []>} : vector<16x64xbf16>, vector<64x32xbf16>, vector<16x32xf32> -> vector<16x32xf32>
    %60 = arith.addf %9, %59 : vector<16x32xf32>
    %61 = vector.broadcast %15 : vector<16x1xf32> to vector<16x32xf32>
    %62 = arith.addf %60, %61 : vector<16x32xf32>
    %cst_42 = arith.constant dense<0.000000e+00> : vector<16xf32>
    %63 = vector.multi_reduction <add>, %62, %cst_42 [1] : vector<16x32xf32> to vector<16xf32>
    %64 = vector.shape_cast %63 : vector<16xf32> to vector<16x1xf32>
    %cst_43 = arith.constant 3.200000e+01 : f32
    %65 = vector.broadcast %cst_43 : f32 to vector<16x1xf32>
    %66 = arith.divf %64, %65 : vector<16x1xf32>
    %67 = vector.broadcast %66 : vector<16x1xf32> to vector<16x32xf32>
    %68 = arith.subf %62, %67 : vector<16x32xf32>
    %69 = arith.mulf %68, %68 : vector<16x32xf32>
    %cst_44 = arith.constant dense<0.000000e+00> : vector<16xf32>
    %70 = vector.multi_reduction <add>, %69, %cst_44 [1] : vector<16x32xf32> to vector<16xf32>
    %71 = vector.shape_cast %70 : vector<16xf32> to vector<16x1xf32>
    %cst_45 = arith.constant 3.200000e+01 : f32
    %72 = vector.broadcast %cst_45 : f32 to vector<16x1xf32>
    %73 = arith.divf %71, %72 : vector<16x1xf32>
    %74 = vector.broadcast %66 : vector<16x1xf32> to vector<16x32xf32>
    %75 = arith.subf %62, %74 : vector<16x32xf32>
    %cst_46 = arith.constant 9.99999974E-6 : f32
    %76 = vector.broadcast %cst_46 : f32 to vector<16x1xf32>
    %77 = arith.addf %73, %76 : vector<16x1xf32>
    %78 = math.rsqrt %77 : vector<16x1xf32>
    %79 = vector.broadcast %78 : vector<16x1xf32> to vector<16x32xf32>
    %80 = arith.mulf %75, %79 : vector<16x32xf32>
    %81 = vector.broadcast %16 : vector<1x32xf32> to vector<16x32xf32>
    %82 = arith.mulf %80, %81 : vector<16x32xf32>
    %83 = vector.broadcast %17 : vector<1x32xf32> to vector<16x32xf32>
    %84 = arith.addf %82, %83 : vector<16x32xf32>
    %85 = arith.truncf %84 : vector<16x32xf32> to vector<16x32xbf16>
    %cst_47 = arith.constant dense<0.000000e+00> : vector<16x128xf32>
    %86 = tpu.matmul %85, %18, %cst_47 {dimension_numbers = #tpu.dot_dimension_numbers<[1], [0], [0], [1], [0, 0, 1, 1], [], []>} : vector<16x32xbf16>, vector<32x128xbf16>, vector<16x128xf32> -> vector<16x128xf32>
    %87 = vector.broadcast %19 : vector<1x128xf32> to vector<16x128xf32>
    %88 = arith.addf %86, %87 : vector<16x128xf32>
    %cst_48 = arith.constant 5.000000e-01 : f32
    %89 = vector.broadcast %cst_48 : f32 to vector<16x128xf32>
    %90 = arith.mulf %89, %88 : vector<16x128xf32>
    %cst_49 = arith.constant 2.000000e+00 : f32
    %91 = math.sqrt %cst_49 : f32
    %cst_50 = arith.constant 1.000000e+00 : f32
    %92 = arith.divf %cst_50, %91 : f32
    %93 = vector.broadcast %92 : f32 to vector<16x128xf32>
    %94 = arith.mulf %88, %93 : vector<16x128xf32>
    %95 = math.erf %94 : vector<16x128xf32>
    %cst_51 = arith.constant 1.000000e+00 : f32
    %96 = vector.broadcast %cst_51 : f32 to vector<16x128xf32>
    %97 = arith.addf %96, %95 : vector<16x128xf32>
    %98 = arith.mulf %90, %97 : vector<16x128xf32>
    %99 = arith.truncf %98 : vector<16x128xf32> to vector<16x128xbf16>
    %cst_52 = arith.constant dense<0.000000e+00> : vector<16x32xf32>
    %100 = tpu.matmul %99, %20, %cst_52 {dimension_numbers = #tpu.dot_dimension_numbers<[1], [0], [0], [1], [0, 0, 1, 1], [], []>} : vector<16x128xbf16>, vector<128x32xbf16>, vector<16x32xf32> -> vector<16x32xf32>
    %101 = arith.addf %62, %100 : vector<16x32xf32>
    %102 = vector.broadcast %21 : vector<1x32xf32> to vector<16x32xf32>
    %103 = arith.addf %101, %102 : vector<16x32xf32>
    %c0_53 = arith.constant 0 : index
    %c0_54 = arith.constant 0 : index
    %104 = vector.load %arg16[%c0_53, %c0_54] : memref<1x32xf32, #tpu.memory_space<vmem>>, vector<1x32xf32>
    %c0_55 = arith.constant 0 : index
    %c0_56 = arith.constant 0 : index
    %105 = vector.load %arg17[%c0_55, %c0_56] : memref<1x32xf32, #tpu.memory_space<vmem>>, vector<1x32xf32>
    %c0_57 = arith.constant 0 : index
    %c0_58 = arith.constant 0 : index
    %106 = vector.load %arg18[%c0_57, %c0_58] : memref<64x16xbf16, #tpu.memory_space<vmem>>, vector<64x16xbf16>
    %c0_59 = arith.constant 0 : index
    %c0_60 = arith.constant 0 : index
    %107 = vector.load %arg19[%c0_59, %c0_60] : memref<64x1xf32, #tpu.memory_space<vmem>>, vector<64x1xf32>
    %c0_61 = arith.constant 0 : index
    %c0_62 = arith.constant 0 : index
    %108 = vector.load %arg20[%c0_61, %c0_62] : memref<16x64xbf16, #tpu.memory_space<vmem>>, vector<16x64xbf16>
    %c0_63 = arith.constant 0 : index
    %c0_64 = arith.constant 0 : index
    %109 = vector.load %arg21[%c0_63, %c0_64] : memref<16x1xf32, #tpu.memory_space<vmem>>, vector<16x1xf32>
    %c0_65 = arith.constant 0 : index
    %c0_66 = arith.constant 0 : index
    %110 = vector.load %arg22[%c0_65, %c0_66] : memref<1x32xf32, #tpu.memory_space<vmem>>, vector<1x32xf32>
    %c0_67 = arith.constant 0 : index
    %c0_68 = arith.constant 0 : index
    %111 = vector.load %arg23[%c0_67, %c0_68] : memref<1x32xf32, #tpu.memory_space<vmem>>, vector<1x32xf32>
    %c0_69 = arith.constant 0 : index
    %c0_70 = arith.constant 0 : index
    %112 = vector.load %arg24[%c0_69, %c0_70] : memref<32x128xbf16, #tpu.memory_space<vmem>>, vector<32x128xbf16>
    %c0_71 = arith.constant 0 : index
    %c0_72 = arith.constant 0 : index
    %113 = vector.load %arg25[%c0_71, %c0_72] : memref<1x128xf32, #tpu.memory_space<vmem>>, vector<1x128xf32>
    %c0_73 = arith.constant 0 : index
    %c0_74 = arith.constant 0 : index
    %114 = vector.load %arg26[%c0_73, %c0_74] : memref<128x32xbf16, #tpu.memory_space<vmem>>, vector<128x32xbf16>
    %c0_75 = arith.constant 0 : index
    %c0_76 = arith.constant 0 : index
    %115 = vector.load %arg27[%c0_75, %c0_76] : memref<1x32xf32, #tpu.memory_space<vmem>>, vector<1x32xf32>
    %cst_77 = arith.constant dense<0.000000e+00> : vector<16xf32>
    %116 = vector.multi_reduction <add>, %103, %cst_77 [1] : vector<16x32xf32> to vector<16xf32>
    %117 = vector.shape_cast %116 : vector<16xf32> to vector<16x1xf32>
    %cst_78 = arith.constant 3.200000e+01 : f32
    %118 = vector.broadcast %cst_78 : f32 to vector<16x1xf32>
    %119 = arith.divf %117, %118 : vector<16x1xf32>
    %120 = vector.broadcast %119 : vector<16x1xf32> to vector<16x32xf32>
    %121 = arith.subf %103, %120 : vector<16x32xf32>
    %122 = arith.mulf %121, %121 : vector<16x32xf32>
    %cst_79 = arith.constant dense<0.000000e+00> : vector<16xf32>
    %123 = vector.multi_reduction <add>, %122, %cst_79 [1] : vector<16x32xf32> to vector<16xf32>
    %124 = vector.shape_cast %123 : vector<16xf32> to vector<16x1xf32>
    %cst_80 = arith.constant 3.200000e+01 : f32
    %125 = vector.broadcast %cst_80 : f32 to vector<16x1xf32>
    %126 = arith.divf %124, %125 : vector<16x1xf32>
    %127 = vector.broadcast %119 : vector<16x1xf32> to vector<16x32xf32>
    %128 = arith.subf %103, %127 : vector<16x32xf32>
    %cst_81 = arith.constant 9.99999974E-6 : f32
    %129 = vector.broadcast %cst_81 : f32 to vector<16x1xf32>
    %130 = arith.addf %126, %129 : vector<16x1xf32>
    %131 = math.rsqrt %130 : vector<16x1xf32>
    %132 = vector.broadcast %131 : vector<16x1xf32> to vector<16x32xf32>
    %133 = arith.mulf %128, %132 : vector<16x32xf32>
    %134 = vector.broadcast %104 : vector<1x32xf32> to vector<16x32xf32>
    %135 = arith.mulf %133, %134 : vector<16x32xf32>
    %136 = vector.broadcast %105 : vector<1x32xf32> to vector<16x32xf32>
    %137 = arith.addf %135, %136 : vector<16x32xf32>
    %138 = arith.truncf %137 : vector<16x32xf32> to vector<16x32xbf16>
    %cst_82 = arith.constant dense<0.000000e+00> : vector<64x32xf32>
    %139 = tpu.matmul %106, %138, %cst_82 {dimension_numbers = #tpu.dot_dimension_numbers<[1], [0], [0], [1], [0, 0, 1, 1], [], []>} : vector<64x16xbf16>, vector<16x32xbf16>, vector<64x32xf32> -> vector<64x32xf32>
    %140 = vector.broadcast %107 : vector<64x1xf32> to vector<64x32xf32>
    %141 = arith.addf %139, %140 : vector<64x32xf32>
    %cst_83 = arith.constant 5.000000e-01 : f32
    %142 = vector.broadcast %cst_83 : f32 to vector<64x32xf32>
    %143 = arith.mulf %142, %141 : vector<64x32xf32>
    %cst_84 = arith.constant 2.000000e+00 : f32
    %144 = math.sqrt %cst_84 : f32
    %cst_85 = arith.constant 1.000000e+00 : f32
    %145 = arith.divf %cst_85, %144 : f32
    %146 = vector.broadcast %145 : f32 to vector<64x32xf32>
    %147 = arith.mulf %141, %146 : vector<64x32xf32>
    %148 = math.erf %147 : vector<64x32xf32>
    %cst_86 = arith.constant 1.000000e+00 : f32
    %149 = vector.broadcast %cst_86 : f32 to vector<64x32xf32>
    %150 = arith.addf %149, %148 : vector<64x32xf32>
    %151 = arith.mulf %143, %150 : vector<64x32xf32>
    %152 = arith.truncf %151 : vector<64x32xf32> to vector<64x32xbf16>
    %cst_87 = arith.constant dense<0.000000e+00> : vector<16x32xf32>
    %153 = tpu.matmul %108, %152, %cst_87 {dimension_numbers = #tpu.dot_dimension_numbers<[1], [0], [0], [1], [0, 0, 1, 1], [], []>} : vector<16x64xbf16>, vector<64x32xbf16>, vector<16x32xf32> -> vector<16x32xf32>
    %154 = arith.addf %103, %153 : vector<16x32xf32>
    %155 = vector.broadcast %109 : vector<16x1xf32> to vector<16x32xf32>
    %156 = arith.addf %154, %155 : vector<16x32xf32>
    %cst_88 = arith.constant dense<0.000000e+00> : vector<16xf32>
    %157 = vector.multi_reduction <add>, %156, %cst_88 [1] : vector<16x32xf32> to vector<16xf32>
    %158 = vector.shape_cast %157 : vector<16xf32> to vector<16x1xf32>
    %cst_89 = arith.constant 3.200000e+01 : f32
    %159 = vector.broadcast %cst_89 : f32 to vector<16x1xf32>
    %160 = arith.divf %158, %159 : vector<16x1xf32>
    %161 = vector.broadcast %160 : vector<16x1xf32> to vector<16x32xf32>
    %162 = arith.subf %156, %161 : vector<16x32xf32>
    %163 = arith.mulf %162, %162 : vector<16x32xf32>
    %cst_90 = arith.constant dense<0.000000e+00> : vector<16xf32>
    %164 = vector.multi_reduction <add>, %163, %cst_90 [1] : vector<16x32xf32> to vector<16xf32>
    %165 = vector.shape_cast %164 : vector<16xf32> to vector<16x1xf32>
    %cst_91 = arith.constant 3.200000e+01 : f32
    %166 = vector.broadcast %cst_91 : f32 to vector<16x1xf32>
    %167 = arith.divf %165, %166 : vector<16x1xf32>
    %168 = vector.broadcast %160 : vector<16x1xf32> to vector<16x32xf32>
    %169 = arith.subf %156, %168 : vector<16x32xf32>
    %cst_92 = arith.constant 9.99999974E-6 : f32
    %170 = vector.broadcast %cst_92 : f32 to vector<16x1xf32>
    %171 = arith.addf %167, %170 : vector<16x1xf32>
    %172 = math.rsqrt %171 : vector<16x1xf32>
    %173 = vector.broadcast %172 : vector<16x1xf32> to vector<16x32xf32>
    %174 = arith.mulf %169, %173 : vector<16x32xf32>
    %175 = vector.broadcast %110 : vector<1x32xf32> to vector<16x32xf32>
    %176 = arith.mulf %174, %175 : vector<16x32xf32>
    %177 = vector.broadcast %111 : vector<1x32xf32> to vector<16x32xf32>
    %178 = arith.addf %176, %177 : vector<16x32xf32>
    %179 = arith.truncf %178 : vector<16x32xf32> to vector<16x32xbf16>
    %cst_93 = arith.constant dense<0.000000e+00> : vector<16x128xf32>
    %180 = tpu.matmul %179, %112, %cst_93 {dimension_numbers = #tpu.dot_dimension_numbers<[1], [0], [0], [1], [0, 0, 1, 1], [], []>} : vector<16x32xbf16>, vector<32x128xbf16>, vector<16x128xf32> -> vector<16x128xf32>
    %181 = vector.broadcast %113 : vector<1x128xf32> to vector<16x128xf32>
    %182 = arith.addf %180, %181 : vector<16x128xf32>
    %cst_94 = arith.constant 5.000000e-01 : f32
    %183 = vector.broadcast %cst_94 : f32 to vector<16x128xf32>
    %184 = arith.mulf %183, %182 : vector<16x128xf32>
    %cst_95 = arith.constant 2.000000e+00 : f32
    %185 = math.sqrt %cst_95 : f32
    %cst_96 = arith.constant 1.000000e+00 : f32
    %186 = arith.divf %cst_96, %185 : f32
    %187 = vector.broadcast %186 : f32 to vector<16x128xf32>
    %188 = arith.mulf %182, %187 : vector<16x128xf32>
    %189 = math.erf %188 : vector<16x128xf32>
    %cst_97 = arith.constant 1.000000e+00 : f32
    %190 = vector.broadcast %cst_97 : f32 to vector<16x128xf32>
    %191 = arith.addf %190, %189 : vector<16x128xf32>
    %192 = arith.mulf %184, %191 : vector<16x128xf32>
    %193 = arith.truncf %192 : vector<16x128xf32> to vector<16x128xbf16>
    %cst_98 = arith.constant dense<0.000000e+00> : vector<16x32xf32>
    %194 = tpu.matmul %193, %114, %cst_98 {dimension_numbers = #tpu.dot_dimension_numbers<[1], [0], [0], [1], [0, 0, 1, 1], [], []>} : vector<16x128xbf16>, vector<128x32xbf16>, vector<16x32xf32> -> vector<16x32xf32>
    %195 = arith.addf %156, %194 : vector<16x32xf32>
    %196 = vector.broadcast %115 : vector<1x32xf32> to vector<16x32xf32>
    %197 = arith.addf %195, %196 : vector<16x32xf32>
    %c0_99 = arith.constant 0 : index
    %c0_100 = arith.constant 0 : index
    %198 = vector.load %arg28[%c0_99, %c0_100] : memref<32x2048xbf16, #tpu.memory_space<vmem>>, vector<32x2048xbf16>
    %c0_101 = arith.constant 0 : index
    %c0_102 = arith.constant 0 : index
    %199 = vector.load %arg29[%c0_101, %c0_102] : memref<1x256xf32, #tpu.memory_space<vmem>>, vector<1x256xf32>
    %c0_103 = arith.constant 0 : index
    %c0_104 = arith.constant 0 : index
    %200 = vector.load %arg30[%c0_103, %c0_104] : memref<32x2048xbf16, #tpu.memory_space<vmem>>, vector<32x2048xbf16>
    %c0_105 = arith.constant 0 : index
    %c0_106 = arith.constant 0 : index
    %201 = vector.load %arg31[%c0_105, %c0_106] : memref<1x256xf32, #tpu.memory_space<vmem>>, vector<1x256xf32>
    %202 = arith.truncf %197 : vector<16x32xf32> to vector<16x32xbf16>
    %203 = vector.extract_strided_slice %202 {offsets = [0, 0], sizes = [8, 32], strides = [1, 1]} : vector<16x32xbf16> to vector<8x32xbf16>
    %cst_107 = arith.constant dense<0.000000e+00> : vector<8x2048xf32>
    %204 = tpu.matmul %203, %198, %cst_107 {dimension_numbers = #tpu.dot_dimension_numbers<[1], [0], [0], [1], [0, 0, 1, 1], [], []>} : vector<8x32xbf16>, vector<32x2048xbf16>, vector<8x2048xf32> -> vector<8x2048xf32>
    %205 = vector.extract_strided_slice %202 {offsets = [8, 0], sizes = [8, 32], strides = [1, 1]} : vector<16x32xbf16> to vector<8x32xbf16>
    %cst_108 = arith.constant dense<0.000000e+00> : vector<8x2048xf32>
    %206 = tpu.matmul %205, %200, %cst_108 {dimension_numbers = #tpu.dot_dimension_numbers<[1], [0], [0], [1], [0, 0, 1, 1], [], []>} : vector<8x32xbf16>, vector<32x2048xbf16>, vector<8x2048xf32> -> vector<8x2048xf32>
    %207 = vector.extract_strided_slice %204 {offsets = [0, 0], sizes = [1, 256], strides = [1, 1]} : vector<8x2048xf32> to vector<1x256xf32>
    %208 = arith.addf %199, %207 : vector<1x256xf32>
    %209 = vector.extract_strided_slice %206 {offsets = [0, 0], sizes = [1, 256], strides = [1, 1]} : vector<8x2048xf32> to vector<1x256xf32>
    %210 = arith.addf %201, %209 : vector<1x256xf32>
    %211 = vector.extract_strided_slice %204 {offsets = [1, 256], sizes = [1, 256], strides = [1, 1]} : vector<8x2048xf32> to vector<1x256xf32>
    %212 = arith.addf %208, %211 : vector<1x256xf32>
    %213 = vector.extract_strided_slice %206 {offsets = [1, 256], sizes = [1, 256], strides = [1, 1]} : vector<8x2048xf32> to vector<1x256xf32>
    %214 = arith.addf %210, %213 : vector<1x256xf32>
    %215 = vector.extract_strided_slice %204 {offsets = [2, 512], sizes = [1, 256], strides = [1, 1]} : vector<8x2048xf32> to vector<1x256xf32>
    %216 = arith.addf %212, %215 : vector<1x256xf32>
    %217 = vector.extract_strided_slice %206 {offsets = [2, 512], sizes = [1, 256], strides = [1, 1]} : vector<8x2048xf32> to vector<1x256xf32>
    %218 = arith.addf %214, %217 : vector<1x256xf32>
    %219 = vector.extract_strided_slice %204 {offsets = [3, 768], sizes = [1, 256], strides = [1, 1]} : vector<8x2048xf32> to vector<1x256xf32>
    %220 = arith.addf %216, %219 : vector<1x256xf32>
    %221 = vector.extract_strided_slice %206 {offsets = [3, 768], sizes = [1, 256], strides = [1, 1]} : vector<8x2048xf32> to vector<1x256xf32>
    %222 = arith.addf %218, %221 : vector<1x256xf32>
    %223 = vector.extract_strided_slice %204 {offsets = [4, 1024], sizes = [1, 256], strides = [1, 1]} : vector<8x2048xf32> to vector<1x256xf32>
    %224 = arith.addf %220, %223 : vector<1x256xf32>
    %225 = vector.extract_strided_slice %206 {offsets = [4, 1024], sizes = [1, 256], strides = [1, 1]} : vector<8x2048xf32> to vector<1x256xf32>
    %226 = arith.addf %222, %225 : vector<1x256xf32>
    %227 = vector.extract_strided_slice %204 {offsets = [5, 1280], sizes = [1, 256], strides = [1, 1]} : vector<8x2048xf32> to vector<1x256xf32>
    %228 = arith.addf %224, %227 : vector<1x256xf32>
    %229 = vector.extract_strided_slice %206 {offsets = [5, 1280], sizes = [1, 256], strides = [1, 1]} : vector<8x2048xf32> to vector<1x256xf32>
    %230 = arith.addf %226, %229 : vector<1x256xf32>
    %231 = vector.extract_strided_slice %204 {offsets = [6, 1536], sizes = [1, 256], strides = [1, 1]} : vector<8x2048xf32> to vector<1x256xf32>
    %232 = arith.addf %228, %231 : vector<1x256xf32>
    %233 = vector.extract_strided_slice %206 {offsets = [6, 1536], sizes = [1, 256], strides = [1, 1]} : vector<8x2048xf32> to vector<1x256xf32>
    %234 = arith.addf %230, %233 : vector<1x256xf32>
    %235 = vector.extract_strided_slice %204 {offsets = [7, 1792], sizes = [1, 256], strides = [1, 1]} : vector<8x2048xf32> to vector<1x256xf32>
    %236 = arith.addf %232, %235 : vector<1x256xf32>
    %237 = vector.extract_strided_slice %206 {offsets = [7, 1792], sizes = [1, 256], strides = [1, 1]} : vector<8x2048xf32> to vector<1x256xf32>
    %238 = arith.addf %234, %237 : vector<1x256xf32>
    %239 = vector.shape_cast %236 : vector<1x256xf32> to vector<1x1x256xf32>
    %c0_109 = arith.constant 0 : index
    %c0_110 = arith.constant 0 : index
    %c0_111 = arith.constant 0 : index
    %240 = vector.load %arg32[%c0_109, %c0_110, %c0_111] : memref<1x1x256xf32, #tpu.memory_space<vmem>>, vector<1x1x256xf32>
    tpu.vector_store %arg32[%c0_109, %c0_110, %c0_111], %239 {strides = array<i32>} : memref<1x1x256xf32, #tpu.memory_space<vmem>>, vector<1x1x256xf32>,
    %241 = vector.shape_cast %238 : vector<1x256xf32> to vector<1x1x256xf32>
    %c0_112 = arith.constant 0 : index
    %c0_113 = arith.constant 0 : index
    %c0_114 = arith.constant 0 : index
    %242 = vector.load %arg33[%c0_112, %c0_113, %c0_114] : memref<1x1x256xf32, #tpu.memory_space<vmem>>, vector<1x1x256xf32>
    tpu.vector_store %arg33[%c0_112, %c0_113, %c0_114], %241 {strides = array<i32>} : memref<1x1x256xf32, #tpu.memory_space<vmem>>, vector<1x1x256xf32>,
    return
  }
  func.func @transform_0(%arg0: i32) -> (i32, i32, i32) {
    %c0_i32 = arith.constant 0 : i32
    %c0_i32_0 = arith.constant 0 : i32
    %c0_i32_1 = arith.constant 0 : i32
    return %arg0, %c0_i32, %c0_i32_0 : i32, i32, i32
  }
  func.func @transform_1(%arg0: i32) -> (i32, i32) {
    %c0_i32 = arith.constant 0 : i32
    %c0_i32_0 = arith.constant 0 : i32
    %c0_i32_1 = arith.constant 0 : i32
    return %c0_i32, %c0_i32_0 : i32, i32
  }
  func.func @transform_2(%arg0: i32) -> (i32, i32) {
    %c0_i32 = arith.constant 0 : i32
    %c0_i32_0 = arith.constant 0 : i32
    %c0_i32_1 = arith.constant 0 : i32
    return %c0_i32, %c0_i32_0 : i32, i32
  }
  func.func @transform_3(%arg0: i32) -> (i32, i32) {
    %c0_i32 = arith.constant 0 : i32
    %c0_i32_0 = arith.constant 0 : i32
    %c0_i32_1 = arith.constant 0 : i32
    return %c0_i32, %c0_i32_0 : i32, i32
  }
  func.func @transform_4(%arg0: i32) -> (i32, i32) {
    %c0_i32 = arith.constant 0 : i32
    %c0_i32_0 = arith.constant 0 : i32
    %c0_i32_1 = arith.constant 0 : i32
    return %c0_i32, %c0_i32_0 : i32, i32
  }
  func.func @transform_5(%arg0: i32) -> (i32, i32) {
    %c0_i32 = arith.constant 0 : i32
    %c0_i32_0 = arith.constant 0 : i32
    %c0_i32_1 = arith.constant 0 : i32
    return %c0_i32, %c0_i32_0 : i32, i32
  }
  func.func @transform_6(%arg0: i32) -> (i32, i32) {
    %c0_i32 = arith.constant 0 : i32
    %c0_i32_0 = arith.constant 0 : i32
    %c0_i32_1 = arith.constant 0 : i32
    return %c0_i32, %c0_i32_0 : i32, i32
  }
  func.func @transform_7(%arg0: i32) -> (i32, i32) {
    %c0_i32 = arith.constant 0 : i32
    %c0_i32_0 = arith.constant 0 : i32
    %c0_i32_1 = arith.constant 0 : i32
    return %c0_i32, %c0_i32_0 : i32, i32
  }
  func.func @transform_8(%arg0: i32) -> (i32, i32) {
    %c0_i32 = arith.constant 0 : i32
    %c0_i32_0 = arith.constant 0 : i32
    %c0_i32_1 = arith.constant 0 : i32
    return %c0_i32, %c0_i32_0 : i32, i32
  }
  func.func @transform_9(%arg0: i32) -> (i32, i32) {
    %c0_i32 = arith.constant 0 : i32
    %c0_i32_0 = arith.constant 0 : i32
    %c0_i32_1 = arith.constant 0 : i32
    return %c0_i32, %c0_i32_0 : i32, i32
  }
  func.func @transform_10(%arg0: i32) -> (i32, i32) {
    %c0_i32 = arith.constant 0 : i32
    %c0_i32_0 = arith.constant 0 : i32
    %c0_i32_1 = arith.constant 0 : i32
    return %c0_i32, %c0_i32_0 : i32, i32
  }
  func.func @transform_11(%arg0: i32) -> (i32, i32) {
    %c0_i32 = arith.constant 0 : i32
    %c0_i32_0 = arith.constant 0 : i32
    %c0_i32_1 = arith.constant 0 : i32
    return %c0_i32, %c0_i32_0 : i32, i32
  }
  func.func @transform_12(%arg0: i32) -> (i32, i32) {
    %c0_i32 = arith.constant 0 : i32
    %c0_i32_0 = arith.constant 0 : i32
    %c0_i32_1 = arith.constant 0 : i32
    return %c0_i32, %c0_i32_0 : i32, i32
  }
  func.func @transform_13(%arg0: i32) -> (i32, i32) {
    %c0_i32 = arith.constant 0 : i32
    %c0_i32_0 = arith.constant 0 : i32
    %c0_i32_1 = arith.constant 0 : i32
    return %c0_i32, %c0_i32_0 : i32, i32
  }
  func.func @transform_14(%arg0: i32) -> (i32, i32) {
    %c0_i32 = arith.constant 0 : i32
    %c0_i32_0 = arith.constant 0 : i32
    %c0_i32_1 = arith.constant 0 : i32
    return %c0_i32, %c0_i32_0 : i32, i32
  }
  func.func @transform_15(%arg0: i32) -> (i32, i32) {
    %c0_i32 = arith.constant 0 : i32
    %c0_i32_0 = arith.constant 0 : i32
    %c0_i32_1 = arith.constant 0 : i32
    return %c0_i32, %c0_i32_0 : i32, i32
  }
  func.func @transform_16(%arg0: i32) -> (i32, i32) {
    %c0_i32 = arith.constant 0 : i32
    %c0_i32_0 = arith.constant 0 : i32
    %c0_i32_1 = arith.constant 0 : i32
    return %c0_i32, %c0_i32_0 : i32, i32
  }
  func.func @transform_17(%arg0: i32) -> (i32, i32) {
    %c0_i32 = arith.constant 0 : i32
    %c0_i32_0 = arith.constant 0 : i32
    %c0_i32_1 = arith.constant 0 : i32
    return %c0_i32, %c0_i32_0 : i32, i32
  }
  func.func @transform_18(%arg0: i32) -> (i32, i32) {
    %c0_i32 = arith.constant 0 : i32
    %c0_i32_0 = arith.constant 0 : i32
    %c0_i32_1 = arith.constant 0 : i32
    return %c0_i32, %c0_i32_0 : i32, i32
  }
  func.func @transform_19(%arg0: i32) -> (i32, i32) {
    %c0_i32 = arith.constant 0 : i32
    %c0_i32_0 = arith.constant 0 : i32
    %c0_i32_1 = arith.constant 0 : i32
    return %c0_i32, %c0_i32_0 : i32, i32
  }
  func.func @transform_20(%arg0: i32) -> (i32, i32) {
    %c0_i32 = arith.constant 0 : i32
    %c0_i32_0 = arith.constant 0 : i32
    %c0_i32_1 = arith.constant 0 : i32
    return %c0_i32, %c0_i32_0 : i32, i32
  }
  func.func @transform_21(%arg0: i32) -> (i32, i32) {
    %c0_i32 = arith.constant 0 : i32
    %c0_i32_0 = arith.constant 0 : i32
    %c0_i32_1 = arith.constant 0 : i32
    return %c0_i32, %c0_i32_0 : i32, i32
  }
  func.func @transform_22(%arg0: i32) -> (i32, i32) {
    %c0_i32 = arith.constant 0 : i32
    %c0_i32_0 = arith.constant 0 : i32
    %c0_i32_1 = arith.constant 0 : i32
    return %c0_i32, %c0_i32_0 : i32, i32
  }
  func.func @transform_23(%arg0: i32) -> (i32, i32) {
    %c0_i32 = arith.constant 0 : i32
    %c0_i32_0 = arith.constant 0 : i32
    %c0_i32_1 = arith.constant 0 : i32
    return %c0_i32, %c0_i32_0 : i32, i32
  }
  func.func @transform_24(%arg0: i32) -> (i32, i32) {
    %c0_i32 = arith.constant 0 : i32
    %c0_i32_0 = arith.constant 0 : i32
    %c0_i32_1 = arith.constant 0 : i32
    return %c0_i32, %c0_i32_0 : i32, i32
  }
  func.func @transform_25(%arg0: i32) -> (i32, i32) {
    %c0_i32 = arith.constant 0 : i32
    %c0_i32_0 = arith.constant 0 : i32
    %c0_i32_1 = arith.constant 0 : i32
    return %c0_i32, %c0_i32_0 : i32, i32
  }
  func.func @transform_26(%arg0: i32) -> (i32, i32) {
    %c0_i32 = arith.constant 0 : i32
    %c0_i32_0 = arith.constant 0 : i32
    %c0_i32_1 = arith.constant 0 : i32
    return %c0_i32, %c0_i32_0 : i32, i32
  }
  func.func @transform_27(%arg0: i32) -> (i32, i32) {
    %c0_i32 = arith.constant 0 : i32
    %c0_i32_0 = arith.constant 0 : i32
    %c0_i32_1 = arith.constant 0 : i32
    return %c0_i32, %c0_i32_0 : i32, i32
  }
  func.func @transform_28(%arg0: i32) -> (i32, i32) {
    %c0_i32 = arith.constant 0 : i32
    %c0_i32_0 = arith.constant 0 : i32
    %c0_i32_1 = arith.constant 0 : i32
    return %c0_i32, %c0_i32_0 : i32, i32
  }
  func.func @transform_29(%arg0: i32) -> (i32, i32) {
    %c0_i32 = arith.constant 0 : i32
    %c0_i32_0 = arith.constant 0 : i32
    %c0_i32_1 = arith.constant 0 : i32
    return %c0_i32, %c0_i32_0 : i32, i32
  }
  func.func @transform_30(%arg0: i32) -> (i32, i32) {
    %c0_i32 = arith.constant 0 : i32
    %c0_i32_0 = arith.constant 0 : i32
    %c0_i32_1 = arith.constant 0 : i32
    return %c0_i32, %c0_i32_0 : i32, i32
  }
  func.func @transform_31(%arg0: i32) -> (i32, i32, i32) {
    %c0_i32 = arith.constant 0 : i32
    %c0_i32_0 = arith.constant 0 : i32
    %c0_i32_1 = arith.constant 0 : i32
    return %arg0, %c0_i32, %c0_i32_0 : i32, i32, i32
  }
  func.func @transform_32(%arg0: i32) -> (i32, i32, i32) {
    %c0_i32 = arith.constant 0 : i32
    %c0_i32_0 = arith.constant 0 : i32
    %c0_i32_1 = arith.constant 0 : i32
    return %arg0, %c0_i32, %c0_i32_0 : i32, i32, i32
  }
}

</mosaic_0001>

<llo_original>
// kernel: mixmlp_forward.1
$region0: #{mixmlp_forward.1}
  #allocation0 [shape = 'u32[]', space=smem, size = 0x4, offset = 0x4, fixed_abs, tag = 'smem constant byte address 0x4 - core index']
  #allocation1 [shape = 'u32[144,128]{1,0:T(1,128)}', space=vmem, size = 0x12000, scoped, tag = 'internal scratch']
  %s0 = inlined_call_operand.smem [shape: u32[33], index: -1, kind: input, shape index: {}]
  %s1 = sld [smem:[%s0]]
  %s2 = scalar_lea.smem %s0, 1
  %s3 = sld [smem:[%s2]]
  %s4 = scalar_lea.smem %s0, 2
  %s5 = sld [smem:[%s4]]
  %s6 = scalar_lea.smem %s0, 3
  %s7 = sld [smem:[%s6]]
  %s8 = scalar_lea.smem %s0, 4
  %s9 = sld [smem:[%s8]]
  %s10 = scalar_lea.smem %s0, 5
  %s11 = sld [smem:[%s10]]
  %s12 = scalar_lea.smem %s0, 6
  %s13 = sld [smem:[%s12]]
  %s14 = scalar_lea.smem %s0, 7
  %s15 = sld [smem:[%s14]]
  %s16 = scalar_lea.smem %s0, 8
  %s17 = sld [smem:[%s16]]
  %s18 = scalar_lea.smem %s0, 9
  %s19 = sld [smem:[%s18]]
  %s20 = scalar_lea.smem %s0, 10
  %s21 = sld [smem:[%s20]]
  %s22 = scalar_lea.smem %s0, 11
  %s23 = sld [smem:[%s22]]
  %s24 = scalar_lea.smem %s0, 12
  %s25 = sld [smem:[%s24]]
  %s26 = scalar_lea.smem %s0, 13
  %s27 = sld [smem:[%s26]]
  %s28 = scalar_lea.smem %s0, 14
  %s29 = sld [smem:[%s28]]
  %s30 = scalar_lea.smem %s0, 15
  %s31 = sld [smem:[%s30]]
  %s32 = scalar_lea.smem %s0, 16
  %s33 = sld [smem:[%s32]]
  %s34 = scalar_lea.smem %s0, 17
  %s35 = sld [smem:[%s34]]
  %s36 = scalar_lea.smem %s0, 18
  %s37 = sld [smem:[%s36]]
  %s38 = scalar_lea.smem %s0, 19
  %s39 = sld [smem:[%s38]]
  %s40 = scalar_lea.smem %s0, 20
  %s41 = sld [smem:[%s40]]
  %s42 = scalar_lea.smem %s0, 21
  %s43 = sld [smem:[%s42]]
  %s44 = scalar_lea.smem %s0, 22
  %s45 = sld [smem:[%s44]]
  %s46 = scalar_lea.smem %s0, 23
  %s47 = sld [smem:[%s46]]
  %s48 = scalar_lea.smem %s0, 24
  %s49 = sld [smem:[%s48]]
  %s50 = scalar_lea.smem %s0, 25
  %s51 = sld [smem:[%s50]]
  %s52 = scalar_lea.smem %s0, 26
  %s53 = sld [smem:[%s52]]
  %s54 = scalar_lea.smem %s0, 27
  %s55 = sld [smem:[%s54]]
  %s56 = scalar_lea.smem %s0, 28
  %s57 = sld [smem:[%s56]]
  %s58 = scalar_lea.smem %s0, 29
  %s59 = sld [smem:[%s58]]
  %s60 = scalar_lea.smem %s0, 30
  %s61 = sld [smem:[%s60]]
  %s62 = scalar_lea.smem %s0, 31
  %s63 = sld [smem:[%s62]]
  %s64 = scalar_lea.smem %s0, 32
  %s65 = sld [smem:[%s64]]
  %66 = xla_tuple %s63, %s65
  %s67 = sld [smem:[#allocation0]]
  $region165: #{mixmlp_forward.1} parent=0
    _
  %s69 = ssub.s32 1, %s67
  %s70 = scalar_select 0, %s69, %s67
  loop: start=0, step=1, limit=4
  $region2: #{mixmlp_forward.1} parent=0 // loop_pre_header
    _
  $region3: #{mixmlp_forward.1} parent=0 // loop_header
    %s72 = sphi 0, %s76
    %p73 = scmp.ge.s32.totalorder %s72, 4
    %s82 = sphi 0, %s84
    %s85 = sphi 0, %s82
    %s86 = sphi 0, %s85
    %s102 = sphi 0, %s86
    %s106 = sphi 0, %s106
    %s108 = sphi 0, %s106
    %s109 = sphi 0, %s108
    %s123 = sphi 0, %s109
    %s127 = sphi 0, %s127
    %s129 = sphi 0, %s127
    %s130 = sphi 0, %s129
    %s144 = sphi 0, %s130
    %s148 = sphi 0, %s148
    %s150 = sphi 0, %s148
    %s151 = sphi 0, %s150
    %s165 = sphi 0, %s151
    %s169 = sphi 0, %s169
    %s171 = sphi 0, %s169
    %s172 = sphi 0, %s171
    %s186 = sphi 0, %s172
    %s190 = sphi 0, %s190
    %s192 = sphi 0, %s190
    %s193 = sphi 0, %s192
    %s207 = sphi 0, %s193
    %s211 = sphi 0, %s211
    %s213 = sphi 0, %s211
    %s214 = sphi 0, %s213
    %s228 = sphi 0, %s214
    %s232 = sphi 0, %s232
    %s234 = sphi 0, %s232
    %s235 = sphi 0, %s234
    %s249 = sphi 0, %s235
    %s253 = sphi 0, %s253
    %s255 = sphi 0, %s253
    %s256 = sphi 0, %s255
    %s270 = sphi 0, %s256
    %s274 = sphi 0, %s274
    %s276 = sphi 0, %s274
    %s277 = sphi 0, %s276
    %s291 = sphi 0, %s277
    %s295 = sphi 0, %s295
    %s297 = sphi 0, %s295
    %s298 = sphi 0, %s297
    %s312 = sphi 0, %s298
    %s316 = sphi 0, %s316
    %s318 = sphi 0, %s316
    %s319 = sphi 0, %s318
    %s333 = sphi 0, %s319
    %s337 = sphi 0, %s337
    %s339 = sphi 0, %s337
    %s340 = sphi 0, %s339
    %s354 = sphi 0, %s340
    %s358 = sphi 0, %s358
    %s360 = sphi 0, %s358
    %s361 = sphi 0, %s360
    %s375 = sphi 0, %s361
    %s379 = sphi 0, %s379
    %s381 = sphi 0, %s379
    %s382 = sphi 0, %s381
    %s396 = sphi 0, %s382
    %s400 = sphi 0, %s400
    %s402 = sphi 0, %s400
    %s403 = sphi 0, %s402
    %s417 = sphi 0, %s403
    %s421 = sphi 0, %s421
    %s423 = sphi 0, %s421
    %s424 = sphi 0, %s423
    %s438 = sphi 0, %s424
    %s442 = sphi 0, %s442
    %s444 = sphi 0, %s442
    %s445 = sphi 0, %s444
    %s459 = sphi 0, %s445
    %s463 = sphi 0, %s463
    %s465 = sphi 0, %s463
    %s466 = sphi 0, %s465
    %s480 = sphi 0, %s466
    %s484 = sphi 0, %s484
    %s486 = sphi 0, %s484
    %s487 = sphi 0, %s486
    %s501 = sphi 0, %s487
    %s505 = sphi 0, %s505
    %s507 = sphi 0, %s505
    %s508 = sphi 0, %s507
    %s522 = sphi 0, %s508
    %s526 = sphi 0, %s526
    %s528 = sphi 0, %s526
    %s529 = sphi 0, %s528
    %s543 = sphi 0, %s529
    %s547 = sphi 0, %s547
    %s549 = sphi 0, %s547
    %s550 = sphi 0, %s549
    %s564 = sphi 0, %s550
    %s568 = sphi 0, %s568
    %s570 = sphi 0, %s568
    %s571 = sphi 0, %s570
    %s585 = sphi 0, %s571
    %s589 = sphi 0, %s589
    %s591 = sphi 0, %s589
    %s592 = sphi 0, %s591
    %s606 = sphi 0, %s592
    %s610 = sphi 0, %s610
    %s612 = sphi 0, %s610
    %s613 = sphi 0, %s612
    %s627 = sphi 0, %s613
    %s631 = sphi 0, %s631
    %s633 = sphi 0, %s631
    %s634 = sphi 0, %s633
    %s648 = sphi 0, %s634
    %s652 = sphi 0, %s652
    %s654 = sphi 0, %s652
    %s655 = sphi 0, %s654
    %s669 = sphi 0, %s655
    %s673 = sphi 0, %s673
    %s675 = sphi 0, %s673
    %s676 = sphi 0, %s675
    %s690 = sphi 0, %s676
    %s694 = sphi 0, %s694
    %s696 = sphi 0, %s694
    %s697 = sphi 0, %s696
    %s711 = sphi 0, %s697
    %s715 = sphi 0, %s715
    %s717 = sphi 0, %s715
    %s718 = sphi 0, %s717
    %s732 = sphi 0, %s718
    %s738 = sphi 0, %s740
    %s741 = sphi 0, %s738
    %s742 = sphi 0, %s741
    %s758 = sphi 0, %s742
    %s764 = sphi 0, %s766
    %s767 = sphi 0, %s764
    %s768 = sphi 0, %s767
    %s784 = sphi 0, %s768
  $region4: #{mixmlp_forward.1} parent=0 // loop_header_branch
    %75 = sbr.rel (%p73) target = $region8
  $region5: #{mixmlp_forward.1} parent=0 // loop_body
    %s77 = ssub.s32 %s72, 1
    %s78 = ssub.s32 %s72, 2
    %s79 = sadd.s32 %s72, 1
    %s80 = ssub.s32 %s72, %s79
    %p81 = scmp.eq.s32.totalorder %s80, 0
    %s83 = sadd.s32 %s82, 1
    %s84 = scalar_select %p81, %s82, %s83
    %p87 = pneg %p81
    %p88 = scmp.eq.s32.totalorder %s72, 1
    %p89 = por %p87, %p88
    %p90 = scmp.ne.s32.totalorder %s82, %s85
    %p91 = scmp.eq.s32.totalorder %s72, 0
    %p92 = por %p90, %p91
    %p93 = scmp.ne.s32.totalorder %s82, %s85
    %p94 = scmp.eq.s32.totalorder %s77, 1
    %p95 = por %p93, %p94
    %p96 = scmp.ne.s32.totalorder %s85, %s86
    %p97 = scmp.eq.s32.totalorder %s77, 0
    %p98 = por %p96, %p97
    %p99 = scmp.ne.s32.totalorder %s85, %s86
    %p100 = scmp.eq.s32.totalorder %s78, 1
    %p101 = por %p99, %p100
    %p103 = scmp.ne.s32.totalorder %s86, %s102
    %p104 = scmp.eq.s32.totalorder %s78, 0
    %p105 = por %p103, %p104
    %s107 = sadd.s32 %s106, 1
    %p110 = scmp.eq.s32.totalorder %s72, 1
    %p111 = scmp.ne.s32.totalorder %s106, %s108
    %p112 = scmp.eq.s32.totalorder %s72, 0
    %p113 = por %p111, %p112
    %p114 = scmp.ne.s32.totalorder %s106, %s108
    %p115 = scmp.eq.s32.totalorder %s77, 1
    %p116 = por %p114, %p115
    %p117 = scmp.ne.s32.totalorder %s108, %s109
    %p118 = scmp.eq.s32.totalorder %s77, 0
    %p119 = por %p117, %p118
    %p120 = scmp.ne.s32.totalorder %s108, %s109
    %p121 = scmp.eq.s32.totalorder %s78, 1
    %p122 = por %p120, %p121
    %p124 = scmp.ne.s32.totalorder %s109, %s123
    %p125 = scmp.eq.s32.totalorder %s78, 0
    %p126 = por %p124, %p125
    %s128 = sadd.s32 %s127, 1
    %p131 = scmp.eq.s32.totalorder %s72, 1
    %p132 = scmp.ne.s32.totalorder %s127, %s129
    %p133 = scmp.eq.s32.totalorder %s72, 0
    %p134 = por %p132, %p133
    %p135 = scmp.ne.s32.totalorder %s127, %s129
    %p136 = scmp.eq.s32.totalorder %s77, 1
    %p137 = por %p135, %p136
    %p138 = scmp.ne.s32.totalorder %s129, %s130
    %p139 = scmp.eq.s32.totalorder %s77, 0
    %p140 = por %p138, %p139
    %p141 = scmp.ne.s32.totalorder %s129, %s130
    %p142 = scmp.eq.s32.totalorder %s78, 1
    %p143 = por %p141, %p142
    %p145 = scmp.ne.s32.totalorder %s130, %s144
    %p146 = scmp.eq.s32.totalorder %s78, 0
    %p147 = por %p145, %p146
    %s149 = sadd.s32 %s148, 1
    %p152 = scmp.eq.s32.totalorder %s72, 1
    %p153 = scmp.ne.s32.totalorder %s148, %s150
    %p154 = scmp.eq.s32.totalorder %s72, 0
    %p155 = por %p153, %p154
    %p156 = scmp.ne.s32.totalorder %s148, %s150
    %p157 = scmp.eq.s32.totalorder %s77, 1
    %p158 = por %p156, %p157
    %p159 = scmp.ne.s32.totalorder %s150, %s151
    %p160 = scmp.eq.s32.totalorder %s77, 0
    %p161 = por %p159, %p160
    %p162 = scmp.ne.s32.totalorder %s150, %s151
    %p163 = scmp.eq.s32.totalorder %s78, 1
    %p164 = por %p162, %p163
    %p166 = scmp.ne.s32.totalorder %s151, %s165
    %p167 = scmp.eq.s32.totalorder %s78, 0
    %p168 = por %p166, %p167
    %s170 = sadd.s32 %s169, 1
    %p173 = scmp.eq.s32.totalorder %s72, 1
    %p174 = scmp.ne.s32.totalorder %s169, %s171
    %p175 = scmp.eq.s32.totalorder %s72, 0
    %p176 = por %p174, %p175
    %p177 = scmp.ne.s32.totalorder %s169, %s171
    %p178 = scmp.eq.s32.totalorder %s77, 1
    %p179 = por %p177, %p178
    %p180 = scmp.ne.s32.totalorder %s171, %s172
    %p181 = scmp.eq.s32.totalorder %s77, 0
    %p182 = por %p180, %p181
    %p183 = scmp.ne.s32.totalorder %s171, %s172
    %p184 = scmp.eq.s32.totalorder %s78, 1
    %p185 = por %p183, %p184
    %p187 = scmp.ne.s32.totalorder %s172, %s186
    %p188 = scmp.eq.s32.totalorder %s78, 0
    %p189 = por %p187, %p188
    %s191 = sadd.s32 %s190, 1
    %p194 = scmp.eq.s32.totalorder %s72, 1
    %p195 = scmp.ne.s32.totalorder %s190, %s192
    %p196 = scmp.eq.s32.totalorder %s72, 0
    %p197 = por %p195, %p196
    %p198 = scmp.ne.s32.totalorder %s190, %s192
    %p199 = scmp.eq.s32.totalorder %s77, 1
    %p200 = por %p198, %p199
    %p201 = scmp.ne.s32.totalorder %s192, %s193
    %p202 = scmp.eq.s32.totalorder %s77, 0
    %p203 = por %p201, %p202
    %p204 = scmp.ne.s32.totalorder %s192, %s193
    %p205 = scmp.eq.s32.totalorder %s78, 1
    %p206 = por %p204, %p205
    %p208 = scmp.ne.s32.totalorder %s193, %s207
    %p209 = scmp.eq.s32.totalorder %s78, 0
    %p210 = por %p208, %p209
    %s212 = sadd.s32 %s211, 1
    %p215 = scmp.eq.s32.totalorder %s72, 1
    %p216 = scmp.ne.s32.totalorder %s211, %s213
    %p217 = scmp.eq.s32.totalorder %s72, 0
    %p218 = por %p216, %p217
    %p219 = scmp.ne.s32.totalorder %s211, %s213
    %p220 = scmp.eq.s32.totalorder %s77, 1
    %p221 = por %p219, %p220
    %p222 = scmp.ne.s32.totalorder %s213, %s214
    %p223 = scmp.eq.s32.totalorder %s77, 0
    %p224 = por %p222, %p223
    %p225 = scmp.ne.s32.totalorder %s213, %s214
    %p226 = scmp.eq.s32.totalorder %s78, 1
    %p227 = por %p225, %p226
    %p229 = scmp.ne.s32.totalorder %s214, %s228
    %p230 = scmp.eq.s32.totalorder %s78, 0
    %p231 = por %p229, %p230
    %s233 = sadd.s32 %s232, 1
    %p236 = scmp.eq.s32.totalorder %s72, 1
    %p237 = scmp.ne.s32.totalorder %s232, %s234
    %p238 = scmp.eq.s32.totalorder %s72, 0
    %p239 = por %p237, %p238
    %p240 = scmp.ne.s32.totalorder %s232, %s234
    %p241 = scmp.eq.s32.totalorder %s77, 1
    %p242 = por %p240, %p241
    %p243 = scmp.ne.s32.totalorder %s234, %s235
    %p244 = scmp.eq.s32.totalorder %s77, 0
    %p245 = por %p243, %p244
    %p246 = scmp.ne.s32.totalorder %s234, %s235
    %p247 = scmp.eq.s32.totalorder %s78, 1
    %p248 = por %p246, %p247
    %p250 = scmp.ne.s32.totalorder %s235, %s249
    %p251 = scmp.eq.s32.totalorder %s78, 0
    %p252 = por %p250, %p251
    %s254 = sadd.s32 %s253, 1
    %p257 = scmp.eq.s32.totalorder %s72, 1
    %p258 = scmp.ne.s32.totalorder %s253, %s255
    %p259 = scmp.eq.s32.totalorder %s72, 0
    %p260 = por %p258, %p259
    %p261 = scmp.ne.s32.totalorder %s253, %s255
    %p262 = scmp.eq.s32.totalorder %s77, 1
    %p263 = por %p261, %p262
    %p264 = scmp.ne.s32.totalorder %s255, %s256
    %p265 = scmp.eq.s32.totalorder %s77, 0
    %p266 = por %p264, %p265
    %p267 = scmp.ne.s32.totalorder %s255, %s256
    %p268 = scmp.eq.s32.totalorder %s78, 1
    %p269 = por %p267, %p268
    %p271 = scmp.ne.s32.totalorder %s256, %s270
    %p272 = scmp.eq.s32.totalorder %s78, 0
    %p273 = por %p271, %p272
    %s275 = sadd.s32 %s274, 1
    %p278 = scmp.eq.s32.totalorder %s72, 1
    %p279 = scmp.ne.s32.totalorder %s274, %s276
    %p280 = scmp.eq.s32.totalorder %s72, 0
    %p281 = por %p279, %p280
    %p282 = scmp.ne.s32.totalorder %s274, %s276
    %p283 = scmp.eq.s32.totalorder %s77, 1
    %p284 = por %p282, %p283
    %p285 = scmp.ne.s32.totalorder %s276, %s277
    %p286 = scmp.eq.s32.totalorder %s77, 0
    %p287 = por %p285, %p286
    %p288 = scmp.ne.s32.totalorder %s276, %s277
    %p289 = scmp.eq.s32.totalorder %s78, 1
    %p290 = por %p288, %p289
    %p292 = scmp.ne.s32.totalorder %s277, %s291
    %p293 = scmp.eq.s32.totalorder %s78, 0
    %p294 = por %p292, %p293
    %s296 = sadd.s32 %s295, 1
    %p299 = scmp.eq.s32.totalorder %s72, 1
    %p300 = scmp.ne.s32.totalorder %s295, %s297
    %p301 = scmp.eq.s32.totalorder %s72, 0
    %p302 = por %p300, %p301
    %p303 = scmp.ne.s32.totalorder %s295, %s297
    %p304 = scmp.eq.s32.totalorder %s77, 1
    %p305 = por %p303, %p304
    %p306 = scmp.ne.s32.totalorder %s297, %s298
    %p307 = scmp.eq.s32.totalorder %s77, 0
    %p308 = por %p306, %p307
    %p309 = scmp.ne.s32.totalorder %s297, %s298
    %p310 = scmp.eq.s32.totalorder %s78, 1
    %p311 = por %p309, %p310
    %p313 = scmp.ne.s32.totalorder %s298, %s312
    %p314 = scmp.eq.s32.totalorder %s78, 0
    %p315 = por %p313, %p314
    %s317 = sadd.s32 %s316, 1
    %p320 = scmp.eq.s32.totalorder %s72, 1
    %p321 = scmp.ne.s32.totalorder %s316, %s318
    %p322 = scmp.eq.s32.totalorder %s72, 0
    %p323 = por %p321, %p322
    %p324 = scmp.ne.s32.totalorder %s316, %s318
    %p325 = scmp.eq.s32.totalorder %s77, 1
    %p326 = por %p324, %p325
    %p327 = scmp.ne.s32.totalorder %s318, %s319
    %p328 = scmp.eq.s32.totalorder %s77, 0
    %p329 = por %p327, %p328
    %p330 = scmp.ne.s32.totalorder %s318, %s319
    %p331 = scmp.eq.s32.totalorder %s78, 1
    %p332 = por %p330, %p331
    %p334 = scmp.ne.s32.totalorder %s319, %s333
    %p335 = scmp.eq.s32.totalorder %s78, 0
    %p336 = por %p334, %p335
    %s338 = sadd.s32 %s337, 1
    %p341 = scmp.eq.s32.totalorder %s72, 1
    %p342 = scmp.ne.s32.totalorder %s337, %s339
    %p343 = scmp.eq.s32.totalorder %s72, 0
    %p344 = por %p342, %p343
    %p345 = scmp.ne.s32.totalorder %s337, %s339
    %p346 = scmp.eq.s32.totalorder %s77, 1
    %p347 = por %p345, %p346
    %p348 = scmp.ne.s32.totalorder %s339, %s340
    %p349 = scmp.eq.s32.totalorder %s77, 0
    %p350 = por %p348, %p349
    %p351 = scmp.ne.s32.totalorder %s339, %s340
    %p352 = scmp.eq.s32.totalorder %s78, 1
    %p353 = por %p351, %p352
    %p355 = scmp.ne.s32.totalorder %s340, %s354
    %p356 = scmp.eq.s32.totalorder %s78, 0
    %p357 = por %p355, %p356
    %s359 = sadd.s32 %s358, 1
    %p362 = scmp.eq.s32.totalorder %s72, 1
    %p363 = scmp.ne.s32.totalorder %s358, %s360
    %p364 = scmp.eq.s32.totalorder %s72, 0
    %p365 = por %p363, %p364
    %p366 = scmp.ne.s32.totalorder %s358, %s360
    %p367 = scmp.eq.s32.totalorder %s77, 1
    %p368 = por %p366, %p367
    %p369 = scmp.ne.s32.totalorder %s360, %s361
    %p370 = scmp.eq.s32.totalorder %s77, 0
    %p371 = por %p369, %p370
    %p372 = scmp.ne.s32.totalorder %s360, %s361
    %p373 = scmp.eq.s32.totalorder %s78, 1
    %p374 = por %p372, %p373
    %p376 = scmp.ne.s32.totalorder %s361, %s375
    %p377 = scmp.eq.s32.totalorder %s78, 0
    %p378 = por %p376, %p377
    %s380 = sadd.s32 %s379, 1
    %p383 = scmp.eq.s32.totalorder %s72, 1
    %p384 = scmp.ne.s32.totalorder %s379, %s381
    %p385 = scmp.eq.s32.totalorder %s72, 0
    %p386 = por %p384, %p385
    %p387 = scmp.ne.s32.totalorder %s379, %s381
    %p388 = scmp.eq.s32.totalorder %s77, 1
    %p389 = por %p387, %p388
    %p390 = scmp.ne.s32.totalorder %s381, %s382
    %p391 = scmp.eq.s32.totalorder %s77, 0
    %p392 = por %p390, %p391
    %p393 = scmp.ne.s32.totalorder %s381, %s382
    %p394 = scmp.eq.s32.totalorder %s78, 1
    %p395 = por %p393, %p394
    %p397 = scmp.ne.s32.totalorder %s382, %s396
    %p398 = scmp.eq.s32.totalorder %s78, 0
    %p399 = por %p397, %p398
    %s401 = sadd.s32 %s400, 1
    %p404 = scmp.eq.s32.totalorder %s72, 1
    %p405 = scmp.ne.s32.totalorder %s400, %s402
    %p406 = scmp.eq.s32.totalorder %s72, 0
    %p407 = por %p405, %p406
    %p408 = scmp.ne.s32.totalorder %s400, %s402
    %p409 = scmp.eq.s32.totalorder %s77, 1
    %p410 = por %p408, %p409
    %p411 = scmp.ne.s32.totalorder %s402, %s403
    %p412 = scmp.eq.s32.totalorder %s77, 0
    %p413 = por %p411, %p412
    %p414 = scmp.ne.s32.totalorder %s402, %s403
    %p415 = scmp.eq.s32.totalorder %s78, 1
    %p416 = por %p414, %p415
    %p418 = scmp.ne.s32.totalorder %s403, %s417
    %p419 = scmp.eq.s32.totalorder %s78, 0
    %p420 = por %p418, %p419
    %s422 = sadd.s32 %s421, 1
    %p425 = scmp.eq.s32.totalorder %s72, 1
    %p426 = scmp.ne.s32.totalorder %s421, %s423
    %p427 = scmp.eq.s32.totalorder %s72, 0
    %p428 = por %p426, %p427
    %p429 = scmp.ne.s32.totalorder %s421, %s423
    %p430 = scmp.eq.s32.totalorder %s77, 1
    %p431 = por %p429, %p430
    %p432 = scmp.ne.s32.totalorder %s423, %s424
    %p433 = scmp.eq.s32.totalorder %s77, 0
    %p434 = por %p432, %p433
    %p435 = scmp.ne.s32.totalorder %s423, %s424
    %p436 = scmp.eq.s32.totalorder %s78, 1
    %p437 = por %p435, %p436
    %p439 = scmp.ne.s32.totalorder %s424, %s438
    %p440 = scmp.eq.s32.totalorder %s78, 0
    %p441 = por %p439, %p440
    %s443 = sadd.s32 %s442, 1
    %p446 = scmp.eq.s32.totalorder %s72, 1
    %p447 = scmp.ne.s32.totalorder %s442, %s444
    %p448 = scmp.eq.s32.totalorder %s72, 0
    %p449 = por %p447, %p448
    %p450 = scmp.ne.s32.totalorder %s442, %s444
    %p451 = scmp.eq.s32.totalorder %s77, 1
    %p452 = por %p450, %p451
    %p453 = scmp.ne.s32.totalorder %s444, %s445
    %p454 = scmp.eq.s32.totalorder %s77, 0
    %p455 = por %p453, %p454
    %p456 = scmp.ne.s32.totalorder %s444, %s445
    %p457 = scmp.eq.s32.totalorder %s78, 1
    %p458 = por %p456, %p457
    %p460 = scmp.ne.s32.totalorder %s445, %s459
    %p461 = scmp.eq.s32.totalorder %s78, 0
    %p462 = por %p460, %p461
    %s464 = sadd.s32 %s463, 1
    %p467 = scmp.eq.s32.totalorder %s72, 1
    %p468 = scmp.ne.s32.totalorder %s463, %s465
    %p469 = scmp.eq.s32.totalorder %s72, 0
    %p470 = por %p468, %p469
    %p471 = scmp.ne.s32.totalorder %s463, %s465
    %p472 = scmp.eq.s32.totalorder %s77, 1
    %p473 = por %p471, %p472
    %p474 = scmp.ne.s32.totalorder %s465, %s466
    %p475 = scmp.eq.s32.totalorder %s77, 0
    %p476 = por %p474, %p475
    %p477 = scmp.ne.s32.totalorder %s465, %s466
    %p478 = scmp.eq.s32.totalorder %s78, 1
    %p479 = por %p477, %p478
    %p481 = scmp.ne.s32.totalorder %s466, %s480
    %p482 = scmp.eq.s32.totalorder %s78, 0
    %p483 = por %p481, %p482
    %s485 = sadd.s32 %s484, 1
    %p488 = scmp.eq.s32.totalorder %s72, 1
    %p489 = scmp.ne.s32.totalorder %s484, %s486
    %p490 = scmp.eq.s32.totalorder %s72, 0
    %p491 = por %p489, %p490
    %p492 = scmp.ne.s32.totalorder %s484, %s486
    %p493 = scmp.eq.s32.totalorder %s77, 1
    %p494 = por %p492, %p493
    %p495 = scmp.ne.s32.totalorder %s486, %s487
    %p496 = scmp.eq.s32.totalorder %s77, 0
    %p497 = por %p495, %p496
    %p498 = scmp.ne.s32.totalorder %s486, %s487
    %p499 = scmp.eq.s32.totalorder %s78, 1
    %p500 = por %p498, %p499
    %p502 = scmp.ne.s32.totalorder %s487, %s501
    %p503 = scmp.eq.s32.totalorder %s78, 0
    %p504 = por %p502, %p503
    %s506 = sadd.s32 %s505, 1
    %p509 = scmp.eq.s32.totalorder %s72, 1
    %p510 = scmp.ne.s32.totalorder %s505, %s507
    %p511 = scmp.eq.s32.totalorder %s72, 0
    %p512 = por %p510, %p511
    %p513 = scmp.ne.s32.totalorder %s505, %s507
    %p514 = scmp.eq.s32.totalorder %s77, 1
    %p515 = por %p513, %p514
    %p516 = scmp.ne.s32.totalorder %s507, %s508
    %p517 = scmp.eq.s32.totalorder %s77, 0
    %p518 = por %p516, %p517
    %p519 = scmp.ne.s32.totalorder %s507, %s508
    %p520 = scmp.eq.s32.totalorder %s78, 1
    %p521 = por %p519, %p520
    %p523 = scmp.ne.s32.totalorder %s508, %s522
    %p524 = scmp.eq.s32.totalorder %s78, 0
    %p525 = por %p523, %p524
    %s527 = sadd.s32 %s526, 1
    %p530 = scmp.eq.s32.totalorder %s72, 1
    %p531 = scmp.ne.s32.totalorder %s526, %s528
    %p532 = scmp.eq.s32.totalorder %s72, 0
    %p533 = por %p531, %p532
    %p534 = scmp.ne.s32.totalorder %s526, %s528
    %p535 = scmp.eq.s32.totalorder %s77, 1
    %p536 = por %p534, %p535
    %p537 = scmp.ne.s32.totalorder %s528, %s529
    %p538 = scmp.eq.s32.totalorder %s77, 0
    %p539 = por %p537, %p538
    %p540 = scmp.ne.s32.totalorder %s528, %s529
    %p541 = scmp.eq.s32.totalorder %s78, 1
    %p542 = por %p540, %p541
    %p544 = scmp.ne.s32.totalorder %s529, %s543
    %p545 = scmp.eq.s32.totalorder %s78, 0
    %p546 = por %p544, %p545
    %s548 = sadd.s32 %s547, 1
    %p551 = scmp.eq.s32.totalorder %s72, 1
    %p552 = scmp.ne.s32.totalorder %s547, %s549
    %p553 = scmp.eq.s32.totalorder %s72, 0
    %p554 = por %p552, %p553
    %p555 = scmp.ne.s32.totalorder %s547, %s549
    %p556 = scmp.eq.s32.totalorder %s77, 1
    %p557 = por %p555, %p556
    %p558 = scmp.ne.s32.totalorder %s549, %s550
    %p559 = scmp.eq.s32.totalorder %s77, 0
    %p560 = por %p558, %p559
    %p561 = scmp.ne.s32.totalorder %s549, %s550
    %p562 = scmp.eq.s32.totalorder %s78, 1
    %p563 = por %p561, %p562
    %p565 = scmp.ne.s32.totalorder %s550, %s564
    %p566 = scmp.eq.s32.totalorder %s78, 0
    %p567 = por %p565, %p566
    %s569 = sadd.s32 %s568, 1
    %p572 = scmp.eq.s32.totalorder %s72, 1
    %p573 = scmp.ne.s32.totalorder %s568, %s570
    %p574 = scmp.eq.s32.totalorder %s72, 0
    %p575 = por %p573, %p574
    %p576 = scmp.ne.s32.totalorder %s568, %s570
    %p577 = scmp.eq.s32.totalorder %s77, 1
    %p578 = por %p576, %p577
    %p579 = scmp.ne.s32.totalorder %s570, %s571
    %p580 = scmp.eq.s32.totalorder %s77, 0
    %p581 = por %p579, %p580
    %p582 = scmp.ne.s32.totalorder %s570, %s571
    %p583 = scmp.eq.s32.totalorder %s78, 1
    %p584 = por %p582, %p583
    %p586 = scmp.ne.s32.totalorder %s571, %s585
    %p587 = scmp.eq.s32.totalorder %s78, 0
    %p588 = por %p586, %p587
    %s590 = sadd.s32 %s589, 1
    %p593 = scmp.eq.s32.totalorder %s72, 1
    %p594 = scmp.ne.s32.totalorder %s589, %s591
    %p595 = scmp.eq.s32.totalorder %s72, 0
    %p596 = por %p594, %p595
    %p597 = scmp.ne.s32.totalorder %s589, %s591
    %p598 = scmp.eq.s32.totalorder %s77, 1
    %p599 = por %p597, %p598
    %p600 = scmp.ne.s32.totalorder %s591, %s592
    %p601 = scmp.eq.s32.totalorder %s77, 0
    %p602 = por %p600, %p601
    %p603 = scmp.ne.s32.totalorder %s591, %s592
    %p604 = scmp.eq.s32.totalorder %s78, 1
    %p605 = por %p603, %p604
    %p607 = scmp.ne.s32.totalorder %s592, %s606
    %p608 = scmp.eq.s32.totalorder %s78, 0
    %p609 = por %p607, %p608
    %s611 = sadd.s32 %s610, 1
    %p614 = scmp.eq.s32.totalorder %s72, 1
    %p615 = scmp.ne.s32.totalorder %s610, %s612
    %p616 = scmp.eq.s32.totalorder %s72, 0
    %p617 = por %p615, %p616
    %p618 = scmp.ne.s32.totalorder %s610, %s612
    %p619 = scmp.eq.s32.totalorder %s77, 1
    %p620 = por %p618, %p619
    %p621 = scmp.ne.s32.totalorder %s612, %s613
    %p622 = scmp.eq.s32.totalorder %s77, 0
    %p623 = por %p621, %p622
    %p624 = scmp.ne.s32.totalorder %s612, %s613
    %p625 = scmp.eq.s32.totalorder %s78, 1
    %p626 = por %p624, %p625
    %p628 = scmp.ne.s32.totalorder %s613, %s627
    %p629 = scmp.eq.s32.totalorder %s78, 0
    %p630 = por %p628, %p629
    %s632 = sadd.s32 %s631, 1
    %p635 = scmp.eq.s32.totalorder %s72, 1
    %p636 = scmp.ne.s32.totalorder %s631, %s633
    %p637 = scmp.eq.s32.totalorder %s72, 0
    %p638 = por %p636, %p637
    %p639 = scmp.ne.s32.totalorder %s631, %s633
    %p640 = scmp.eq.s32.totalorder %s77, 1
    %p641 = por %p639, %p640
    %p642 = scmp.ne.s32.totalorder %s633, %s634
    %p643 = scmp.eq.s32.totalorder %s77, 0
    %p644 = por %p642, %p643
    %p645 = scmp.ne.s32.totalorder %s633, %s634
    %p646 = scmp.eq.s32.totalorder %s78, 1
    %p647 = por %p645, %p646
    %p649 = scmp.ne.s32.totalorder %s634, %s648
    %p650 = scmp.eq.s32.totalorder %s78, 0
    %p651 = por %p649, %p650
    %s653 = sadd.s32 %s652, 1
    %p656 = scmp.eq.s32.totalorder %s72, 1
    %p657 = scmp.ne.s32.totalorder %s652, %s654
    %p658 = scmp.eq.s32.totalorder %s72, 0
    %p659 = por %p657, %p658
    %p660 = scmp.ne.s32.totalorder %s652, %s654
    %p661 = scmp.eq.s32.totalorder %s77, 1
    %p662 = por %p660, %p661
    %p663 = scmp.ne.s32.totalorder %s654, %s655
    %p664 = scmp.eq.s32.totalorder %s77, 0
    %p665 = por %p663, %p664
    %p666 = scmp.ne.s32.totalorder %s654, %s655
    %p667 = scmp.eq.s32.totalorder %s78, 1
    %p668 = por %p666, %p667
    %p670 = scmp.ne.s32.totalorder %s655, %s669
    %p671 = scmp.eq.s32.totalorder %s78, 0
    %p672 = por %p670, %p671
    %s674 = sadd.s32 %s673, 1
    %p677 = scmp.eq.s32.totalorder %s72, 1
    %p678 = scmp.ne.s32.totalorder %s673, %s675
    %p679 = scmp.eq.s32.totalorder %s72, 0
    %p680 = por %p678, %p679
    %p681 = scmp.ne.s32.totalorder %s673, %s675
    %p682 = scmp.eq.s32.totalorder %s77, 1
    %p683 = por %p681, %p682
    %p684 = scmp.ne.s32.totalorder %s675, %s676
    %p685 = scmp.eq.s32.totalorder %s77, 0
    %p686 = por %p684, %p685
    %p687 = scmp.ne.s32.totalorder %s675, %s676
    %p688 = scmp.eq.s32.totalorder %s78, 1
    %p689 = por %p687, %p688
    %p691 = scmp.ne.s32.totalorder %s676, %s690
    %p692 = scmp.eq.s32.totalorder %s78, 0
    %p693 = por %p691, %p692
    %s695 = sadd.s32 %s694, 1
    %p698 = scmp.eq.s32.totalorder %s72, 1
    %p699 = scmp.ne.s32.totalorder %s694, %s696
    %p700 = scmp.eq.s32.totalorder %s72, 0
    %p701 = por %p699, %p700
    %p702 = scmp.ne.s32.totalorder %s694, %s696
    %p703 = scmp.eq.s32.totalorder %s77, 1
    %p704 = por %p702, %p703
    %p705 = scmp.ne.s32.totalorder %s696, %s697
    %p706 = scmp.eq.s32.totalorder %s77, 0
    %p707 = por %p705, %p706
    %p708 = scmp.ne.s32.totalorder %s696, %s697
    %p709 = scmp.eq.s32.totalorder %s78, 1
    %p710 = por %p708, %p709
    %p712 = scmp.ne.s32.totalorder %s697, %s711
    %p713 = scmp.eq.s32.totalorder %s78, 0
    %p714 = por %p712, %p713
    %s716 = sadd.s32 %s715, 1
    %p719 = scmp.eq.s32.totalorder %s72, 1
    %p720 = scmp.ne.s32.totalorder %s715, %s717
    %p721 = scmp.eq.s32.totalorder %s72, 0
    %p722 = por %p720, %p721
    %p723 = scmp.ne.s32.totalorder %s715, %s717
    %p724 = scmp.eq.s32.totalorder %s77, 1
    %p725 = por %p723, %p724
    %p726 = scmp.ne.s32.totalorder %s717, %s718
    %p727 = scmp.eq.s32.totalorder %s77, 0
    %p728 = por %p726, %p727
    %p729 = scmp.ne.s32.totalorder %s717, %s718
    %p730 = scmp.eq.s32.totalorder %s78, 1
    %p731 = por %p729, %p730
    %p733 = scmp.ne.s32.totalorder %s718, %s732
    %p734 = scmp.eq.s32.totalorder %s78, 0
    %p735 = por %p733, %p734
    %s736 = ssub.s32 %s72, %s79
    %p737 = scmp.eq.s32.totalorder %s736, 0
    %s739 = sadd.s32 %s738, 1
    %s740 = scalar_select %p737, %s738, %s739
    %p743 = pneg %p737
    %p744 = scmp.eq.s32.totalorder %s72, 1
    %p745 = por %p743, %p744
    %p746 = scmp.ne.s32.totalorder %s738, %s741
    %p747 = scmp.eq.s32.totalorder %s72, 0
    %p748 = por %p746, %p747
    %p749 = scmp.ne.s32.totalorder %s738, %s741
    %p750 = scmp.eq.s32.totalorder %s77, 1
    %p751 = por %p749, %p750
    %p752 = scmp.ne.s32.totalorder %s741, %s742
    %p753 = scmp.eq.s32.totalorder %s77, 0
    %p754 = por %p752, %p753
    %p755 = scmp.ne.s32.totalorder %s741, %s742
    %p756 = scmp.eq.s32.totalorder %s78, 1
    %p757 = por %p755, %p756
    %p759 = scmp.ne.s32.totalorder %s742, %s758
    %p760 = scmp.eq.s32.totalorder %s78, 0
    %p761 = por %p759, %p760
    %s762 = ssub.s32 %s72, %s79
    %p763 = scmp.eq.s32.totalorder %s762, 0
    %s765 = sadd.s32 %s764, 1
    %s766 = scalar_select %p763, %s764, %s765
    %p769 = pneg %p763
    %p770 = scmp.eq.s32.totalorder %s72, 1
    %p771 = por %p769, %p770
    %p772 = scmp.ne.s32.totalorder %s764, %s767
    %p773 = scmp.eq.s32.totalorder %s72, 0
    %p774 = por %p772, %p773
    %p775 = scmp.ne.s32.totalorder %s764, %s767
    %p776 = scmp.eq.s32.totalorder %s77, 1
    %p777 = por %p775, %p776
    %p778 = scmp.ne.s32.totalorder %s767, %s768
    %p779 = scmp.eq.s32.totalorder %s77, 0
    %p780 = por %p778, %p779
    %p781 = scmp.ne.s32.totalorder %s767, %s768
    %p782 = scmp.eq.s32.totalorder %s78, 1
    %p783 = por %p781, %p782
    %p785 = scmp.ne.s32.totalorder %s768, %s784
    %p786 = scmp.eq.s32.totalorder %s78, 0
    %p787 = por %p785, %p786
    %p788 = scmp.le.s32.totalorder 1, %s72
    %p789 = scmp.lt.s32.totalorder %s72, 3
    %p790 = pnand %p788, %p789
    %p791 = pneg %p790
    // Predicated region
    $region9: #{mixmlp_forward.1} parent=5 // pred_check
      _
    $region10: #{mixmlp_forward.1} parent=5 // pred_check_branch
      %793 = sbr.rel (%p790) target = $region12
    $region11: #{mixmlp_forward.1} parent=5 // pred_region
      %s794 = ssub.s32 %s72, 1
      // Predicated region
      $region13: #{mixmlp_forward.1} parent=11 // pred_check
        %p795 = pneg %p119
      $region14: #{mixmlp_forward.1} parent=11 // pred_check_branch
        %797 = sbr.rel (%p795) target = $region16
      $region15: #{mixmlp_forward.1} parent=11 // pred_region
        _
      $region16: #{mixmlp_forward.1} parent=11 // pred_fallthru
        _
      // Predicated region
      $region17: #{mixmlp_forward.1} parent=11 // pred_check
        %p798 = pneg %p140
      $region18: #{mixmlp_forward.1} parent=11 // pred_check_branch
        %800 = sbr.rel (%p798) target = $region20
      $region19: #{mixmlp_forward.1} parent=11 // pred_region
        _
      $region20: #{mixmlp_forward.1} parent=11 // pred_fallthru
        _
      // Predicated region
      $region21: #{mixmlp_forward.1} parent=11 // pred_check
        %p801 = pneg %p161
      $region22: #{mixmlp_forward.1} parent=11 // pred_check_branch
        %803 = sbr.rel (%p801) target = $region24
      $region23: #{mixmlp_forward.1} parent=11 // pred_region
        _
      $region24: #{mixmlp_forward.1} parent=11 // pred_fallthru
        _
      // Predicated region
      $region25: #{mixmlp_forward.1} parent=11 // pred_check
        %p804 = pneg %p182
      $region26: #{mixmlp_forward.1} parent=11 // pred_check_branch
        %806 = sbr.rel (%p804) target = $region28
      $region27: #{mixmlp_forward.1} parent=11 // pred_region
        _
      $region28: #{mixmlp_forward.1} parent=11 // pred_fallthru
        _
      // Predicated region
      $region29: #{mixmlp_forward.1} parent=11 // pred_check
        %p807 = pneg %p203
      $region30: #{mixmlp_forward.1} parent=11 // pred_check_branch
        %809 = sbr.rel (%p807) target = $region32
      $region31: #{mixmlp_forward.1} parent=11 // pred_region
        _
      $region32: #{mixmlp_forward.1} parent=11 // pred_fallthru
        _
      // Predicated region
      $region33: #{mixmlp_forward.1} parent=11 // pred_check
        %p810 = pneg %p224
      $region34: #{mixmlp_forward.1} parent=11 // pred_check_branch
        %812 = sbr.rel (%p810) target = $region36
      $region35: #{mixmlp_forward.1} parent=11 // pred_region
        _
      $region36: #{mixmlp_forward.1} parent=11 // pred_fallthru
        _
      // Predicated region
      $region37: #{mixmlp_forward.1} parent=11 // pred_check
        %p813 = pneg %p245
      $region38: #{mixmlp_forward.1} parent=11 // pred_check_branch
        %815 = sbr.rel (%p813) target = $region40
      $region39: #{mixmlp_forward.1} parent=11 // pred_region
        _
      $region40: #{mixmlp_forward.1} parent=11 // pred_fallthru
        _
      // Predicated region
      $region41: #{mixmlp_forward.1} parent=11 // pred_check
        %p816 = pneg %p266
      $region42: #{mixmlp_forward.1} parent=11 // pred_check_branch
        %818 = sbr.rel (%p816) target = $region44
      $region43: #{mixmlp_forward.1} parent=11 // pred_region
        _
      $region44: #{mixmlp_forward.1} parent=11 // pred_fallthru
        _
      // Predicated region
      $region45: #{mixmlp_forward.1} parent=11 // pred_check
        %p819 = pneg %p287
      $region46: #{mixmlp_forward.1} parent=11 // pred_check_branch
        %821 = sbr.rel (%p819) target = $region48
      $region47: #{mixmlp_forward.1} parent=11 // pred_region
        _
      $region48: #{mixmlp_forward.1} parent=11 // pred_fallthru
        _
      // Predicated region
      $region49: #{mixmlp_forward.1} parent=11 // pred_check
        %p822 = pneg %p308
      $region50: #{mixmlp_forward.1} parent=11 // pred_check_branch
        %824 = sbr.rel (%p822) target = $region52
      $region51: #{mixmlp_forward.1} parent=11 // pred_region
        _
      $region52: #{mixmlp_forward.1} parent=11 // pred_fallthru
        _
      // Predicated region
      $region53: #{mixmlp_forward.1} parent=11 // pred_check
        %p825 = pneg %p329
      $region54: #{mixmlp_forward.1} parent=11 // pred_check_branch
        %827 = sbr.rel (%p825) target = $region56
      $region55: #{mixmlp_forward.1} parent=11 // pred_region
        _
      $region56: #{mixmlp_forward.1} parent=11 // pred_fallthru
        _
      // Predicated region
      $region57: #{mixmlp_forward.1} parent=11 // pred_check
        %p828 = pneg %p350
      $region58: #{mixmlp_forward.1} parent=11 // pred_check_branch
        %830 = sbr.rel (%p828) target = $region60
      $region59: #{mixmlp_forward.1} parent=11 // pred_region
        _
      $region60: #{mixmlp_forward.1} parent=11 // pred_fallthru
        _
      // Predicated region
      $region61: #{mixmlp_forward.1} parent=11 // pred_check
        %p831 = pneg %p371
      $region62: #{mixmlp_forward.1} parent=11 // pred_check_branch
        %833 = sbr.rel (%p831) target = $region64
      $region63: #{mixmlp_forward.1} parent=11 // pred_region
        _
      $region64: #{mixmlp_forward.1} parent=11 // pred_fallthru
        _
      // Predicated region
      $region65: #{mixmlp_forward.1} parent=11 // pred_check
        %p834 = pneg %p392
      $region66: #{mixmlp_forward.1} parent=11 // pred_check_branch
        %836 = sbr.rel (%p834) target = $region68
      $region67: #{mixmlp_forward.1} parent=11 // pred_region
        _
      $region68: #{mixmlp_forward.1} parent=11 // pred_fallthru
        _
      // Predicated region
      $region69: #{mixmlp_forward.1} parent=11 // pred_check
        %p837 = pneg %p413
      $region70: #{mixmlp_forward.1} parent=11 // pred_check_branch
        %839 = sbr.rel (%p837) target = $region72
      $region71: #{mixmlp_forward.1} parent=11 // pred_region
        _
      $region72: #{mixmlp_forward.1} parent=11 // pred_fallthru
        _
      // Predicated region
      $region73: #{mixmlp_forward.1} parent=11 // pred_check
        %p840 = pneg %p434
      $region74: #{mixmlp_forward.1} parent=11 // pred_check_branch
        %842 = sbr.rel (%p840) target = $region76
      $region75: #{mixmlp_forward.1} parent=11 // pred_region
        _
      $region76: #{mixmlp_forward.1} parent=11 // pred_fallthru
        _
      // Predicated region
      $region77: #{mixmlp_forward.1} parent=11 // pred_check
        %p843 = pneg %p455
      $region78: #{mixmlp_forward.1} parent=11 // pred_check_branch
        %845 = sbr.rel (%p843) target = $region80
      $region79: #{mixmlp_forward.1} parent=11 // pred_region
        _
      $region80: #{mixmlp_forward.1} parent=11 // pred_fallthru
        _
      // Predicated region
      $region81: #{mixmlp_forward.1} parent=11 // pred_check
        %p846 = pneg %p476
      $region82: #{mixmlp_forward.1} parent=11 // pred_check_branch
        %848 = sbr.rel (%p846) target = $region84
      $region83: #{mixmlp_forward.1} parent=11 // pred_region
        _
      $region84: #{mixmlp_forward.1} parent=11 // pred_fallthru
        _
      // Predicated region
      $region85: #{mixmlp_forward.1} parent=11 // pred_check
        %p849 = pneg %p497
      $region86: #{mixmlp_forward.1} parent=11 // pred_check_branch
        %851 = sbr.rel (%p849) target = $region88
      $region87: #{mixmlp_forward.1} parent=11 // pred_region
        _
      $region88: #{mixmlp_forward.1} parent=11 // pred_fallthru
        _
      // Predicated region
      $region89: #{mixmlp_forward.1} parent=11 // pred_check
        %p852 = pneg %p518
      $region90: #{mixmlp_forward.1} parent=11 // pred_check_branch
        %854 = sbr.rel (%p852) target = $region92
      $region91: #{mixmlp_forward.1} parent=11 // pred_region
        _
      $region92: #{mixmlp_forward.1} parent=11 // pred_fallthru
        _
      // Predicated region
      $region93: #{mixmlp_forward.1} parent=11 // pred_check
        %p855 = pneg %p539
      $region94: #{mixmlp_forward.1} parent=11 // pred_check_branch
        %857 = sbr.rel (%p855) target = $region96
      $region95: #{mixmlp_forward.1} parent=11 // pred_region
        _
      $region96: #{mixmlp_forward.1} parent=11 // pred_fallthru
        _
      // Predicated region
      $region97: #{mixmlp_forward.1} parent=11 // pred_check
        %p858 = pneg %p560
      $region98: #{mixmlp_forward.1} parent=11 // pred_check_branch
        %860 = sbr.rel (%p858) target = $region100
      $region99: #{mixmlp_forward.1} parent=11 // pred_region
        _
      $region100: #{mixmlp_forward.1} parent=11 // pred_fallthru
        _
      // Predicated region
      $region101: #{mixmlp_forward.1} parent=11 // pred_check
        %p861 = pneg %p581
      $region102: #{mixmlp_forward.1} parent=11 // pred_check_branch
        %863 = sbr.rel (%p861) target = $region104
      $region103: #{mixmlp_forward.1} parent=11 // pred_region
        _
      $region104: #{mixmlp_forward.1} parent=11 // pred_fallthru
        _
      // Predicated region
      $region105: #{mixmlp_forward.1} parent=11 // pred_check
        %p864 = pneg %p602
      $region106: #{mixmlp_forward.1} parent=11 // pred_check_branch
        %866 = sbr.rel (%p864) target = $region108
      $region107: #{mixmlp_forward.1} parent=11 // pred_region
        _
      $region108: #{mixmlp_forward.1} parent=11 // pred_fallthru
        _
      // Predicated region
      $region109: #{mixmlp_forward.1} parent=11 // pred_check
        %p867 = pneg %p623
      $region110: #{mixmlp_forward.1} parent=11 // pred_check_branch
        %869 = sbr.rel (%p867) target = $region112
      $region111: #{mixmlp_forward.1} parent=11 // pred_region
        _
      $region112: #{mixmlp_forward.1} parent=11 // pred_fallthru
        _
      // Predicated region
      $region113: #{mixmlp_forward.1} parent=11 // pred_check
        %p870 = pneg %p644
      $region114: #{mixmlp_forward.1} parent=11 // pred_check_branch
        %872 = sbr.rel (%p870) target = $region116
      $region115: #{mixmlp_forward.1} parent=11 // pred_region
        _
      $region116: #{mixmlp_forward.1} parent=11 // pred_fallthru
        _
      // Predicated region
      $region117: #{mixmlp_forward.1} parent=11 // pred_check
        %p873 = pneg %p665
      $region118: #{mixmlp_forward.1} parent=11 // pred_check_branch
        %875 = sbr.rel (%p873) target = $region120
      $region119: #{mixmlp_forward.1} parent=11 // pred_region
        _
      $region120: #{mixmlp_forward.1} parent=11 // pred_fallthru
        _
      // Predicated region
      $region121: #{mixmlp_forward.1} parent=11 // pred_check
        %p876 = pneg %p686
      $region122: #{mixmlp_forward.1} parent=11 // pred_check_branch
        %878 = sbr.rel (%p876) target = $region124
      $region123: #{mixmlp_forward.1} parent=11 // pred_region
        _
      $region124: #{mixmlp_forward.1} parent=11 // pred_fallthru
        _
      // Predicated region
      $region125: #{mixmlp_forward.1} parent=11 // pred_check
        %p879 = pneg %p707
      $region126: #{mixmlp_forward.1} parent=11 // pred_check_branch
        %881 = sbr.rel (%p879) target = $region128
      $region127: #{mixmlp_forward.1} parent=11 // pred_region
        _
      $region128: #{mixmlp_forward.1} parent=11 // pred_fallthru
        _
      // Predicated region
      $region129: #{mixmlp_forward.1} parent=11 // pred_check
        %p882 = pneg %p728
      $region130: #{mixmlp_forward.1} parent=11 // pred_check_branch
        %884 = sbr.rel (%p882) target = $region132
      $region131: #{mixmlp_forward.1} parent=11 // pred_region
        _
      $region132: #{mixmlp_forward.1} parent=11 // pred_fallthru
        _
    $region12: #{mixmlp_forward.1} parent=5 // pred_fallthru
      _
    %p885 = scmp.lt.s32.totalorder %s72, 2
    // Predicated region
    $region133: #{mixmlp_forward.1} parent=5 // pred_check
      %p886 = pneg %p885
    $region134: #{mixmlp_forward.1} parent=5 // pred_check_branch
      %888 = sbr.rel (%p886) target = $region136
    $region135: #{mixmlp_forward.1} parent=5 // pred_region
      // Predicated region
      $region137: #{mixmlp_forward.1} parent=135 // pred_check
        %p889 = pneg %p92
      $region138: #{mixmlp_forward.1} parent=135 // pred_check_branch
        %891 = sbr.rel (%p889) target = $region140
      $region139: #{mixmlp_forward.1} parent=135 // pred_region
        %p892 = scmp.lt.s32.totalorder %s72, 1
        %s893 = scalar_select %p892, %s72, 1
        %s894 = smul.addr %s893, 2
        %s895 = smul.addr %s894, 4
        %s896 = scalar_lea.vmem %s1, %s895
      $region140: #{mixmlp_forward.1} parent=135 // pred_fallthru
        _
    $region136: #{mixmlp_forward.1} parent=5 // pred_fallthru
      _
    %p897 = scmp.le.s32.totalorder 1, %s72
    %p898 = scmp.lt.s32.totalorder %s72, 3
    %p899 = pnand %p897, %p898
    %p900 = pneg %p899
    // Predicated region
    $region141: #{mixmlp_forward.1} parent=5 // pred_check
      _
    $region142: #{mixmlp_forward.1} parent=5 // pred_check_branch
      %902 = sbr.rel (%p899) target = $region144
    $region143: #{mixmlp_forward.1} parent=5 // pred_region
      %s903 = ssub.s32 %s72, 1
      %p904 = scmp.lt.s32.totalorder %s77, 1
      %s905 = scalar_select %p904, %s77, 1
      %s906 = smul.addr %s905, 2
      %s907 = smul.addr %s906, 4
      %s908 = scalar_lea.vmem %s1, %s907
      %p909 = pneg %p98
      %p910 = pneg %p95
      %p911 = pneg %p119
      %p912 = pneg %p116
      %p913 = pneg %p140
      %p914 = pneg %p137
      %p915 = pneg %p161
      %p916 = pneg %p158
      %p917 = pneg %p182
      %p918 = pneg %p179
      %p919 = pneg %p203
      %p920 = pneg %p200
      %p921 = pneg %p224
      %p922 = pneg %p221
      %p923 = pneg %p245
      %p924 = pneg %p242
      %p925 = pneg %p266
      %p926 = pneg %p263
      %p927 = pneg %p287
      %p928 = pneg %p284
      %p929 = pneg %p308
      %p930 = pneg %p305
      %p931 = pneg %p329
      %p932 = pneg %p326
      %p933 = pneg %p350
      %p934 = pneg %p347
      %p935 = pneg %p371
      %p936 = pneg %p368
      %p937 = pneg %p392
      %p938 = pneg %p389
      %p939 = pneg %p413
      %p940 = pneg %p410
      %p941 = pneg %p434
      %p942 = pneg %p431
      %p943 = pneg %p455
      %p944 = pneg %p452
      %p945 = pneg %p476
      %p946 = pneg %p473
      %p947 = pneg %p497
      %p948 = pneg %p494
      %p949 = pneg %p518
      %p950 = pneg %p515
      %p951 = pneg %p539
      %p952 = pneg %p536
      %p953 = pneg %p560
      %p954 = pneg %p557
      %p955 = pneg %p581
      %p956 = pneg %p578
      %p957 = pneg %p602
      %p958 = pneg %p599
      %p959 = pneg %p623
      %p960 = pneg %p620
      %p961 = pneg %p644
      %p962 = pneg %p641
      %p963 = pneg %p665
      %p964 = pneg %p662
      %p965 = pneg %p686
      %p966 = pneg %p683
      %p967 = pneg %p707
      %p968 = pneg %p704
      %p969 = pneg %p728
      %p970 = pneg %p725
      %p971 = pneg %p754
      %p972 = pneg %p751
      %p973 = scmp.lt.s32.totalorder %s77, 1
      %s974 = scalar_select %p973, %s77, 1
      %s975 = smul.addr %s974, 2
      %s976 = scalar_lea.vmem %s63, %s975
      %p977 = pneg %p780
      %p978 = pneg %p777
      %p979 = scmp.lt.s32.totalorder %s77, 1
      %s980 = scalar_select %p979, %s77, 1
      %s981 = smul.addr %s980, 2
      %s982 = scalar_lea.vmem %s65, %s981
      %p983 = scmp.lt.s32.totalorder %s77, 1
      %s984 = scalar_select %p983, %s77, 1
      %s985 = smul.addr %s984, 2
      %s986 = smul.addr %s985, 4
      %s987 = scalar_lea.vmem %s1, %s986
      %p988 = scmp.lt.s32.totalorder %s77, 1
      %s989 = scalar_select %p988, %s77, 1
      %s990 = smul.addr %s989, 2
      %s991 = scalar_lea.vmem %s63, %s990
      %p992 = scmp.lt.s32.totalorder %s77, 1
      %s993 = scalar_select %p992, %s77, 1
      %s994 = smul.addr %s993, 2
      %s995 = scalar_lea.vmem %s65, %s994
      %v997 = vld [vmem:[%s987] sm:$0xf]
      %v998 = vld [vmem:[%s987 + $0x4] sm:$0xf]
      %v999 = vld [vmem:[%s3] sm:$0xf]
      %v1000 = vld [vmem:[%s3 + $0x4] sm:$0xf]
      %v1001 = vld [vmem:[%s3 + $0x8] sm:$0xf]
      %v1002 = vld [vmem:[%s3 + $0xc] sm:$0xf]
      %v1003 = vld [vmem:[%s3 + $0x10] sm:$0xf]
      %v1004 = vld [vmem:[%s3 + $0x14] sm:$0xf]
      %v1005 = vld [vmem:[%s3 + $0x18] sm:$0xf]
      %v1006 = vld [vmem:[%s3 + $0x1c] sm:$0xf]
      %v1007 = vld [vmem:[%s3 + $0x20] sm:$0xf]
      %v1008 = vld [vmem:[%s3 + $0x24] sm:$0xf]
      %v1009 = vld [vmem:[%s5] sm:$0x1]
      %v1011 = vlaneseq
      %v1012 = vshrl.u32 %v1011, 7
      %v1013 = vsub.s32 0, %v1012
      %v1014 = vrot.slane %v1009, %v1013
      %v1018 = vunpack.c.l.b16 %v997
      %v1019 = vunpack.c.l.b16 %v998
      %v1020 = vpack.c.b16 %v1019, %v1018
      %v1031 = vunpack.c.l.b16 %v999
      %v1032 = vunpack.c.l.b16 %v1000
      %v1033 = vunpack.c.l.b16 %v1001
      %v1034 = vunpack.c.l.b16 %v1002
      %v1035 = vunpack.c.l.b16 %v1003
      %v1036 = vunpack.c.l.b16 %v1004
      %v1037 = vunpack.c.l.b16 %v1005
      %v1038 = vunpack.c.l.b16 %v1006
      %v1039 = vunpack.c.l.b16 %v1007
      %v1040 = vunpack.c.l.b16 %v1008
      %v1041 = vpack.c.b16 %v1032, %v1031
      %v1042 = vpack.c.b16 %v1034, %v1033
      %v1043 = vpack.c.b16 %v1036, %v1035
      %v1044 = vpack.c.b16 %v1038, %v1037
      %v1045 = vpack.c.b16 %v1040, %v1039
      %vm1051 = vcmask 654336
      %v1053 = vsel %vm1051, %v1020, 0
      %1055 = vmatprep.subr.bf16.mxu0 0
      %1056 = vmatpush1.bf16.msra.mxu0 %v1041
      %1057 = vmatprep.subr.bf16.mxu0 0
      %1058 = vmatpush1.bf16.msra.mxu0 %v1042
      %1059 = vmatprep.subr.bf16.mxu0 0
      %1060 = vmatpush1.bf16.msra.mxu0 %v1043
      %1061 = vmatprep.subr.bf16.mxu0 0
      %1062 = vmatpush1.bf16.msra.mxu0 %v1044
      %1063 = vmatprep.subr.bf16.mxu0 0
      %1064 = vmatpush1.bf16.msra.mxu0 %v1045
      %1065 = vmatprep.subr.bf16.mxu0 0
      %1066 = vmatpush1.bf16.msra.mxu0 0
      %1067 = vmatprep.subr.bf16.mxu0 0
      %1068 = vmatpush1.bf16.msra.mxu0 0
      %1069 = vmatprep.subr.bf16.mxu0 0
      %1070 = vmatpush1.bf16.msra.mxu0 0
      %1071 = vmatprep.subr.bf16.mxu0 0
      %1072 = vmatpush1.bf16.msra.mxu0 0
      %1073 = vmatprep.subr.bf16.mxu0 0
      %1074 = vmatpush1.bf16.msra.mxu0 0
      %1075 = vmatprep.subr.bf16.mxu0 0
      %1076 = vmatpush1.bf16.msra.mxu0 0
      %1077 = vmatprep.subr.bf16.mxu0 0
      %1078 = vmatpush1.bf16.msra.mxu0 0
      %1079 = vmatprep.subr.bf16.mxu0 0
      %1080 = vmatpush1.bf16.msra.mxu0 0
      %1081 = vmatprep.subr.bf16.mxu0 0
      %1082 = vmatpush1.bf16.msra.mxu0 0
      %1083 = vmatprep.subr.bf16.mxu0 0
      %1084 = vmatpush1.bf16.msra.mxu0 0
      %1085 = vmatprep.subr.bf16.mxu0 0
      %1086 = vmatpush1.bf16.msra.mxu0 0
      %1087 = vmatprep.mubr.bf16.mxu0 0
      %1088 = vmatmul.mubr.bf16.gmra.mrb[0].mxu0 %v1053
      %v1089 = vpop.f32.mrb[0].mxu0
      %v1090 = vadd.f32 %v1014, %v1089
      %v1091 = vpop.f32.mrb[0].mxu0
      %v1092 = vpop.f32.mrb[0].mxu0
      %v1093 = vadd.f32 %v1014, %v1092
      %v1094 = vpop.f32.mrb[0].mxu0
      %1095 = vdwg.mxu0
      %v1096 = vmul.f32 %v1090, 0.1
      %v1097 = vmul.f32 %v1093, 0.1
      %v1098 = vmax.f32 %v1090, %v1096
      %v1099 = vmax.f32 %v1093, %v1097
      %v1100 = vld [vmem:[%s7] sm:$0x1]
      %v1101 = vld [vmem:[%s9] sm:$0x1]
      %v1102 = vld [vmem:[%s11] sm:$0xf]
      %v1103 = vld [vmem:[%s11 + $0x4] sm:$0xf]
      %v1104 = vld [vmem:[%s11 + $0x8] sm:$0xf]
      %v1105 = vld [vmem:[%s11 + $0xc] sm:$0xf]
      %v1106 = vld [vmem:[%s11 + $0x10] sm:$0xf]
      %v1107 = vld [vmem:[%s11 + $0x14] sm:$0xf]
      %v1108 = vld [vmem:[%s11 + $0x18] sm:$0xf]
      %v1109 = vld [vmem:[%s11 + $0x1c] sm:$0xf]
      %v1110 = vld [vmem:[%s13] sm:$0xff]
      %v1111 = vld [vmem:[%s13 + $0x8] sm:$0xff]
      %v1112 = vld [vmem:[%s13 + $0x10] sm:$0xff]
      %v1113 = vld [vmem:[%s13 + $0x18] sm:$0xff]
      %v1114 = vld [vmem:[%s13 + $0x20] sm:$0xff]
      %v1115 = vld [vmem:[%s13 + $0x28] sm:$0xff]
      %v1116 = vld [vmem:[%s13 + $0x30] sm:$0xff]
      %v1117 = vld [vmem:[%s13 + $0x38] sm:$0xff]
      %v1118 = vld [vmem:[%s15] sm:$0xf]
      %v1119 = vld [vmem:[%s15 + $0x4] sm:$0xf]
      %v1120 = vld [vmem:[%s17] sm:$0xff]
      %v1121 = vld [vmem:[%s17 + $0x8] sm:$0xff]
      %v1122 = vld [vmem:[%s19] sm:$0x1]
      %v1123 = vld [vmem:[%s21] sm:$0x1]
      %v1124 = vld [vmem:[%s23] sm:$0xf]
      %v1125 = vld [vmem:[%s23 + $0x4] sm:$0xf]
      %v1126 = vld [vmem:[%s23 + $0x8] sm:$0xf]
      %v1127 = vld [vmem:[%s23 + $0xc] sm:$0xf]
      %v1128 = vld [vmem:[%s25] sm:$0x1]
      %v1129 = vld [vmem:[%s27] sm:$0xf]
      %v1130 = vld [vmem:[%s27 + $0x4] sm:$0xf]
      %v1131 = vld [vmem:[%s27 + $0x8] sm:$0xf]
      %v1132 = vld [vmem:[%s27 + $0xc] sm:$0xf]
      %v1133 = vld [vmem:[%s27 + $0x10] sm:$0xf]
      %v1134 = vld [vmem:[%s27 + $0x14] sm:$0xf]
      %v1135 = vld [vmem:[%s27 + $0x18] sm:$0xf]
      %v1136 = vld [vmem:[%s27 + $0x1c] sm:$0xf]
      %v1137 = vld [vmem:[%s27 + $0x20] sm:$0xf]
      %v1138 = vld [vmem:[%s27 + $0x24] sm:$0xf]
      %v1139 = vld [vmem:[%s27 + $0x28] sm:$0xf]
      %v1140 = vld [vmem:[%s27 + $0x2c] sm:$0xf]
      %v1141 = vld [vmem:[%s27 + $0x30] sm:$0xf]
      %v1142 = vld [vmem:[%s27 + $0x34] sm:$0xf]
      %v1143 = vld [vmem:[%s27 + $0x38] sm:$0xf]
      %v1144 = vld [vmem:[%s27 + $0x3c] sm:$0xf]
      %v1145 = vld [vmem:[%s29] sm:$0x1]
      %vm1146 = vcmask 261120
      %v1147 = vsel %vm1146, %v1098, 0.0
      %1148 = vadd.xlane.f32.xlu0 %v1147
      %v1149 = vpop.xlane.xlu0 %1148
      %v1150 = vsel %vm1146, %v1099, 0.0
      %1151 = vadd.xlane.f32.xlu0 %v1150
      %v1152 = vpop.xlane.xlu0 %1151
      %v1153 = vrcp.pop 32.0
      %v1154 = vmul.f32 %v1149, %v1153
      %v1155 = vmul.f32 %v1152, %v1153
      %v1156 = vsub.f32 %v1098, %v1154
      %v1157 = vsub.f32 %v1099, %v1155
      %v1158 = vmul.f32 %v1156, %v1156
      %v1159 = vmul.f32 %v1157, %v1157
      %v1160 = vsel %vm1146, %v1158, 0.0
      %1161 = vadd.xlane.f32.xlu0 %v1160
      %v1162 = vpop.xlane.xlu0 %1161
      %v1163 = vsel %vm1146, %v1159, 0.0
      %1164 = vadd.xlane.f32.xlu0 %v1163
      %v1165 = vpop.xlane.xlu0 %1164
      %v1166 = vmul.f32 %v1162, %v1153
      %v1167 = vmul.f32 %v1165, %v1153
      %v1168 = vadd.f32 %v1166, 1e-05
      %v1169 = vadd.f32 %v1167, 1e-05
      %v1170 = vrsqrt.pop %v1168
      %v1171 = vrsqrt.pop %v1169
      %v1172 = vmul.f32 %v1156, %v1170
      %v1173 = vmul.f32 %v1157, %v1171
      %v1175 = vlaneseq
      %v1176 = vshrl.u32 %v1175, 7
      %v1177 = vsub.s32 0, %v1176
      %v1178 = vrot.slane %v1100, %v1177
      %v1180 = vmul.f32 %v1172, %v1178
      %v1181 = vmul.f32 %v1173, %v1178
      %v1183 = vlaneseq
      %v1184 = vshrl.u32 %v1183, 7
      %v1185 = vsub.s32 0, %v1184
      %v1186 = vrot.slane %v1101, %v1185
      %v1188 = vadd.f32 %v1180, %v1186
      %v1189 = vadd.f32 %v1181, %v1186
      %v1190 = vpack.c.bf16 %v1189, %v1188
      %1192 = vset.pattern.permute.xlu0 0
      %1193 = vperm.xlu0 %1192, %v1110
      %v1194 = vpop.permute.xlu0 %1193
      %1197 = vset.pattern.permute.xlu0 0
      %1198 = vperm.xlu0 %1197, %v1111
      %v1199 = vpop.permute.xlu0 %1198
      %1202 = vset.pattern.permute.xlu0 0
      %1203 = vperm.xlu0 %1202, %v1112
      %v1204 = vpop.permute.xlu0 %1203
      %1207 = vset.pattern.permute.xlu0 0
      %1208 = vperm.xlu0 %1207, %v1113
      %v1209 = vpop.permute.xlu0 %1208
      %1212 = vset.pattern.permute.xlu0 0
      %1213 = vperm.xlu0 %1212, %v1114
      %v1214 = vpop.permute.xlu0 %1213
      %1217 = vset.pattern.permute.xlu0 0
      %1218 = vperm.xlu0 %1217, %v1115
      %v1219 = vpop.permute.xlu0 %1218
      %1222 = vset.pattern.permute.xlu0 0
      %1223 = vperm.xlu0 %1222, %v1116
      %v1224 = vpop.permute.xlu0 %1223
      %1227 = vset.pattern.permute.xlu0 0
      %1228 = vperm.xlu0 %1227, %v1117
      %v1229 = vpop.permute.xlu0 %1228
      %v1239 = vunpack.c.l.b16 %v1102
      %v1240 = vunpack.c.l.b16 %v1103
      %v1241 = vunpack.c.l.b16 %v1104
      %v1242 = vunpack.c.l.b16 %v1105
      %v1243 = vunpack.c.l.b16 %v1106
      %v1244 = vunpack.c.l.b16 %v1107
      %v1245 = vunpack.c.l.b16 %v1108
      %v1246 = vunpack.c.l.b16 %v1109
      %v1247 = vpack.c.b16 %v1240, %v1239
      %v1248 = vpack.c.b16 %v1242, %v1241
      %v1249 = vpack.c.b16 %v1244, %v1243
      %v1250 = vpack.c.b16 %v1246, %v1245
      %vm1251 = vcmask 130048
      %v1253 = vsel %vm1251, %v1247, 0
      %v1256 = vsel %vm1251, %v1248, 0
      %v1259 = vsel %vm1251, %v1249, 0
      %v1262 = vsel %vm1251, %v1250, 0
      %1264 = vmatprep.subr.bf16.mxu0 0
      %1265 = vmatpush1.bf16.msra.mxu0 %v1190
      %1266 = vmatprep.subr.bf16.mxu0 0
      %1267 = vmatpush1.bf16.msra.mxu0 0
      %1268 = vmatprep.subr.bf16.mxu0 0
      %1269 = vmatpush1.bf16.msra.mxu0 0
      %1270 = vmatprep.subr.bf16.mxu0 0
      %1271 = vmatpush1.bf16.msra.mxu0 0
      %1272 = vmatprep.subr.bf16.mxu0 0
      %1273 = vmatpush1.bf16.msra.mxu0 0
      %1274 = vmatprep.subr.bf16.mxu0 0
      %1275 = vmatpush1.bf16.msra.mxu0 0
      %1276 = vmatprep.subr.bf16.mxu0 0
      %1277 = vmatpush1.bf16.msra.mxu0 0
      %1278 = vmatprep.subr.bf16.mxu0 0
      %1279 = vmatpush1.bf16.msra.mxu0 0
      %1280 = vmatprep.subr.bf16.mxu0 0
      %1281 = vmatpush1.bf16.msra.mxu0 0
      %1282 = vmatprep.subr.bf16.mxu0 0
      %1283 = vmatpush1.bf16.msra.mxu0 0
      %1284 = vmatprep.subr.bf16.mxu0 0
      %1285 = vmatpush1.bf16.msra.mxu0 0
      %1286 = vmatprep.subr.bf16.mxu0 0
      %1287 = vmatpush1.bf16.msra.mxu0 0
      %1288 = vmatprep.subr.bf16.mxu0 0
      %1289 = vmatpush1.bf16.msra.mxu0 0
      %1290 = vmatprep.subr.bf16.mxu0 0
      %1291 = vmatpush1.bf16.msra.mxu0 0
      %1292 = vmatprep.subr.bf16.mxu0 0
      %1293 = vmatpush1.bf16.msra.mxu0 0
      %1294 = vmatprep.subr.bf16.mxu0 0
      %1295 = vmatpush1.bf16.msra.mxu0 0
      %1296 = vmatprep.mubr.bf16.mxu0 0
      %1297 = vmatmul.mubr.bf16.gmra.mrb[0].mxu0 %v1253
      %v1298 = vpop.f32.mrb[0].mxu0
      %v1299 = vadd.f32 %v1194, %v1298
      %v1300 = vpop.f32.mrb[0].mxu0
      %v1301 = vpop.f32.mrb[0].mxu0
      %v1302 = vadd.f32 %v1199, %v1301
      %v1303 = vpop.f32.mrb[0].mxu0
      %1304 = vmatprep.mubr.bf16.mxu0 0
      %1305 = vmatmul.mubr.bf16.gmra.mrb[0].mxu0 %v1256
      %v1306 = vpop.f32.mrb[0].mxu0
      %v1307 = vadd.f32 %v1204, %v1306
      %v1308 = vpop.f32.mrb[0].mxu0
      %v1309 = vpop.f32.mrb[0].mxu0
      %v1310 = vadd.f32 %v1209, %v1309
      %v1311 = vpop.f32.mrb[0].mxu0
      %1312 = vmatprep.mubr.bf16.mxu0 0
      %1313 = vmatmul.mubr.bf16.gmra.mrb[0].mxu0 %v1259
      %v1314 = vpop.f32.mrb[0].mxu0
      %v1315 = vadd.f32 %v1214, %v1314
      %v1316 = vpop.f32.mrb[0].mxu0
      %v1317 = vpop.f32.mrb[0].mxu0
      %v1318 = vadd.f32 %v1219, %v1317
      %v1319 = vpop.f32.mrb[0].mxu0
      %1320 = vmatprep.mubr.bf16.mxu0 0
      %1321 = vmatmul.mubr.bf16.gmra.mrb[0].mxu0 %v1262
      %v1322 = vpop.f32.mrb[0].mxu0
      %v1323 = vadd.f32 %v1224, %v1322
      %v1324 = vpop.f32.mrb[0].mxu0
      %v1325 = vpop.f32.mrb[0].mxu0
      %v1326 = vadd.f32 %v1229, %v1325
      %v1327 = vpop.f32.mrb[0].mxu0
      %1328 = vdwg.mxu0
      %v1329 = vmul.f32 %v1299, 0.5
      %v1330 = vmul.f32 %v1302, 0.5
      %v1331 = vmul.f32 %v1307, 0.5
      %v1332 = vmul.f32 %v1310, 0.5
      %v1333 = vmul.f32 %v1315, 0.5
      %v1334 = vmul.f32 %v1318, 0.5
      %v1335 = vmul.f32 %v1323, 0.5
      %v1336 = vmul.f32 %v1326, 0.5
      %v1337 = vmul.f32 %v1299, 0.70710677
      %v1338 = vmul.f32 %v1302, 0.70710677
      %v1339 = vmul.f32 %v1307, 0.70710677
      %v1340 = vmul.f32 %v1310, 0.70710677
      %v1341 = vmul.f32 %v1315, 0.70710677
      %v1342 = vmul.f32 %v1318, 0.70710677
      %v1343 = vmul.f32 %v1323, 0.70710677
      %v1344 = vmul.f32 %v1326, 0.70710677
      %v1345 = verf.f32.pop %v1337
      %v1346 = verf.f32.pop %v1338
      %v1347 = verf.f32.pop %v1339
      %v1348 = verf.f32.pop %v1340
      %v1349 = verf.f32.pop %v1341
      %v1350 = verf.f32.pop %v1342
      %v1351 = verf.f32.pop %v1343
      %v1352 = verf.f32.pop %v1344
      %v1353 = vadd.f32 %v1345, 1.0
      %v1354 = vadd.f32 %v1346, 1.0
      %v1355 = vadd.f32 %v1347, 1.0
      %v1356 = vadd.f32 %v1348, 1.0
      %v1357 = vadd.f32 %v1349, 1.0
      %v1358 = vadd.f32 %v1350, 1.0
      %v1359 = vadd.f32 %v1351, 1.0
      %v1360 = vadd.f32 %v1352, 1.0
      %v1361 = vmul.f32 %v1329, %v1353
      %v1362 = vmul.f32 %v1330, %v1354
      %v1363 = vmul.f32 %v1331, %v1355
      %v1364 = vmul.f32 %v1332, %v1356
      %v1365 = vmul.f32 %v1333, %v1357
      %v1366 = vmul.f32 %v1334, %v1358
      %v1367 = vmul.f32 %v1335, %v1359
      %v1368 = vmul.f32 %v1336, %v1360
      %v1369 = vpack.c.bf16 %v1362, %v1361
      %v1370 = vpack.c.bf16 %v1364, %v1363
      %v1371 = vpack.c.bf16 %v1366, %v1365
      %v1372 = vpack.c.bf16 %v1368, %v1367
      %v1375 = vunpack.c.l.b16 %v1118
      %v1376 = vunpack.c.l.b16 %v1119
      %v1377 = vpack.c.b16 %v1376, %v1375
      %vm1378 = vcmask 523264
      %v1380 = vsel %vm1378, %v1377, 0
      %1382 = vmatprep.subr.bf16.mxu0 0
      %1383 = vmatpush1.bf16.msra.mxu0 %v1369
      %1384 = vmatprep.subr.bf16.mxu0 0
      %1385 = vmatpush1.bf16.msra.mxu0 %v1370
      %1386 = vmatprep.subr.bf16.mxu0 0
      %1387 = vmatpush1.bf16.msra.mxu0 %v1371
      %1388 = vmatprep.subr.bf16.mxu0 0
      %1389 = vmatpush1.bf16.msra.mxu0 %v1372
      %1390 = vmatprep.subr.bf16.mxu0 0
      %1391 = vmatpush1.bf16.msra.mxu0 0
      %1392 = vmatprep.subr.bf16.mxu0 0
      %1393 = vmatpush1.bf16.msra.mxu0 0
      %1394 = vmatprep.subr.bf16.mxu0 0
      %1395 = vmatpush1.bf16.msra.mxu0 0
      %1396 = vmatprep.subr.bf16.mxu0 0
      %1397 = vmatpush1.bf16.msra.mxu0 0
      %1398 = vmatprep.subr.bf16.mxu0 0
      %1399 = vmatpush1.bf16.msra.mxu0 0
      %1400 = vmatprep.subr.bf16.mxu0 0
      %1401 = vmatpush1.bf16.msra.mxu0 0
      %1402 = vmatprep.subr.bf16.mxu0 0
      %1403 = vmatpush1.bf16.msra.mxu0 0
      %1404 = vmatprep.subr.bf16.mxu0 0
      %1405 = vmatpush1.bf16.msra.mxu0 0
      %1406 = vmatprep.subr.bf16.mxu0 0
      %1407 = vmatpush1.bf16.msra.mxu0 0
      %1408 = vmatprep.subr.bf16.mxu0 0
      %1409 = vmatpush1.bf16.msra.mxu0 0
      %1410 = vmatprep.subr.bf16.mxu0 0
      %1411 = vmatpush1.bf16.msra.mxu0 0
      %1412 = vmatprep.subr.bf16.mxu0 0
      %1413 = vmatpush1.bf16.msra.mxu0 0
      %1414 = vmatprep.mubr.bf16.mxu0 0
      %1415 = vmatmul.mubr.bf16.gmra.mrb[0].mxu0 %v1380
      %v1416 = vpop.f32.mrb[0].mxu0
      %v1417 = vadd.f32 0.0, %v1416
      %v1418 = vpop.f32.mrb[0].mxu0
      %v1419 = vpop.f32.mrb[0].mxu0
      %v1420 = vadd.f32 0.0, %v1419
      %v1421 = vpop.f32.mrb[0].mxu0
      %1422 = vdwg.mxu0
      %v1423 = vadd.f32 %v1098, %v1417
      %v1424 = vadd.f32 %v1099, %v1420
      %1426 = vset.pattern.permute.xlu0 0
      %1427 = vperm.xlu0 %1426, %v1120
      %v1428 = vpop.permute.xlu0 %1427
      %1431 = vset.pattern.permute.xlu0 0
      %1432 = vperm.xlu0 %1431, %v1121
      %v1433 = vpop.permute.xlu0 %1432
      %v1435 = vadd.f32 %v1423, %v1428
      %v1436 = vadd.f32 %v1424, %v1433
      %v1437 = vsel %vm1146, %v1435, 0.0
      %1438 = vadd.xlane.f32.xlu0 %v1437
      %v1439 = vpop.xlane.xlu0 %1438
      %v1440 = vsel %vm1146, %v1436, 0.0
      %1441 = vadd.xlane.f32.xlu0 %v1440
      %v1442 = vpop.xlane.xlu0 %1441
      %v1443 = vmul.f32 %v1439, %v1153
      %v1444 = vmul.f32 %v1442, %v1153
      %v1445 = vsub.f32 %v1435, %v1443
      %v1446 = vsub.f32 %v1436, %v1444
      %v1447 = vmul.f32 %v1445, %v1445
      %v1448 = vmul.f32 %v1446, %v1446
      %v1449 = vsel %vm1146, %v1447, 0.0
      %1450 = vadd.xlane.f32.xlu0 %v1449
      %v1451 = vpop.xlane.xlu0 %1450
      %v1452 = vsel %vm1146, %v1448, 0.0
      %1453 = vadd.xlane.f32.xlu0 %v1452
      %v1454 = vpop.xlane.xlu0 %1453
      %v1455 = vmul.f32 %v1451, %v1153
      %v1456 = vmul.f32 %v1454, %v1153
      %v1457 = vadd.f32 %v1455, 1e-05
      %v1458 = vadd.f32 %v1456, 1e-05
      %v1459 = vrsqrt.pop %v1457
      %v1460 = vrsqrt.pop %v1458
      %v1461 = vmul.f32 %v1445, %v1459
      %v1462 = vmul.f32 %v1446, %v1460
      %v1464 = vlaneseq
      %v1465 = vshrl.u32 %v1464, 7
      %v1466 = vsub.s32 0, %v1465
      %v1467 = vrot.slane %v1122, %v1466
      %v1469 = vmul.f32 %v1461, %v1467
      %v1470 = vmul.f32 %v1462, %v1467
      %v1472 = vlaneseq
      %v1473 = vshrl.u32 %v1472, 7
      %v1474 = vsub.s32 0, %v1473
      %v1475 = vrot.slane %v1123, %v1474
      %v1477 = vadd.f32 %v1469, %v1475
      %v1478 = vadd.f32 %v1470, %v1475
      %v1479 = vpack.c.bf16 %v1478, %v1477
      %v1481 = vlaneseq
      %v1482 = vshrl.u32 %v1481, 7
      %v1483 = vsub.s32 0, %v1482
      %v1484 = vrot.slane %v1128, %v1483
      %v1490 = vunpack.c.l.b16 %v1124
      %v1491 = vunpack.c.l.b16 %v1125
      %v1492 = vunpack.c.l.b16 %v1126
      %v1493 = vunpack.c.l.b16 %v1127
      %v1494 = vpack.c.b16 %v1491, %v1490
      %v1495 = vpack.c.b16 %v1493, %v1492
      %v1499 = vsel %vm1146, %v1479, 0
      %1501 = vmatprep.subr.bf16.mxu0 0
      %1502 = vmatpush1.bf16.msra.mxu0 %v1494
      %1503 = vmatprep.subr.bf16.mxu0 0
      %1504 = vmatpush1.bf16.msra.mxu0 %v1495
      %1505 = vmatprep.subr.bf16.mxu0 0
      %1506 = vmatpush1.bf16.msra.mxu0 0
      %1507 = vmatprep.subr.bf16.mxu0 0
      %1508 = vmatpush1.bf16.msra.mxu0 0
      %1509 = vmatprep.subr.bf16.mxu0 0
      %1510 = vmatpush1.bf16.msra.mxu0 0
      %1511 = vmatprep.subr.bf16.mxu0 0
      %1512 = vmatpush1.bf16.msra.mxu0 0
      %1513 = vmatprep.subr.bf16.mxu0 0
      %1514 = vmatpush1.bf16.msra.mxu0 0
      %1515 = vmatprep.subr.bf16.mxu0 0
      %1516 = vmatpush1.bf16.msra.mxu0 0
      %1517 = vmatprep.subr.bf16.mxu0 0
      %1518 = vmatpush1.bf16.msra.mxu0 0
      %1519 = vmatprep.subr.bf16.mxu0 0
      %1520 = vmatpush1.bf16.msra.mxu0 0
      %1521 = vmatprep.subr.bf16.mxu0 0
      %1522 = vmatpush1.bf16.msra.mxu0 0
      %1523 = vmatprep.subr.bf16.mxu0 0
      %1524 = vmatpush1.bf16.msra.mxu0 0
      %1525 = vmatprep.subr.bf16.mxu0 0
      %1526 = vmatpush1.bf16.msra.mxu0 0
      %1527 = vmatprep.subr.bf16.mxu0 0
      %1528 = vmatpush1.bf16.msra.mxu0 0
      %1529 = vmatprep.subr.bf16.mxu0 0
      %1530 = vmatpush1.bf16.msra.mxu0 0
      %1531 = vmatprep.subr.bf16.mxu0 0
      %1532 = vmatpush1.bf16.msra.mxu0 0
      %1533 = vmatprep.mubr.bf16.mxu0 0
      %1534 = vmatmul.mubr.bf16.gmra.mrb[0].mxu0 %v1499
      %v1535 = vpop.f32.mrb[0].mxu0
      %v1536 = vadd.f32 %v1484, %v1535
      %v1537 = vpop.f32.mrb[0].mxu0
      %v1538 = vpop.f32.mrb[0].mxu0
      %v1539 = vadd.f32 %v1484, %v1538
      %v1540 = vpop.f32.mrb[0].mxu0
      %1541 = vdwg.mxu0
      %v1542 = vmul.f32 %v1536, 0.5
      %v1543 = vmul.f32 %v1539, 0.5
      %v1544 = vmul.f32 %v1536, 0.70710677
      %v1545 = vmul.f32 %v1539, 0.70710677
      %v1546 = verf.f32.pop %v1544
      %v1547 = verf.f32.pop %v1545
      %v1548 = vadd.f32 %v1546, 1.0
      %v1549 = vadd.f32 %v1547, 1.0
      %v1550 = vmul.f32 %v1542, %v1548
      %v1551 = vmul.f32 %v1543, %v1549
      %v1552 = vpack.c.bf16 %v1551, %v1550
      %v1569 = vunpack.c.l.b16 %v1129
      %v1570 = vunpack.c.l.b16 %v1130
      %v1571 = vunpack.c.l.b16 %v1131
      %v1572 = vunpack.c.l.b16 %v1132
      %v1573 = vunpack.c.l.b16 %v1133
      %v1574 = vunpack.c.l.b16 %v1134
      %v1575 = vunpack.c.l.b16 %v1135
      %v1576 = vunpack.c.l.b16 %v1136
      %v1577 = vunpack.c.l.b16 %v1137
      %v1578 = vunpack.c.l.b16 %v1138
      %v1579 = vunpack.c.l.b16 %v1139
      %v1580 = vunpack.c.l.b16 %v1140
      %v1581 = vunpack.c.l.b16 %v1141
      %v1582 = vunpack.c.l.b16 %v1142
      %v1583 = vunpack.c.l.b16 %v1143
      %v1584 = vunpack.c.l.b16 %v1144
      %v1585 = vpack.c.b16 %v1570, %v1569
      %v1586 = vpack.c.b16 %v1572, %v1571
      %v1587 = vpack.c.b16 %v1574, %v1573
      %v1588 = vpack.c.b16 %v1576, %v1575
      %v1589 = vpack.c.b16 %v1578, %v1577
      %v1590 = vpack.c.b16 %v1580, %v1579
      %v1591 = vpack.c.b16 %v1582, %v1581
      %v1592 = vpack.c.b16 %v1584, %v1583
      %1601 = vmatprep.subr.bf16.mxu0 0
      %1602 = vmatpush1.bf16.msra.mxu0 %v1585
      %1603 = vmatprep.subr.bf16.mxu0 0
      %1604 = vmatpush1.bf16.msra.mxu0 %v1586
      %1605 = vmatprep.subr.bf16.mxu0 0
      %1606 = vmatpush1.bf16.msra.mxu0 %v1587
      %1607 = vmatprep.subr.bf16.mxu0 0
      %1608 = vmatpush1.bf16.msra.mxu0 %v1588
      %1609 = vmatprep.subr.bf16.mxu0 0
      %1610 = vmatpush1.bf16.msra.mxu0 %v1589
      %1611 = vmatprep.subr.bf16.mxu0 0
      %1612 = vmatpush1.bf16.msra.mxu0 %v1590
      %1613 = vmatprep.subr.bf16.mxu0 0
      %1614 = vmatpush1.bf16.msra.mxu0 %v1591
      %1615 = vmatprep.subr.bf16.mxu0 0
      %1616 = vmatpush1.bf16.msra.mxu0 %v1592
      %1617 = vmatprep.subr.bf16.mxu0 0
      %1618 = vmatpush1.bf16.msra.mxu0 0
      %1619 = vmatprep.subr.bf16.mxu0 0
      %1620 = vmatpush1.bf16.msra.mxu0 0
      %1621 = vmatprep.subr.bf16.mxu0 0
      %1622 = vmatpush1.bf16.msra.mxu0 0
      %1623 = vmatprep.subr.bf16.mxu0 0
      %1624 = vmatpush1.bf16.msra.mxu0 0
      %1625 = vmatprep.subr.bf16.mxu0 0
      %1626 = vmatpush1.bf16.msra.mxu0 0
      %1627 = vmatprep.subr.bf16.mxu0 0
      %1628 = vmatpush1.bf16.msra.mxu0 0
      %1629 = vmatprep.subr.bf16.mxu0 0
      %1630 = vmatpush1.bf16.msra.mxu0 0
      %1631 = vmatprep.subr.bf16.mxu0 0
      %1632 = vmatpush1.bf16.msra.mxu0 0
      %1633 = vmatprep.mubr.bf16.mxu0 0
      %1634 = vmatmul.mubr.bf16.gmra.mrb[0].mxu0 %v1552
      %v1635 = vpop.f32.mrb[0].mxu0
      %v1636 = vadd.f32 0.0, %v1635
      %v1637 = vpop.f32.mrb[0].mxu0
      %v1638 = vpop.f32.mrb[0].mxu0
      %v1639 = vadd.f32 0.0, %v1638
      %v1640 = vpop.f32.mrb[0].mxu0
      %1641 = vdwg.mxu0
      %v1642 = vadd.f32 %v1435, %v1636
      %v1643 = vadd.f32 %v1436, %v1639
      %v1645 = vlaneseq
      %v1646 = vshrl.u32 %v1645, 7
      %v1647 = vsub.s32 0, %v1646
      %v1648 = vrot.slane %v1145, %v1647
      %v1650 = vadd.f32 %v1642, %v1648
      %v1651 = vadd.f32 %v1643, %v1648
      %v1652 = vld [vmem:[%s31] sm:$0x1]
      %v1653 = vld [vmem:[%s33] sm:$0x1]
      %v1654 = vld [vmem:[%s35] sm:$0xf]
      %v1655 = vld [vmem:[%s35 + $0x4] sm:$0xf]
      %v1656 = vld [vmem:[%s35 + $0x8] sm:$0xf]
      %v1657 = vld [vmem:[%s35 + $0xc] sm:$0xf]
      %v1658 = vld [vmem:[%s35 + $0x10] sm:$0xf]
      %v1659 = vld [vmem:[%s35 + $0x14] sm:$0xf]
      %v1660 = vld [vmem:[%s35 + $0x18] sm:$0xf]
      %v1661 = vld [vmem:[%s35 + $0x1c] sm:$0xf]
      %v1662 = vld [vmem:[%s37] sm:$0xff]
      %v1663 = vld [vmem:[%s37 + $0x8] sm:$0xff]
      %v1664 = vld [vmem:[%s37 + $0x10] sm:$0xff]
      %v1665 = vld [vmem:[%s37 + $0x18] sm:$0xff]
      %v1666 = vld [vmem:[%s37 + $0x20] sm:$0xff]
      %v1667 = vld [vmem:[%s37 + $0x28] sm:$0xff]
      %v1668 = vld [vmem:[%s37 + $0x30] sm:$0xff]
      %v1669 = vld [vmem:[%s37 + $0x38] sm:$0xff]
      %v1670 = vld [vmem:[%s39] sm:$0xf]
      %v1671 = vld [vmem:[%s39 + $0x4] sm:$0xf]
      %v1672 = vld [vmem:[%s41] sm:$0xff]
      %v1673 = vld [vmem:[%s41 + $0x8] sm:$0xff]
      %v1674 = vld [vmem:[%s43] sm:$0x1]
      %v1675 = vld [vmem:[%s45] sm:$0x1]
      %v1676 = vld [vmem:[%s47] sm:$0xf]
      %v1677 = vld [vmem:[%s47 + $0x4] sm:$0xf]
      %v1678 = vld [vmem:[%s47 + $0x8] sm:$0xf]
      %v1679 = vld [vmem:[%s47 + $0xc] sm:$0xf]
      %v1680 = vld [vmem:[%s49] sm:$0x1]
      %v1681 = vld [vmem:[%s51] sm:$0xf]
      %v1682 = vld [vmem:[%s51 + $0x4] sm:$0xf]
      %v1683 = vld [vmem:[%s51 + $0x8] sm:$0xf]
      %v1684 = vld [vmem:[%s51 + $0xc] sm:$0xf]
      %v1685 = vld [vmem:[%s51 + $0x10] sm:$0xf]
      %v1686 = vld [vmem:[%s51 + $0x14] sm:$0xf]
      %v1687 = vld [vmem:[%s51 + $0x18] sm:$0xf]
      %v1688 = vld [vmem:[%s51 + $0x1c] sm:$0xf]
      %v1689 = vld [vmem:[%s51 + $0x20] sm:$0xf]
      %v1690 = vld [vmem:[%s51 + $0x24] sm:$0xf]
      %v1691 = vld [vmem:[%s51 + $0x28] sm:$0xf]
      %v1692 = vld [vmem:[%s51 + $0x2c] sm:$0xf]
      %v1693 = vld [vmem:[%s51 + $0x30] sm:$0xf]
      %v1694 = vld [vmem:[%s51 + $0x34] sm:$0xf]
      %v1695 = vld [vmem:[%s51 + $0x38] sm:$0xf]
      %v1696 = vld [vmem:[%s51 + $0x3c] sm:$0xf]
      %v1697 = vld [vmem:[%s53] sm:$0x1]
      %v1698 = vsel %vm1146, %v1650, 0.0
      %1699 = vadd.xlane.f32.xlu0 %v1698
      %v1700 = vpop.xlane.xlu0 %1699
      %v1701 = vsel %vm1146, %v1651, 0.0
      %1702 = vadd.xlane.f32.xlu0 %v1701
      %v1703 = vpop.xlane.xlu0 %1702
      %v1704 = vmul.f32 %v1700, %v1153
      %v1705 = vmul.f32 %v1703, %v1153
      %v1706 = vsub.f32 %v1650, %v1704
      %v1707 = vsub.f32 %v1651, %v1705
      %v1708 = vmul.f32 %v1706, %v1706
      %v1709 = vmul.f32 %v1707, %v1707
      %v1710 = vsel %vm1146, %v1708, 0.0
      %1711 = vadd.xlane.f32.xlu0 %v1710
      %v1712 = vpop.xlane.xlu0 %1711
      %v1713 = vsel %vm1146, %v1709, 0.0
      %1714 = vadd.xlane.f32.xlu0 %v1713
      %v1715 = vpop.xlane.xlu0 %1714
      %v1716 = vmul.f32 %v1712, %v1153
      %v1717 = vmul.f32 %v1715, %v1153
      %v1718 = vadd.f32 %v1716, 1e-05
      %v1719 = vadd.f32 %v1717, 1e-05
      %v1720 = vrsqrt.pop %v1718
      %v1721 = vrsqrt.pop %v1719
      %v1722 = vmul.f32 %v1706, %v1720
      %v1723 = vmul.f32 %v1707, %v1721
      %v1725 = vlaneseq
      %v1726 = vshrl.u32 %v1725, 7
      %v1727 = vsub.s32 0, %v1726
      %v1728 = vrot.slane %v1652, %v1727
      %v1730 = vmul.f32 %v1722, %v1728
      %v1731 = vmul.f32 %v1723, %v1728
      %v1733 = vlaneseq
      %v1734 = vshrl.u32 %v1733, 7
      %v1735 = vsub.s32 0, %v1734
      %v1736 = vrot.slane %v1653, %v1735
      %v1738 = vadd.f32 %v1730, %v1736
      %v1739 = vadd.f32 %v1731, %v1736
      %v1740 = vpack.c.bf16 %v1739, %v1738
      %1742 = vset.pattern.permute.xlu0 0
      %1743 = vperm.xlu0 %1742, %v1662
      %v1744 = vpop.permute.xlu0 %1743
      %1747 = vset.pattern.permute.xlu0 0
      %1748 = vperm.xlu0 %1747, %v1663
      %v1749 = vpop.permute.xlu0 %1748
      %1752 = vset.pattern.permute.xlu0 0
      %1753 = vperm.xlu0 %1752, %v1664
      %v1754 = vpop.permute.xlu0 %1753
      %1757 = vset.pattern.permute.xlu0 0
      %1758 = vperm.xlu0 %1757, %v1665
      %v1759 = vpop.permute.xlu0 %1758
      %1762 = vset.pattern.permute.xlu0 0
      %1763 = vperm.xlu0 %1762, %v1666
      %v1764 = vpop.permute.xlu0 %1763
      %1767 = vset.pattern.permute.xlu0 0
      %1768 = vperm.xlu0 %1767, %v1667
      %v1769 = vpop.permute.xlu0 %1768
      %1772 = vset.pattern.permute.xlu0 0
      %1773 = vperm.xlu0 %1772, %v1668
      %v1774 = vpop.permute.xlu0 %1773
      %1777 = vset.pattern.permute.xlu0 0
      %1778 = vperm.xlu0 %1777, %v1669
      %v1779 = vpop.permute.xlu0 %1778
      %v1789 = vunpack.c.l.b16 %v1654
      %v1790 = vunpack.c.l.b16 %v1655
      %v1791 = vunpack.c.l.b16 %v1656
      %v1792 = vunpack.c.l.b16 %v1657
      %v1793 = vunpack.c.l.b16 %v1658
      %v1794 = vunpack.c.l.b16 %v1659
      %v1795 = vunpack.c.l.b16 %v1660
      %v1796 = vunpack.c.l.b16 %v1661
      %v1797 = vpack.c.b16 %v1790, %v1789
      %v1798 = vpack.c.b16 %v1792, %v1791
      %v1799 = vpack.c.b16 %v1794, %v1793
      %v1800 = vpack.c.b16 %v1796, %v1795
      %v1802 = vsel %vm1251, %v1797, 0
      %v1805 = vsel %vm1251, %v1798, 0
      %v1808 = vsel %vm1251, %v1799, 0
      %v1811 = vsel %vm1251, %v1800, 0
      %1813 = vmatprep.subr.bf16.mxu0 0
      %1814 = vmatpush1.bf16.msra.mxu0 %v1740
      %1815 = vmatprep.subr.bf16.mxu0 0
      %1816 = vmatpush1.bf16.msra.mxu0 0
      %1817 = vmatprep.subr.bf16.mxu0 0
      %1818 = vmatpush1.bf16.msra.mxu0 0
      %1819 = vmatprep.subr.bf16.mxu0 0
      %1820 = vmatpush1.bf16.msra.mxu0 0
      %1821 = vmatprep.subr.bf16.mxu0 0
      %1822 = vmatpush1.bf16.msra.mxu0 0
      %1823 = vmatprep.subr.bf16.mxu0 0
      %1824 = vmatpush1.bf16.msra.mxu0 0
      %1825 = vmatprep.subr.bf16.mxu0 0
      %1826 = vmatpush1.bf16.msra.mxu0 0
      %1827 = vmatprep.subr.bf16.mxu0 0
      %1828 = vmatpush1.bf16.msra.mxu0 0
      %1829 = vmatprep.subr.bf16.mxu0 0
      %1830 = vmatpush1.bf16.msra.mxu0 0
      %1831 = vmatprep.subr.bf16.mxu0 0
      %1832 = vmatpush1.bf16.msra.mxu0 0
      %1833 = vmatprep.subr.bf16.mxu0 0
      %1834 = vmatpush1.bf16.msra.mxu0 0
      %1835 = vmatprep.subr.bf16.mxu0 0
      %1836 = vmatpush1.bf16.msra.mxu0 0
      %1837 = vmatprep.subr.bf16.mxu0 0
      %1838 = vmatpush1.bf16.msra.mxu0 0
      %1839 = vmatprep.subr.bf16.mxu0 0
      %1840 = vmatpush1.bf16.msra.mxu0 0
      %1841 = vmatprep.subr.bf16.mxu0 0
      %1842 = vmatpush1.bf16.msra.mxu0 0
      %1843 = vmatprep.subr.bf16.mxu0 0
      %1844 = vmatpush1.bf16.msra.mxu0 0
      %1845 = vmatprep.mubr.bf16.mxu0 0
      %1846 = vmatmul.mubr.bf16.gmra.mrb[0].mxu0 %v1802
      %v1847 = vpop.f32.mrb[0].mxu0
      %v1848 = vadd.f32 %v1744, %v1847
      %v1849 = vpop.f32.mrb[0].mxu0
      %v1850 = vpop.f32.mrb[0].mxu0
      %v1851 = vadd.f32 %v1749, %v1850
      %v1852 = vpop.f32.mrb[0].mxu0
      %1853 = vmatprep.mubr.bf16.mxu0 0
      %1854 = vmatmul.mubr.bf16.gmra.mrb[0].mxu0 %v1805
      %v1855 = vpop.f32.mrb[0].mxu0
      %v1856 = vadd.f32 %v1754, %v1855
      %v1857 = vpop.f32.mrb[0].mxu0
      %v1858 = vpop.f32.mrb[0].mxu0
      %v1859 = vadd.f32 %v1759, %v1858
      %v1860 = vpop.f32.mrb[0].mxu0
      %1861 = vmatprep.mubr.bf16.mxu0 0
      %1862 = vmatmul.mubr.bf16.gmra.mrb[0].mxu0 %v1808
      %v1863 = vpop.f32.mrb[0].mxu0
      %v1864 = vadd.f32 %v1764, %v1863
      %v1865 = vpop.f32.mrb[0].mxu0
      %v1866 = vpop.f32.mrb[0].mxu0
      %v1867 = vadd.f32 %v1769, %v1866
      %v1868 = vpop.f32.mrb[0].mxu0
      %1869 = vmatprep.mubr.bf16.mxu0 0
      %1870 = vmatmul.mubr.bf16.gmra.mrb[0].mxu0 %v1811
      %v1871 = vpop.f32.mrb[0].mxu0
      %v1872 = vadd.f32 %v1774, %v1871
      %v1873 = vpop.f32.mrb[0].mxu0
      %v1874 = vpop.f32.mrb[0].mxu0
      %v1875 = vadd.f32 %v1779, %v1874
      %v1876 = vpop.f32.mrb[0].mxu0
      %1877 = vdwg.mxu0
      %v1878 = vmul.f32 %v1848, 0.5
      %v1879 = vmul.f32 %v1851, 0.5
      %v1880 = vmul.f32 %v1856, 0.5
      %v1881 = vmul.f32 %v1859, 0.5
      %v1882 = vmul.f32 %v1864, 0.5
      %v1883 = vmul.f32 %v1867, 0.5
      %v1884 = vmul.f32 %v1872, 0.5
      %v1885 = vmul.f32 %v1875, 0.5
      %v1886 = vmul.f32 %v1848, 0.70710677
      %v1887 = vmul.f32 %v1851, 0.70710677
      %v1888 = vmul.f32 %v1856, 0.70710677
      %v1889 = vmul.f32 %v1859, 0.70710677
      %v1890 = vmul.f32 %v1864, 0.70710677
      %v1891 = vmul.f32 %v1867, 0.70710677
      %v1892 = vmul.f32 %v1872, 0.70710677
      %v1893 = vmul.f32 %v1875, 0.70710677
      %v1894 = verf.f32.pop %v1886
      %v1895 = verf.f32.pop %v1887
      %v1896 = verf.f32.pop %v1888
      %v1897 = verf.f32.pop %v1889
      %v1898 = verf.f32.pop %v1890
      %v1899 = verf.f32.pop %v1891
      %v1900 = verf.f32.pop %v1892
      %v1901 = verf.f32.pop %v1893
      %v1902 = vadd.f32 %v1894, 1.0
      %v1903 = vadd.f32 %v1895, 1.0
      %v1904 = vadd.f32 %v1896, 1.0
      %v1905 = vadd.f32 %v1897, 1.0
      %v1906 = vadd.f32 %v1898, 1.0
      %v1907 = vadd.f32 %v1899, 1.0
      %v1908 = vadd.f32 %v1900, 1.0
      %v1909 = vadd.f32 %v1901, 1.0
      %v1910 = vmul.f32 %v1878, %v1902
      %v1911 = vmul.f32 %v1879, %v1903
      %v1912 = vmul.f32 %v1880, %v1904
      %v1913 = vmul.f32 %v1881, %v1905
      %v1914 = vmul.f32 %v1882, %v1906
      %v1915 = vmul.f32 %v1883, %v1907
      %v1916 = vmul.f32 %v1884, %v1908
      %v1917 = vmul.f32 %v1885, %v1909
      %v1918 = vpack.c.bf16 %v1911, %v1910
      %v1919 = vpack.c.bf16 %v1913, %v1912
      %v1920 = vpack.c.bf16 %v1915, %v1914
      %v1921 = vpack.c.bf16 %v1917, %v1916
      %v1924 = vunpack.c.l.b16 %v1670
      %v1925 = vunpack.c.l.b16 %v1671
      %v1926 = vpack.c.b16 %v1925, %v1924
      %v1928 = vsel %vm1378, %v1926, 0
      %1930 = vmatprep.subr.bf16.mxu0 0
      %1931 = vmatpush1.bf16.msra.mxu0 %v1918
      %1932 = vmatprep.subr.bf16.mxu0 0
      %1933 = vmatpush1.bf16.msra.mxu0 %v1919
      %1934 = vmatprep.subr.bf16.mxu0 0
      %1935 = vmatpush1.bf16.msra.mxu0 %v1920
      %1936 = vmatprep.subr.bf16.mxu0 0
      %1937 = vmatpush1.bf16.msra.mxu0 %v1921
      %1938 = vmatprep.subr.bf16.mxu0 0
      %1939 = vmatpush1.bf16.msra.mxu0 0
      %1940 = vmatprep.subr.bf16.mxu0 0
      %1941 = vmatpush1.bf16.msra.mxu0 0
      %1942 = vmatprep.subr.bf16.mxu0 0
      %1943 = vmatpush1.bf16.msra.mxu0 0
      %1944 = vmatprep.subr.bf16.mxu0 0
      %1945 = vmatpush1.bf16.msra.mxu0 0
      %1946 = vmatprep.subr.bf16.mxu0 0
      %1947 = vmatpush1.bf16.msra.mxu0 0
      %1948 = vmatprep.subr.bf16.mxu0 0
      %1949 = vmatpush1.bf16.msra.mxu0 0
      %1950 = vmatprep.subr.bf16.mxu0 0
      %1951 = vmatpush1.bf16.msra.mxu0 0
      %1952 = vmatprep.subr.bf16.mxu0 0
      %1953 = vmatpush1.bf16.msra.mxu0 0
      %1954 = vmatprep.subr.bf16.mxu0 0
      %1955 = vmatpush1.bf16.msra.mxu0 0
      %1956 = vmatprep.subr.bf16.mxu0 0
      %1957 = vmatpush1.bf16.msra.mxu0 0
      %1958 = vmatprep.subr.bf16.mxu0 0
      %1959 = vmatpush1.bf16.msra.mxu0 0
      %1960 = vmatprep.subr.bf16.mxu0 0
      %1961 = vmatpush1.bf16.msra.mxu0 0
      %1962 = vmatprep.mubr.bf16.mxu0 0
      %1963 = vmatmul.mubr.bf16.gmra.mrb[0].mxu0 %v1928
      %v1964 = vpop.f32.mrb[0].mxu0
      %v1965 = vadd.f32 0.0, %v1964
      %v1966 = vpop.f32.mrb[0].mxu0
      %v1967 = vpop.f32.mrb[0].mxu0
      %v1968 = vadd.f32 0.0, %v1967
      %v1969 = vpop.f32.mrb[0].mxu0
      %1970 = vdwg.mxu0
      %v1971 = vadd.f32 %v1650, %v1965
      %v1972 = vadd.f32 %v1651, %v1968
      %1974 = vset.pattern.permute.xlu0 0
      %1975 = vperm.xlu0 %1974, %v1672
      %v1976 = vpop.permute.xlu0 %1975
      %1979 = vset.pattern.permute.xlu0 0
      %1980 = vperm.xlu0 %1979, %v1673
      %v1981 = vpop.permute.xlu0 %1980
      %v1983 = vadd.f32 %v1971, %v1976
      %v1984 = vadd.f32 %v1972, %v1981
      %v1985 = vsel %vm1146, %v1983, 0.0
      %1986 = vadd.xlane.f32.xlu0 %v1985
      %v1987 = vpop.xlane.xlu0 %1986
      %v1988 = vsel %vm1146, %v1984, 0.0
      %1989 = vadd.xlane.f32.xlu0 %v1988
      %v1990 = vpop.xlane.xlu0 %1989
      %v1991 = vmul.f32 %v1987, %v1153
      %v1992 = vmul.f32 %v1990, %v1153
      %v1993 = vsub.f32 %v1983, %v1991
      %v1994 = vsub.f32 %v1984, %v1992
      %v1995 = vmul.f32 %v1993, %v1993
      %v1996 = vmul.f32 %v1994, %v1994
      %v1997 = vsel %vm1146, %v1995, 0.0
      %1998 = vadd.xlane.f32.xlu0 %v1997
      %v1999 = vpop.xlane.xlu0 %1998
      %v2000 = vsel %vm1146, %v1996, 0.0
      %2001 = vadd.xlane.f32.xlu0 %v2000
      %v2002 = vpop.xlane.xlu0 %2001
      %v2003 = vmul.f32 %v1999, %v1153
      %v2004 = vmul.f32 %v2002, %v1153
      %v2005 = vadd.f32 %v2003, 1e-05
      %v2006 = vadd.f32 %v2004, 1e-05
      %v2007 = vrsqrt.pop %v2005
      %v2008 = vrsqrt.pop %v2006
      %v2009 = vmul.f32 %v1993, %v2007
      %v2010 = vmul.f32 %v1994, %v2008
      %v2012 = vlaneseq
      %v2013 = vshrl.u32 %v2012, 7
      %v2014 = vsub.s32 0, %v2013
      %v2015 = vrot.slane %v1674, %v2014
      %v2017 = vmul.f32 %v2009, %v2015
      %v2018 = vmul.f32 %v2010, %v2015
      %v2020 = vlaneseq
      %v2021 = vshrl.u32 %v2020, 7
      %v2022 = vsub.s32 0, %v2021
      %v2023 = vrot.slane %v1675, %v2022
      %v2025 = vadd.f32 %v2017, %v2023
      %v2026 = vadd.f32 %v2018, %v2023
      %v2027 = vpack.c.bf16 %v2026, %v2025
      %v2029 = vlaneseq
      %v2030 = vshrl.u32 %v2029, 7
      %v2031 = vsub.s32 0, %v2030
      %v2032 = vrot.slane %v1680, %v2031
      %v2038 = vunpack.c.l.b16 %v1676
      %v2039 = vunpack.c.l.b16 %v1677
      %v2040 = vunpack.c.l.b16 %v1678
      %v2041 = vunpack.c.l.b16 %v1679
      %v2042 = vpack.c.b16 %v2039, %v2038
      %v2043 = vpack.c.b16 %v2041, %v2040
      %v2047 = vsel %vm1146, %v2027, 0
      %2049 = vmatprep.subr.bf16.mxu0 0
      %2050 = vmatpush1.bf16.msra.mxu0 %v2042
      %2051 = vmatprep.subr.bf16.mxu0 0
      %2052 = vmatpush1.bf16.msra.mxu0 %v2043
      %2053 = vmatprep.subr.bf16.mxu0 0
      %2054 = vmatpush1.bf16.msra.mxu0 0
      %2055 = vmatprep.subr.bf16.mxu0 0
      %2056 = vmatpush1.bf16.msra.mxu0 0
      %2057 = vmatprep.subr.bf16.mxu0 0
      %2058 = vmatpush1.bf16.msra.mxu0 0
      %2059 = vmatprep.subr.bf16.mxu0 0
      %2060 = vmatpush1.bf16.msra.mxu0 0
      %2061 = vmatprep.subr.bf16.mxu0 0
      %2062 = vmatpush1.bf16.msra.mxu0 0
      %2063 = vmatprep.subr.bf16.mxu0 0
      %2064 = vmatpush1.bf16.msra.mxu0 0
      %2065 = vmatprep.subr.bf16.mxu0 0
      %2066 = vmatpush1.bf16.msra.mxu0 0
      %2067 = vmatprep.subr.bf16.mxu0 0
      %2068 = vmatpush1.bf16.msra.mxu0 0
      %2069 = vmatprep.subr.bf16.mxu0 0
      %2070 = vmatpush1.bf16.msra.mxu0 0
      %2071 = vmatprep.subr.bf16.mxu0 0
      %2072 = vmatpush1.bf16.msra.mxu0 0
      %2073 = vmatprep.subr.bf16.mxu0 0
      %2074 = vmatpush1.bf16.msra.mxu0 0
      %2075 = vmatprep.subr.bf16.mxu0 0
      %2076 = vmatpush1.bf16.msra.mxu0 0
      %2077 = vmatprep.subr.bf16.mxu0 0
      %2078 = vmatpush1.bf16.msra.mxu0 0
      %2079 = vmatprep.subr.bf16.mxu0 0
      %2080 = vmatpush1.bf16.msra.mxu0 0
      %2081 = vmatprep.mubr.bf16.mxu0 0
      %2082 = vmatmul.mubr.bf16.gmra.mrb[0].mxu0 %v2047
      %v2083 = vpop.f32.mrb[0].mxu0
      %v2084 = vadd.f32 %v2032, %v2083
      %v2085 = vpop.f32.mrb[0].mxu0
      %v2086 = vpop.f32.mrb[0].mxu0
      %v2087 = vadd.f32 %v2032, %v2086
      %v2088 = vpop.f32.mrb[0].mxu0
      %2089 = vdwg.mxu0
      %v2090 = vmul.f32 %v2084, 0.5
      %v2091 = vmul.f32 %v2087, 0.5
      %v2092 = vmul.f32 %v2084, 0.70710677
      %v2093 = vmul.f32 %v2087, 0.70710677
      %v2094 = verf.f32.pop %v2092
      %v2095 = verf.f32.pop %v2093
      %v2096 = vadd.f32 %v2094, 1.0
      %v2097 = vadd.f32 %v2095, 1.0
      %v2098 = vmul.f32 %v2090, %v2096
      %v2099 = vmul.f32 %v2091, %v2097
      %v2100 = vpack.c.bf16 %v2099, %v2098
      %v2117 = vunpack.c.l.b16 %v1681
      %v2118 = vunpack.c.l.b16 %v1682
      %v2119 = vunpack.c.l.b16 %v1683
      %v2120 = vunpack.c.l.b16 %v1684
      %v2121 = vunpack.c.l.b16 %v1685
      %v2122 = vunpack.c.l.b16 %v1686
      %v2123 = vunpack.c.l.b16 %v1687
      %v2124 = vunpack.c.l.b16 %v1688
      %v2125 = vunpack.c.l.b16 %v1689
      %v2126 = vunpack.c.l.b16 %v1690
      %v2127 = vunpack.c.l.b16 %v1691
      %v2128 = vunpack.c.l.b16 %v1692
      %v2129 = vunpack.c.l.b16 %v1693
      %v2130 = vunpack.c.l.b16 %v1694
      %v2131 = vunpack.c.l.b16 %v1695
      %v2132 = vunpack.c.l.b16 %v1696
      %v2133 = vpack.c.b16 %v2118, %v2117
      %v2134 = vpack.c.b16 %v2120, %v2119
      %v2135 = vpack.c.b16 %v2122, %v2121
      %v2136 = vpack.c.b16 %v2124, %v2123
      %v2137 = vpack.c.b16 %v2126, %v2125
      %v2138 = vpack.c.b16 %v2128, %v2127
      %v2139 = vpack.c.b16 %v2130, %v2129
      %v2140 = vpack.c.b16 %v2132, %v2131
      %2149 = vmatprep.subr.bf16.mxu0 0
      %2150 = vmatpush1.bf16.msra.mxu0 %v2133
      %2151 = vmatprep.subr.bf16.mxu0 0
      %2152 = vmatpush1.bf16.msra.mxu0 %v2134
      %2153 = vmatprep.subr.bf16.mxu0 0
      %2154 = vmatpush1.bf16.msra.mxu0 %v2135
      %2155 = vmatprep.subr.bf16.mxu0 0
      %2156 = vmatpush1.bf16.msra.mxu0 %v2136
      %2157 = vmatprep.subr.bf16.mxu0 0
      %2158 = vmatpush1.bf16.msra.mxu0 %v2137
      %2159 = vmatprep.subr.bf16.mxu0 0
      %2160 = vmatpush1.bf16.msra.mxu0 %v2138
      %2161 = vmatprep.subr.bf16.mxu0 0
      %2162 = vmatpush1.bf16.msra.mxu0 %v2139
      %2163 = vmatprep.subr.bf16.mxu0 0
      %2164 = vmatpush1.bf16.msra.mxu0 %v2140
      %2165 = vmatprep.subr.bf16.mxu0 0
      %2166 = vmatpush1.bf16.msra.mxu0 0
      %2167 = vmatprep.subr.bf16.mxu0 0
      %2168 = vmatpush1.bf16.msra.mxu0 0
      %2169 = vmatprep.subr.bf16.mxu0 0
      %2170 = vmatpush1.bf16.msra.mxu0 0
      %2171 = vmatprep.subr.bf16.mxu0 0
      %2172 = vmatpush1.bf16.msra.mxu0 0
      %2173 = vmatprep.subr.bf16.mxu0 0
      %2174 = vmatpush1.bf16.msra.mxu0 0
      %2175 = vmatprep.subr.bf16.mxu0 0
      %2176 = vmatpush1.bf16.msra.mxu0 0
      %2177 = vmatprep.subr.bf16.mxu0 0
      %2178 = vmatpush1.bf16.msra.mxu0 0
      %2179 = vmatprep.subr.bf16.mxu0 0
      %2180 = vmatpush1.bf16.msra.mxu0 0
      %2181 = vmatprep.mubr.bf16.mxu0 0
      %2182 = vmatmul.mubr.bf16.gmra.mrb[0].mxu0 %v2100
      %v2183 = vpop.f32.mrb[0].mxu0
      %v2184 = vadd.f32 0.0, %v2183
      %v2185 = vpop.f32.mrb[0].mxu0
      %v2186 = vpop.f32.mrb[0].mxu0
      %v2187 = vadd.f32 0.0, %v2186
      %v2188 = vpop.f32.mrb[0].mxu0
      %2189 = vdwg.mxu0
      %v2190 = vadd.f32 %v1983, %v2184
      %v2191 = vadd.f32 %v1984, %v2187
      %v2193 = vlaneseq
      %v2194 = vshrl.u32 %v2193, 7
      %v2195 = vsub.s32 0, %v2194
      %v2196 = vrot.slane %v1697, %v2195
      %v2198 = vadd.f32 %v2190, %v2196
      %v2199 = vadd.f32 %v2191, %v2196
      %v2200 = vld [vmem:[%s55] sm:$0xff]
      %v2201 = vld [vmem:[%s55 + $0x8] sm:$0xff]
      %v2202 = vld [vmem:[%s55 + $0x10] sm:$0xff]
      %v2203 = vld [vmem:[%s55 + $0x18] sm:$0xff]
      %v2204 = vld [vmem:[%s55 + $0x20] sm:$0xff]
      %v2205 = vld [vmem:[%s55 + $0x28] sm:$0xff]
      %v2206 = vld [vmem:[%s55 + $0x30] sm:$0xff]
      %v2207 = vld [vmem:[%s55 + $0x38] sm:$0xff]
      %v2208 = vld [vmem:[%s55 + $0x40] sm:$0xff]
      %v2209 = vld [vmem:[%s55 + $0x48] sm:$0xff]
      %v2210 = vld [vmem:[%s55 + $0x50] sm:$0xff]
      %v2211 = vld [vmem:[%s55 + $0x58] sm:$0xff]
      %v2212 = vld [vmem:[%s55 + $0x60] sm:$0xff]
      %v2213 = vld [vmem:[%s55 + $0x68] sm:$0xff]
      %v2214 = vld [vmem:[%s55 + $0x70] sm:$0xff]
      %v2215 = vld [vmem:[%s55 + $0x78] sm:$0xff]
      %v2216 = vld [vmem:[%s55 + $0x80] sm:$0xff]
      %v2217 = vld [vmem:[%s55 + $0x88] sm:$0xff]
      %v2218 = vld [vmem:[%s55 + $0x90] sm:$0xff]
      %v2219 = vld [vmem:[%s55 + $0x98] sm:$0xff]
      %v2220 = vld [vmem:[%s55 + $0xa0] sm:$0xff]
      %v2221 = vld [vmem:[%s55 + $0xa8] sm:$0xff]
      %v2222 = vld [vmem:[%s55 + $0xb0] sm:$0xff]
      %v2223 = vld [vmem:[%s55 + $0xb8] sm:$0xff]
      %v2224 = vld [vmem:[%s55 + $0xc0] sm:$0xff]
      %v2225 = vld [vmem:[%s55 + $0xc8] sm:$0xff]
      %v2226 = vld [vmem:[%s55 + $0xd0] sm:$0xff]
      %v2227 = vld [vmem:[%s55 + $0xd8] sm:$0xff]
      %v2228 = vld [vmem:[%s55 + $0xe0] sm:$0xff]
      %v2229 = vld [vmem:[%s55 + $0xe8] sm:$0xff]
      %v2230 = vld [vmem:[%s55 + $0xf0] sm:$0xff]
      %v2231 = vld [vmem:[%s55 + $0xf8] sm:$0xff]
      %v2232 = vld [vmem:[%s57] sm:$0x3]
      %v2233 = vld [vmem:[%s59] sm:$0xff]
      %v2234 = vld [vmem:[%s59 + $0x8] sm:$0xff]
      %v2235 = vld [vmem:[%s59 + $0x10] sm:$0xff]
      %v2236 = vld [vmem:[%s59 + $0x18] sm:$0xff]
      %v2237 = vld [vmem:[%s59 + $0x20] sm:$0xff]
      %v2238 = vld [vmem:[%s59 + $0x28] sm:$0xff]
      %v2239 = vld [vmem:[%s59 + $0x30] sm:$0xff]
      %v2240 = vld [vmem:[%s59 + $0x38] sm:$0xff]
      %v2241 = vld [vmem:[%s59 + $0x40] sm:$0xff]
      %v2242 = vld [vmem:[%s59 + $0x48] sm:$0xff]
      %v2243 = vld [vmem:[%s59 + $0x50] sm:$0xff]
      %v2244 = vld [vmem:[%s59 + $0x58] sm:$0xff]
      %v2245 = vld [vmem:[%s59 + $0x60] sm:$0xff]
      %v2246 = vld [vmem:[%s59 + $0x68] sm:$0xff]
      %v2247 = vld [vmem:[%s59 + $0x70] sm:$0xff]
      %v2248 = vld [vmem:[%s59 + $0x78] sm:$0xff]
      %v2249 = vld [vmem:[%s59 + $0x80] sm:$0xff]
      %v2250 = vld [vmem:[%s59 + $0x88] sm:$0xff]
      %v2251 = vld [vmem:[%s59 + $0x90] sm:$0xff]
      %v2252 = vld [vmem:[%s59 + $0x98] sm:$0xff]
      %v2253 = vld [vmem:[%s59 + $0xa0] sm:$0xff]
      %v2254 = vld [vmem:[%s59 + $0xa8] sm:$0xff]
      %v2255 = vld [vmem:[%s59 + $0xb0] sm:$0xff]
      %v2256 = vld [vmem:[%s59 + $0xb8] sm:$0xff]
      %v2257 = vld [vmem:[%s59 + $0xc0] sm:$0xff]
      %v2258 = vld [vmem:[%s59 + $0xc8] sm:$0xff]
      %v2259 = vld [vmem:[%s59 + $0xd0] sm:$0xff]
      %v2260 = vld [vmem:[%s59 + $0xd8] sm:$0xff]
      %v2261 = vld [vmem:[%s59 + $0xe0] sm:$0xff]
      %v2262 = vld [vmem:[%s59 + $0xe8] sm:$0xff]
      %v2263 = vld [vmem:[%s59 + $0xf0] sm:$0xff]
      %v2264 = vld [vmem:[%s59 + $0xf8] sm:$0xff]
      %v2265 = vld [vmem:[%s61] sm:$0x3]
      %v2266 = vpack.c.bf16 %v2199, %v2198
      %v2299 = vunpack.c.l.b16 %v2200
      %v2300 = vunpack.c.h.b16 %v2200
      %v2301 = vunpack.c.l.b16 %v2201
      %v2302 = vunpack.c.h.b16 %v2201
      %v2303 = vunpack.c.l.b16 %v2202
      %v2304 = vunpack.c.h.b16 %v2202
      %v2305 = vunpack.c.l.b16 %v2203
      %v2306 = vunpack.c.h.b16 %v2203
      %v2307 = vunpack.c.l.b16 %v2204
      %v2308 = vunpack.c.h.b16 %v2204
      %v2309 = vunpack.c.l.b16 %v2205
      %v2310 = vunpack.c.h.b16 %v2205
      %v2311 = vunpack.c.l.b16 %v2206
      %v2312 = vunpack.c.h.b16 %v2206
      %v2313 = vunpack.c.l.b16 %v2207
      %v2314 = vunpack.c.h.b16 %v2207
      %v2315 = vunpack.c.l.b16 %v2208
      %v2316 = vunpack.c.h.b16 %v2208
      %v2317 = vunpack.c.l.b16 %v2209
      %v2318 = vunpack.c.h.b16 %v2209
      %v2319 = vunpack.c.l.b16 %v2210
      %v2320 = vunpack.c.h.b16 %v2210
      %v2321 = vunpack.c.l.b16 %v2211
      %v2322 = vunpack.c.h.b16 %v2211
      %v2323 = vunpack.c.l.b16 %v2212
      %v2324 = vunpack.c.h.b16 %v2212
      %v2325 = vunpack.c.l.b16 %v2213
      %v2326 = vunpack.c.h.b16 %v2213
      %v2327 = vunpack.c.l.b16 %v2214
      %v2328 = vunpack.c.h.b16 %v2214
      %v2329 = vunpack.c.l.b16 %v2215
      %v2330 = vunpack.c.h.b16 %v2215
      %v2331 = vunpack.c.l.b16 %v2216
      %v2332 = vunpack.c.h.b16 %v2216
      %v2333 = vunpack.c.l.b16 %v2217
      %v2334 = vunpack.c.h.b16 %v2217
      %v2335 = vunpack.c.l.b16 %v2218
      %v2336 = vunpack.c.h.b16 %v2218
      %v2337 = vunpack.c.l.b16 %v2219
      %v2338 = vunpack.c.h.b16 %v2219
      %v2339 = vunpack.c.l.b16 %v2220
      %v2340 = vunpack.c.h.b16 %v2220
      %v2341 = vunpack.c.l.b16 %v2221
      %v2342 = vunpack.c.h.b16 %v2221
      %v2343 = vunpack.c.l.b16 %v2222
      %v2344 = vunpack.c.h.b16 %v2222
      %v2345 = vunpack.c.l.b16 %v2223
      %v2346 = vunpack.c.h.b16 %v2223
      %v2347 = vunpack.c.l.b16 %v2224
      %v2348 = vunpack.c.h.b16 %v2224
      %v2349 = vunpack.c.l.b16 %v2225
      %v2350 = vunpack.c.h.b16 %v2225
      %v2351 = vunpack.c.l.b16 %v2226
      %v2352 = vunpack.c.h.b16 %v2226
      %v2353 = vunpack.c.l.b16 %v2227
      %v2354 = vunpack.c.h.b16 %v2227
      %v2355 = vunpack.c.l.b16 %v2228
      %v2356 = vunpack.c.h.b16 %v2228
      %v2357 = vunpack.c.l.b16 %v2229
      %v2358 = vunpack.c.h.b16 %v2229
      %v2359 = vunpack.c.l.b16 %v2230
      %v2360 = vunpack.c.h.b16 %v2230
      %v2361 = vunpack.c.l.b16 %v2231
      %v2362 = vunpack.c.h.b16 %v2231
      %v2363 = vpack.c.b16 %v2315, %v2299
      %v2364 = vpack.c.b16 %v2316, %v2300
      %v2365 = vpack.c.b16 %v2317, %v2301
      %v2366 = vpack.c.b16 %v2318, %v2302
      %v2367 = vpack.c.b16 %v2319, %v2303
      %v2368 = vpack.c.b16 %v2320, %v2304
      %v2369 = vpack.c.b16 %v2321, %v2305
      %v2370 = vpack.c.b16 %v2322, %v2306
      %v2371 = vpack.c.b16 %v2323, %v2307
      %v2372 = vpack.c.b16 %v2324, %v2308
      %v2373 = vpack.c.b16 %v2325, %v2309
      %v2374 = vpack.c.b16 %v2326, %v2310
      %v2375 = vpack.c.b16 %v2327, %v2311
      %v2376 = vpack.c.b16 %v2328, %v2312
      %v2377 = vpack.c.b16 %v2329, %v2313
      %v2378 = vpack.c.b16 %v2330, %v2314
      %v2379 = vpack.c.b16 %v2347, %v2331
      %v2380 = vpack.c.b16 %v2348, %v2332
      %v2381 = vpack.c.b16 %v2349, %v2333
      %v2382 = vpack.c.b16 %v2350, %v2334
      %v2383 = vpack.c.b16 %v2351, %v2335
      %v2384 = vpack.c.b16 %v2352, %v2336
      %v2385 = vpack.c.b16 %v2353, %v2337
      %v2386 = vpack.c.b16 %v2354, %v2338
      %v2387 = vpack.c.b16 %v2355, %v2339
      %v2388 = vpack.c.b16 %v2356, %v2340
      %v2389 = vpack.c.b16 %v2357, %v2341
      %v2390 = vpack.c.b16 %v2358, %v2342
      %v2391 = vpack.c.b16 %v2359, %v2343
      %v2392 = vpack.c.b16 %v2360, %v2344
      %v2393 = vpack.c.b16 %v2361, %v2345
      %v2394 = vpack.c.b16 %v2362, %v2346
      %v2428 = vsel %vm1146, %v2266, 0
      %2430 = vmatprep.subr.bf16.mxu0 %v2364
      %2431 = vmatpush1.bf16.msra.mxu0 %v2363
      %2432 = vmatprep.subr.bf16.mxu0 %v2380
      %2433 = vmatpush1.bf16.msra.mxu0 %v2379
      %2434 = vmatprep.subr.bf16.mxu0 0
      %2435 = vmatpush1.bf16.msra.mxu0 0
      %2436 = vmatprep.subr.bf16.mxu0 0
      %2437 = vmatpush1.bf16.msra.mxu0 0
      %2438 = vmatprep.subr.bf16.mxu0 0
      %2439 = vmatpush1.bf16.msra.mxu0 0
      %2440 = vmatprep.subr.bf16.mxu0 0
      %2441 = vmatpush1.bf16.msra.mxu0 0
      %2442 = vmatprep.subr.bf16.mxu0 0
      %2443 = vmatpush1.bf16.msra.mxu0 0
      %2444 = vmatprep.subr.bf16.mxu0 0
      %2445 = vmatpush1.bf16.msra.mxu0 0
      %2446 = vmatprep.subr.bf16.mxu0 0
      %2447 = vmatpush1.bf16.msra.mxu0 0
      %2448 = vmatprep.subr.bf16.mxu0 0
      %2449 = vmatpush1.bf16.msra.mxu0 0
      %2450 = vmatprep.subr.bf16.mxu0 0
      %2451 = vmatpush1.bf16.msra.mxu0 0
      %2452 = vmatprep.subr.bf16.mxu0 0
      %2453 = vmatpush1.bf16.msra.mxu0 0
      %2454 = vmatprep.subr.bf16.mxu0 0
      %2455 = vmatpush1.bf16.msra.mxu0 0
      %2456 = vmatprep.subr.bf16.mxu0 0
      %2457 = vmatpush1.bf16.msra.mxu0 0
      %2458 = vmatprep.subr.bf16.mxu0 0
      %2459 = vmatpush1.bf16.msra.mxu0 0
      %2460 = vmatprep.subr.bf16.mxu0 0
      %2461 = vmatpush1.bf16.msra.mxu0 0
      %2462 = vmatprep.mubr.bf16.mxu0 0
      %2463 = vmatmul.mubr.bf16.gmra.mrb[0].mxu0 %v2428
      %v2464 = vpop.f32.mrb[0].mxu0
      %v2465 = vadd.f32 0.0, %v2464
      %v2466 = vpop.f32.mrb[0].mxu0
      %v2467 = vadd.f32 0.0, %v2466
      %v2468 = vpop.f32.mrb[0].mxu0
      %v2469 = vpop.f32.mrb[0].mxu0
      %2470 = vdwg.mxu0
      %2471 = vmatprep.subr.bf16.mxu0 %v2366
      %2472 = vmatpush1.bf16.msra.mxu0 %v2365
      %2473 = vmatprep.subr.bf16.mxu0 %v2382
      %2474 = vmatpush1.bf16.msra.mxu0 %v2381
      %2475 = vmatprep.subr.bf16.mxu0 0
      %2476 = vmatpush1.bf16.msra.mxu0 0
      %2477 = vmatprep.subr.bf16.mxu0 0
      %2478 = vmatpush1.bf16.msra.mxu0 0
      %2479 = vmatprep.subr.bf16.mxu0 0
      %2480 = vmatpush1.bf16.msra.mxu0 0
      %2481 = vmatprep.subr.bf16.mxu0 0
      %2482 = vmatpush1.bf16.msra.mxu0 0
      %2483 = vmatprep.subr.bf16.mxu0 0
      %2484 = vmatpush1.bf16.msra.mxu0 0
      %2485 = vmatprep.subr.bf16.mxu0 0
      %2486 = vmatpush1.bf16.msra.mxu0 0
      %2487 = vmatprep.subr.bf16.mxu0 0
      %2488 = vmatpush1.bf16.msra.mxu0 0
      %2489 = vmatprep.subr.bf16.mxu0 0
      %2490 = vmatpush1.bf16.msra.mxu0 0
      %2491 = vmatprep.subr.bf16.mxu0 0
      %2492 = vmatpush1.bf16.msra.mxu0 0
      %2493 = vmatprep.subr.bf16.mxu0 0
      %2494 = vmatpush1.bf16.msra.mxu0 0
      %2495 = vmatprep.subr.bf16.mxu0 0
      %2496 = vmatpush1.bf16.msra.mxu0 0
      %2497 = vmatprep.subr.bf16.mxu0 0
      %2498 = vmatpush1.bf16.msra.mxu0 0
      %2499 = vmatprep.subr.bf16.mxu0 0
      %2500 = vmatpush1.bf16.msra.mxu0 0
      %2501 = vmatprep.subr.bf16.mxu0 0
      %2502 = vmatpush1.bf16.msra.mxu0 0
      %2503 = vmatprep.mubr.bf16.mxu0 0
      %2504 = vmatmul.mubr.bf16.gmra.mrb[0].mxu0 %v2428
      %v2505 = vpop.f32.mrb[0].mxu0
      %v2506 = vadd.f32 0.0, %v2505
      %v2507 = vpop.f32.mrb[0].mxu0
      %v2508 = vadd.f32 0.0, %v2507
      %v2509 = vpop.f32.mrb[0].mxu0
      %v2510 = vpop.f32.mrb[0].mxu0
      %2511 = vdwg.mxu0
      %2512 = vmatprep.subr.bf16.mxu0 %v2368
      %2513 = vmatpush1.bf16.msra.mxu0 %v2367
      %2514 = vmatprep.subr.bf16.mxu0 %v2384
      %2515 = vmatpush1.bf16.msra.mxu0 %v2383
      %2516 = vmatprep.subr.bf16.mxu0 0
      %2517 = vmatpush1.bf16.msra.mxu0 0
      %2518 = vmatprep.subr.bf16.mxu0 0
      %2519 = vmatpush1.bf16.msra.mxu0 0
      %2520 = vmatprep.subr.bf16.mxu0 0
      %2521 = vmatpush1.bf16.msra.mxu0 0
      %2522 = vmatprep.subr.bf16.mxu0 0
      %2523 = vmatpush1.bf16.msra.mxu0 0
      %2524 = vmatprep.subr.bf16.mxu0 0
      %2525 = vmatpush1.bf16.msra.mxu0 0
      %2526 = vmatprep.subr.bf16.mxu0 0
      %2527 = vmatpush1.bf16.msra.mxu0 0
      %2528 = vmatprep.subr.bf16.mxu0 0
      %2529 = vmatpush1.bf16.msra.mxu0 0
      %2530 = vmatprep.subr.bf16.mxu0 0
      %2531 = vmatpush1.bf16.msra.mxu0 0
      %2532 = vmatprep.subr.bf16.mxu0 0
      %2533 = vmatpush1.bf16.msra.mxu0 0
      %2534 = vmatprep.subr.bf16.mxu0 0
      %2535 = vmatpush1.bf16.msra.mxu0 0
      %2536 = vmatprep.subr.bf16.mxu0 0
      %2537 = vmatpush1.bf16.msra.mxu0 0
      %2538 = vmatprep.subr.bf16.mxu0 0
      %2539 = vmatpush1.bf16.msra.mxu0 0
      %2540 = vmatprep.subr.bf16.mxu0 0
      %2541 = vmatpush1.bf16.msra.mxu0 0
      %2542 = vmatprep.subr.bf16.mxu0 0
      %2543 = vmatpush1.bf16.msra.mxu0 0
      %2544 = vmatprep.mubr.bf16.mxu0 0
      %2545 = vmatmul.mubr.bf16.gmra.mrb[0].mxu0 %v2428
      %v2546 = vpop.f32.mrb[0].mxu0
      %v2547 = vadd.f32 0.0, %v2546
      %v2548 = vpop.f32.mrb[0].mxu0
      %v2549 = vadd.f32 0.0, %v2548
      %v2550 = vpop.f32.mrb[0].mxu0
      %v2551 = vpop.f32.mrb[0].mxu0
      %2552 = vdwg.mxu0
      %2553 = vmatprep.subr.bf16.mxu0 %v2370
      %2554 = vmatpush1.bf16.msra.mxu0 %v2369
      %2555 = vmatprep.subr.bf16.mxu0 %v2386
      %2556 = vmatpush1.bf16.msra.mxu0 %v2385
      %2557 = vmatprep.subr.bf16.mxu0 0
      %2558 = vmatpush1.bf16.msra.mxu0 0
      %2559 = vmatprep.subr.bf16.mxu0 0
      %2560 = vmatpush1.bf16.msra.mxu0 0
      %2561 = vmatprep.subr.bf16.mxu0 0
      %2562 = vmatpush1.bf16.msra.mxu0 0
      %2563 = vmatprep.subr.bf16.mxu0 0
      %2564 = vmatpush1.bf16.msra.mxu0 0
      %2565 = vmatprep.subr.bf16.mxu0 0
      %2566 = vmatpush1.bf16.msra.mxu0 0
      %2567 = vmatprep.subr.bf16.mxu0 0
      %2568 = vmatpush1.bf16.msra.mxu0 0
      %2569 = vmatprep.subr.bf16.mxu0 0
      %2570 = vmatpush1.bf16.msra.mxu0 0
      %2571 = vmatprep.subr.bf16.mxu0 0
      %2572 = vmatpush1.bf16.msra.mxu0 0
      %2573 = vmatprep.subr.bf16.mxu0 0
      %2574 = vmatpush1.bf16.msra.mxu0 0
      %2575 = vmatprep.subr.bf16.mxu0 0
      %2576 = vmatpush1.bf16.msra.mxu0 0
      %2577 = vmatprep.subr.bf16.mxu0 0
      %2578 = vmatpush1.bf16.msra.mxu0 0
      %2579 = vmatprep.subr.bf16.mxu0 0
      %2580 = vmatpush1.bf16.msra.mxu0 0
      %2581 = vmatprep.subr.bf16.mxu0 0
      %2582 = vmatpush1.bf16.msra.mxu0 0
      %2583 = vmatprep.subr.bf16.mxu0 0
      %2584 = vmatpush1.bf16.msra.mxu0 0
      %2585 = vmatprep.mubr.bf16.mxu0 0
      %2586 = vmatmul.mubr.bf16.gmra.mrb[0].mxu0 %v2428
      %v2587 = vpop.f32.mrb[0].mxu0
      %v2588 = vadd.f32 0.0, %v2587
      %v2589 = vpop.f32.mrb[0].mxu0
      %v2590 = vadd.f32 0.0, %v2589
      %v2591 = vpop.f32.mrb[0].mxu0
      %v2592 = vpop.f32.mrb[0].mxu0
      %2593 = vdwg.mxu0
      %2594 = vmatprep.subr.bf16.mxu0 %v2372
      %2595 = vmatpush1.bf16.msra.mxu0 %v2371
      %2596 = vmatprep.subr.bf16.mxu0 %v2388
      %2597 = vmatpush1.bf16.msra.mxu0 %v2387
      %2598 = vmatprep.subr.bf16.mxu0 0
      %2599 = vmatpush1.bf16.msra.mxu0 0
      %2600 = vmatprep.subr.bf16.mxu0 0
      %2601 = vmatpush1.bf16.msra.mxu0 0
      %2602 = vmatprep.subr.bf16.mxu0 0
      %2603 = vmatpush1.bf16.msra.mxu0 0
      %2604 = vmatprep.subr.bf16.mxu0 0
      %2605 = vmatpush1.bf16.msra.mxu0 0
      %2606 = vmatprep.subr.bf16.mxu0 0
      %2607 = vmatpush1.bf16.msra.mxu0 0
      %2608 = vmatprep.subr.bf16.mxu0 0
      %2609 = vmatpush1.bf16.msra.mxu0 0
      %2610 = vmatprep.subr.bf16.mxu0 0
      %2611 = vmatpush1.bf16.msra.mxu0 0
      %2612 = vmatprep.subr.bf16.mxu0 0
      %2613 = vmatpush1.bf16.msra.mxu0 0
      %2614 = vmatprep.subr.bf16.mxu0 0
      %2615 = vmatpush1.bf16.msra.mxu0 0
      %2616 = vmatprep.subr.bf16.mxu0 0
      %2617 = vmatpush1.bf16.msra.mxu0 0
      %2618 = vmatprep.subr.bf16.mxu0 0
      %2619 = vmatpush1.bf16.msra.mxu0 0
      %2620 = vmatprep.subr.bf16.mxu0 0
      %2621 = vmatpush1.bf16.msra.mxu0 0
      %2622 = vmatprep.subr.bf16.mxu0 0
      %2623 = vmatpush1.bf16.msra.mxu0 0
      %2624 = vmatprep.subr.bf16.mxu0 0
      %2625 = vmatpush1.bf16.msra.mxu0 0
      %2626 = vmatprep.mubr.bf16.mxu0 0
      %2627 = vmatmul.mubr.bf16.gmra.mrb[0].mxu0 %v2428
      %v2628 = vpop.f32.mrb[0].mxu0
      %v2629 = vadd.f32 0.0, %v2628
      %v2630 = vpop.f32.mrb[0].mxu0
      %v2631 = vadd.f32 0.0, %v2630
      %v2632 = vpop.f32.mrb[0].mxu0
      %v2633 = vpop.f32.mrb[0].mxu0
      %2634 = vdwg.mxu0
      %2635 = vmatprep.subr.bf16.mxu0 %v2374
      %2636 = vmatpush1.bf16.msra.mxu0 %v2373
      %2637 = vmatprep.subr.bf16.mxu0 %v2390
      %2638 = vmatpush1.bf16.msra.mxu0 %v2389
      %2639 = vmatprep.subr.bf16.mxu0 0
      %2640 = vmatpush1.bf16.msra.mxu0 0
      %2641 = vmatprep.subr.bf16.mxu0 0
      %2642 = vmatpush1.bf16.msra.mxu0 0
      %2643 = vmatprep.subr.bf16.mxu0 0
      %2644 = vmatpush1.bf16.msra.mxu0 0
      %2645 = vmatprep.subr.bf16.mxu0 0
      %2646 = vmatpush1.bf16.msra.mxu0 0
      %2647 = vmatprep.subr.bf16.mxu0 0
      %2648 = vmatpush1.bf16.msra.mxu0 0
      %2649 = vmatprep.subr.bf16.mxu0 0
      %2650 = vmatpush1.bf16.msra.mxu0 0
      %2651 = vmatprep.subr.bf16.mxu0 0
      %2652 = vmatpush1.bf16.msra.mxu0 0
      %2653 = vmatprep.subr.bf16.mxu0 0
      %2654 = vmatpush1.bf16.msra.mxu0 0
      %2655 = vmatprep.subr.bf16.mxu0 0
      %2656 = vmatpush1.bf16.msra.mxu0 0
      %2657 = vmatprep.subr.bf16.mxu0 0
      %2658 = vmatpush1.bf16.msra.mxu0 0
      %2659 = vmatprep.subr.bf16.mxu0 0
      %2660 = vmatpush1.bf16.msra.mxu0 0
      %2661 = vmatprep.subr.bf16.mxu0 0
      %2662 = vmatpush1.bf16.msra.mxu0 0
      %2663 = vmatprep.subr.bf16.mxu0 0
      %2664 = vmatpush1.bf16.msra.mxu0 0
      %2665 = vmatprep.subr.bf16.mxu0 0
      %2666 = vmatpush1.bf16.msra.mxu0 0
      %2667 = vmatprep.mubr.bf16.mxu0 0
      %2668 = vmatmul.mubr.bf16.gmra.mrb[0].mxu0 %v2428
      %v2669 = vpop.f32.mrb[0].mxu0
      %v2670 = vadd.f32 0.0, %v2669
      %v2671 = vpop.f32.mrb[0].mxu0
      %v2672 = vadd.f32 0.0, %v2671
      %v2673 = vpop.f32.mrb[0].mxu0
      %v2674 = vpop.f32.mrb[0].mxu0
      %2675 = vdwg.mxu0
      %2676 = vmatprep.subr.bf16.mxu0 %v2376
      %2677 = vmatpush1.bf16.msra.mxu0 %v2375
      %2678 = vmatprep.subr.bf16.mxu0 %v2392
      %2679 = vmatpush1.bf16.msra.mxu0 %v2391
      %2680 = vmatprep.subr.bf16.mxu0 0
      %2681 = vmatpush1.bf16.msra.mxu0 0
      %2682 = vmatprep.subr.bf16.mxu0 0
      %2683 = vmatpush1.bf16.msra.mxu0 0
      %2684 = vmatprep.subr.bf16.mxu0 0
      %2685 = vmatpush1.bf16.msra.mxu0 0
      %2686 = vmatprep.subr.bf16.mxu0 0
      %2687 = vmatpush1.bf16.msra.mxu0 0
      %2688 = vmatprep.subr.bf16.mxu0 0
      %2689 = vmatpush1.bf16.msra.mxu0 0
      %2690 = vmatprep.subr.bf16.mxu0 0
      %2691 = vmatpush1.bf16.msra.mxu0 0
      %2692 = vmatprep.subr.bf16.mxu0 0
      %2693 = vmatpush1.bf16.msra.mxu0 0
      %2694 = vmatprep.subr.bf16.mxu0 0
      %2695 = vmatpush1.bf16.msra.mxu0 0
      %2696 = vmatprep.subr.bf16.mxu0 0
      %2697 = vmatpush1.bf16.msra.mxu0 0
      %2698 = vmatprep.subr.bf16.mxu0 0
      %2699 = vmatpush1.bf16.msra.mxu0 0
      %2700 = vmatprep.subr.bf16.mxu0 0
      %2701 = vmatpush1.bf16.msra.mxu0 0
      %2702 = vmatprep.subr.bf16.mxu0 0
      %2703 = vmatpush1.bf16.msra.mxu0 0
      %2704 = vmatprep.subr.bf16.mxu0 0
      %2705 = vmatpush1.bf16.msra.mxu0 0
      %2706 = vmatprep.subr.bf16.mxu0 0
      %2707 = vmatpush1.bf16.msra.mxu0 0
      %2708 = vmatprep.mubr.bf16.mxu0 0
      %2709 = vmatmul.mubr.bf16.gmra.mrb[0].mxu0 %v2428
      %v2710 = vpop.f32.mrb[0].mxu0
      %v2711 = vadd.f32 0.0, %v2710
      %v2712 = vpop.f32.mrb[0].mxu0
      %v2713 = vadd.f32 0.0, %v2712
      %v2714 = vpop.f32.mrb[0].mxu0
      %v2715 = vpop.f32.mrb[0].mxu0
      %2716 = vdwg.mxu0
      %2717 = vmatprep.subr.bf16.mxu0 %v2378
      %2718 = vmatpush1.bf16.msra.mxu0 %v2377
      %2719 = vmatprep.subr.bf16.mxu0 %v2394
      %2720 = vmatpush1.bf16.msra.mxu0 %v2393
      %2721 = vmatprep.subr.bf16.mxu0 0
      %2722 = vmatpush1.bf16.msra.mxu0 0
      %2723 = vmatprep.subr.bf16.mxu0 0
      %2724 = vmatpush1.bf16.msra.mxu0 0
      %2725 = vmatprep.subr.bf16.mxu0 0
      %2726 = vmatpush1.bf16.msra.mxu0 0
      %2727 = vmatprep.subr.bf16.mxu0 0
      %2728 = vmatpush1.bf16.msra.mxu0 0
      %2729 = vmatprep.subr.bf16.mxu0 0
      %2730 = vmatpush1.bf16.msra.mxu0 0
      %2731 = vmatprep.subr.bf16.mxu0 0
      %2732 = vmatpush1.bf16.msra.mxu0 0
      %2733 = vmatprep.subr.bf16.mxu0 0
      %2734 = vmatpush1.bf16.msra.mxu0 0
      %2735 = vmatprep.subr.bf16.mxu0 0
      %2736 = vmatpush1.bf16.msra.mxu0 0
      %2737 = vmatprep.subr.bf16.mxu0 0
      %2738 = vmatpush1.bf16.msra.mxu0 0
      %2739 = vmatprep.subr.bf16.mxu0 0
      %2740 = vmatpush1.bf16.msra.mxu0 0
      %2741 = vmatprep.subr.bf16.mxu0 0
      %2742 = vmatpush1.bf16.msra.mxu0 0
      %2743 = vmatprep.subr.bf16.mxu0 0
      %2744 = vmatpush1.bf16.msra.mxu0 0
      %2745 = vmatprep.subr.bf16.mxu0 0
      %2746 = vmatpush1.bf16.msra.mxu0 0
      %2747 = vmatprep.subr.bf16.mxu0 0
      %2748 = vmatpush1.bf16.msra.mxu0 0
      %2749 = vmatprep.mubr.bf16.mxu0 0
      %2750 = vmatmul.mubr.bf16.gmra.mrb[0].mxu0 %v2428
      %v2751 = vpop.f32.mrb[0].mxu0
      %v2752 = vadd.f32 0.0, %v2751
      %v2753 = vpop.f32.mrb[0].mxu0
      %v2754 = vadd.f32 0.0, %v2753
      %v2755 = vpop.f32.mrb[0].mxu0
      %v2756 = vpop.f32.mrb[0].mxu0
      %2757 = vdwg.mxu0
      %v2759 = vrot.slane %v2266, 4
      %v2792 = vunpack.c.l.b16 %v2233
      %v2793 = vunpack.c.h.b16 %v2233
      %v2794 = vunpack.c.l.b16 %v2234
      %v2795 = vunpack.c.h.b16 %v2234
      %v2796 = vunpack.c.l.b16 %v2235
      %v2797 = vunpack.c.h.b16 %v2235
      %v2798 = vunpack.c.l.b16 %v2236
      %v2799 = vunpack.c.h.b16 %v2236
      %v2800 = vunpack.c.l.b16 %v2237
      %v2801 = vunpack.c.h.b16 %v2237
      %v2802 = vunpack.c.l.b16 %v2238
      %v2803 = vunpack.c.h.b16 %v2238
      %v2804 = vunpack.c.l.b16 %v2239
      %v2805 = vunpack.c.h.b16 %v2239
      %v2806 = vunpack.c.l.b16 %v2240
      %v2807 = vunpack.c.h.b16 %v2240
      %v2808 = vunpack.c.l.b16 %v2241
      %v2809 = vunpack.c.h.b16 %v2241
      %v2810 = vunpack.c.l.b16 %v2242
      %v2811 = vunpack.c.h.b16 %v2242
      %v2812 = vunpack.c.l.b16 %v2243
      %v2813 = vunpack.c.h.b16 %v2243
      %v2814 = vunpack.c.l.b16 %v2244
      %v2815 = vunpack.c.h.b16 %v2244
      %v2816 = vunpack.c.l.b16 %v2245
      %v2817 = vunpack.c.h.b16 %v2245
      %v2818 = vunpack.c.l.b16 %v2246
      %v2819 = vunpack.c.h.b16 %v2246
      %v2820 = vunpack.c.l.b16 %v2247
      %v2821 = vunpack.c.h.b16 %v2247
      %v2822 = vunpack.c.l.b16 %v2248
      %v2823 = vunpack.c.h.b16 %v2248
      %v2824 = vunpack.c.l.b16 %v2249
      %v2825 = vunpack.c.h.b16 %v2249
      %v2826 = vunpack.c.l.b16 %v2250
      %v2827 = vunpack.c.h.b16 %v2250
      %v2828 = vunpack.c.l.b16 %v2251
      %v2829 = vunpack.c.h.b16 %v2251
      %v2830 = vunpack.c.l.b16 %v2252
      %v2831 = vunpack.c.h.b16 %v2252
      %v2832 = vunpack.c.l.b16 %v2253
      %v2833 = vunpack.c.h.b16 %v2253
      %v2834 = vunpack.c.l.b16 %v2254
      %v2835 = vunpack.c.h.b16 %v2254
      %v2836 = vunpack.c.l.b16 %v2255
      %v2837 = vunpack.c.h.b16 %v2255
      %v2838 = vunpack.c.l.b16 %v2256
      %v2839 = vunpack.c.h.b16 %v2256
      %v2840 = vunpack.c.l.b16 %v2257
      %v2841 = vunpack.c.h.b16 %v2257
      %v2842 = vunpack.c.l.b16 %v2258
      %v2843 = vunpack.c.h.b16 %v2258
      %v2844 = vunpack.c.l.b16 %v2259
      %v2845 = vunpack.c.h.b16 %v2259
      %v2846 = vunpack.c.l.b16 %v2260
      %v2847 = vunpack.c.h.b16 %v2260
      %v2848 = vunpack.c.l.b16 %v2261
      %v2849 = vunpack.c.h.b16 %v2261
      %v2850 = vunpack.c.l.b16 %v2262
      %v2851 = vunpack.c.h.b16 %v2262
      %v2852 = vunpack.c.l.b16 %v2263
      %v2853 = vunpack.c.h.b16 %v2263
      %v2854 = vunpack.c.l.b16 %v2264
      %v2855 = vunpack.c.h.b16 %v2264
      %v2856 = vpack.c.b16 %v2808, %v2792
      %v2857 = vpack.c.b16 %v2809, %v2793
      %v2858 = vpack.c.b16 %v2810, %v2794
      %v2859 = vpack.c.b16 %v2811, %v2795
      %v2860 = vpack.c.b16 %v2812, %v2796
      %v2861 = vpack.c.b16 %v2813, %v2797
      %v2862 = vpack.c.b16 %v2814, %v2798
      %v2863 = vpack.c.b16 %v2815, %v2799
      %v2864 = vpack.c.b16 %v2816, %v2800
      %v2865 = vpack.c.b16 %v2817, %v2801
      %v2866 = vpack.c.b16 %v2818, %v2802
      %v2867 = vpack.c.b16 %v2819, %v2803
      %v2868 = vpack.c.b16 %v2820, %v2804
      %v2869 = vpack.c.b16 %v2821, %v2805
      %v2870 = vpack.c.b16 %v2822, %v2806
      %v2871 = vpack.c.b16 %v2823, %v2807
      %v2872 = vpack.c.b16 %v2840, %v2824
      %v2873 = vpack.c.b16 %v2841, %v2825
      %v2874 = vpack.c.b16 %v2842, %v2826
      %v2875 = vpack.c.b16 %v2843, %v2827
      %v2876 = vpack.c.b16 %v2844, %v2828
      %v2877 = vpack.c.b16 %v2845, %v2829
      %v2878 = vpack.c.b16 %v2846, %v2830
      %v2879 = vpack.c.b16 %v2847, %v2831
      %v2880 = vpack.c.b16 %v2848, %v2832
      %v2881 = vpack.c.b16 %v2849, %v2833
      %v2882 = vpack.c.b16 %v2850, %v2834
      %v2883 = vpack.c.b16 %v2851, %v2835
      %v2884 = vpack.c.b16 %v2852, %v2836
      %v2885 = vpack.c.b16 %v2853, %v2837
      %v2886 = vpack.c.b16 %v2854, %v2838
      %v2887 = vpack.c.b16 %v2855, %v2839
      %v2921 = vsel %vm1146, %v2759, 0
      %2923 = vmatprep.subr.bf16.mxu0 %v2857
      %2924 = vmatpush1.bf16.msra.mxu0 %v2856
      %2925 = vmatprep.subr.bf16.mxu0 %v2873
      %2926 = vmatpush1.bf16.msra.mxu0 %v2872
      %2927 = vmatprep.subr.bf16.mxu0 0
      %2928 = vmatpush1.bf16.msra.mxu0 0
      %2929 = vmatprep.subr.bf16.mxu0 0
      %2930 = vmatpush1.bf16.msra.mxu0 0
      %2931 = vmatprep.subr.bf16.mxu0 0
      %2932 = vmatpush1.bf16.msra.mxu0 0
      %2933 = vmatprep.subr.bf16.mxu0 0
      %2934 = vmatpush1.bf16.msra.mxu0 0
      %2935 = vmatprep.subr.bf16.mxu0 0
      %2936 = vmatpush1.bf16.msra.mxu0 0
      %2937 = vmatprep.subr.bf16.mxu0 0
      %2938 = vmatpush1.bf16.msra.mxu0 0
      %2939 = vmatprep.subr.bf16.mxu0 0
      %2940 = vmatpush1.bf16.msra.mxu0 0
      %2941 = vmatprep.subr.bf16.mxu0 0
      %2942 = vmatpush1.bf16.msra.mxu0 0
      %2943 = vmatprep.subr.bf16.mxu0 0
      %2944 = vmatpush1.bf16.msra.mxu0 0
      %2945 = vmatprep.subr.bf16.mxu0 0
      %2946 = vmatpush1.bf16.msra.mxu0 0
      %2947 = vmatprep.subr.bf16.mxu0 0
      %2948 = vmatpush1.bf16.msra.mxu0 0
      %2949 = vmatprep.subr.bf16.mxu0 0
      %2950 = vmatpush1.bf16.msra.mxu0 0
      %2951 = vmatprep.subr.bf16.mxu0 0
      %2952 = vmatpush1.bf16.msra.mxu0 0
      %2953 = vmatprep.subr.bf16.mxu0 0
      %2954 = vmatpush1.bf16.msra.mxu0 0
      %2955 = vmatprep.mubr.bf16.mxu0 0
      %2956 = vmatmul.mubr.bf16.gmra.mrb[0].mxu0 %v2921
      %v2957 = vpop.f32.mrb[0].mxu0
      %v2958 = vadd.f32 0.0, %v2957
      %v2959 = vpop.f32.mrb[0].mxu0
      %v2960 = vadd.f32 0.0, %v2959
      %v2961 = vpop.f32.mrb[0].mxu0
      %v2962 = vpop.f32.mrb[0].mxu0
      %2963 = vdwg.mxu0
      %2964 = vmatprep.subr.bf16.mxu0 %v2859
      %2965 = vmatpush1.bf16.msra.mxu0 %v2858
      %2966 = vmatprep.subr.bf16.mxu0 %v2875
      %2967 = vmatpush1.bf16.msra.mxu0 %v2874
      %2968 = vmatprep.subr.bf16.mxu0 0
      %2969 = vmatpush1.bf16.msra.mxu0 0
      %2970 = vmatprep.subr.bf16.mxu0 0
      %2971 = vmatpush1.bf16.msra.mxu0 0
      %2972 = vmatprep.subr.bf16.mxu0 0
      %2973 = vmatpush1.bf16.msra.mxu0 0
      %2974 = vmatprep.subr.bf16.mxu0 0
      %2975 = vmatpush1.bf16.msra.mxu0 0
      %2976 = vmatprep.subr.bf16.mxu0 0
      %2977 = vmatpush1.bf16.msra.mxu0 0
      %2978 = vmatprep.subr.bf16.mxu0 0
      %2979 = vmatpush1.bf16.msra.mxu0 0
      %2980 = vmatprep.subr.bf16.mxu0 0
      %2981 = vmatpush1.bf16.msra.mxu0 0
      %2982 = vmatprep.subr.bf16.mxu0 0
      %2983 = vmatpush1.bf16.msra.mxu0 0
      %2984 = vmatprep.subr.bf16.mxu0 0
      %2985 = vmatpush1.bf16.msra.mxu0 0
      %2986 = vmatprep.subr.bf16.mxu0 0
      %2987 = vmatpush1.bf16.msra.mxu0 0
      %2988 = vmatprep.subr.bf16.mxu0 0
      %2989 = vmatpush1.bf16.msra.mxu0 0
      %2990 = vmatprep.subr.bf16.mxu0 0
      %2991 = vmatpush1.bf16.msra.mxu0 0
      %2992 = vmatprep.subr.bf16.mxu0 0
      %2993 = vmatpush1.bf16.msra.mxu0 0
      %2994 = vmatprep.subr.bf16.mxu0 0
      %2995 = vmatpush1.bf16.msra.mxu0 0
      %2996 = vmatprep.mubr.bf16.mxu0 0
      %2997 = vmatmul.mubr.bf16.gmra.mrb[0].mxu0 %v2921
      %v2998 = vpop.f32.mrb[0].mxu0
      %v2999 = vadd.f32 0.0, %v2998
      %v3000 = vpop.f32.mrb[0].mxu0
      %v3001 = vadd.f32 0.0, %v3000
      %v3002 = vpop.f32.mrb[0].mxu0
      %v3003 = vpop.f32.mrb[0].mxu0
      %3004 = vdwg.mxu0
      %3005 = vmatprep.subr.bf16.mxu0 %v2861
      %3006 = vmatpush1.bf16.msra.mxu0 %v2860
      %3007 = vmatprep.subr.bf16.mxu0 %v2877
      %3008 = vmatpush1.bf16.msra.mxu0 %v2876
      %3009 = vmatprep.subr.bf16.mxu0 0
      %3010 = vmatpush1.bf16.msra.mxu0 0
      %3011 = vmatprep.subr.bf16.mxu0 0
      %3012 = vmatpush1.bf16.msra.mxu0 0
      %3013 = vmatprep.subr.bf16.mxu0 0
      %3014 = vmatpush1.bf16.msra.mxu0 0
      %3015 = vmatprep.subr.bf16.mxu0 0
      %3016 = vmatpush1.bf16.msra.mxu0 0
      %3017 = vmatprep.subr.bf16.mxu0 0
      %3018 = vmatpush1.bf16.msra.mxu0 0
      %3019 = vmatprep.subr.bf16.mxu0 0
      %3020 = vmatpush1.bf16.msra.mxu0 0
      %3021 = vmatprep.subr.bf16.mxu0 0
      %3022 = vmatpush1.bf16.msra.mxu0 0
      %3023 = vmatprep.subr.bf16.mxu0 0
      %3024 = vmatpush1.bf16.msra.mxu0 0
      %3025 = vmatprep.subr.bf16.mxu0 0
      %3026 = vmatpush1.bf16.msra.mxu0 0
      %3027 = vmatprep.subr.bf16.mxu0 0
      %3028 = vmatpush1.bf16.msra.mxu0 0
      %3029 = vmatprep.subr.bf16.mxu0 0
      %3030 = vmatpush1.bf16.msra.mxu0 0
      %3031 = vmatprep.subr.bf16.mxu0 0
      %3032 = vmatpush1.bf16.msra.mxu0 0
      %3033 = vmatprep.subr.bf16.mxu0 0
      %3034 = vmatpush1.bf16.msra.mxu0 0
      %3035 = vmatprep.subr.bf16.mxu0 0
      %3036 = vmatpush1.bf16.msra.mxu0 0
      %3037 = vmatprep.mubr.bf16.mxu0 0
      %3038 = vmatmul.mubr.bf16.gmra.mrb[0].mxu0 %v2921
      %v3039 = vpop.f32.mrb[0].mxu0
      %v3040 = vadd.f32 0.0, %v3039
      %v3041 = vpop.f32.mrb[0].mxu0
      %v3042 = vadd.f32 0.0, %v3041
      %v3043 = vpop.f32.mrb[0].mxu0
      %v3044 = vpop.f32.mrb[0].mxu0
      %3045 = vdwg.mxu0
      %3046 = vmatprep.subr.bf16.mxu0 %v2863
      %3047 = vmatpush1.bf16.msra.mxu0 %v2862
      %3048 = vmatprep.subr.bf16.mxu0 %v2879
      %3049 = vmatpush1.bf16.msra.mxu0 %v2878
      %3050 = vmatprep.subr.bf16.mxu0 0
      %3051 = vmatpush1.bf16.msra.mxu0 0
      %3052 = vmatprep.subr.bf16.mxu0 0
      %3053 = vmatpush1.bf16.msra.mxu0 0
      %3054 = vmatprep.subr.bf16.mxu0 0
      %3055 = vmatpush1.bf16.msra.mxu0 0
      %3056 = vmatprep.subr.bf16.mxu0 0
      %3057 = vmatpush1.bf16.msra.mxu0 0
      %3058 = vmatprep.subr.bf16.mxu0 0
      %3059 = vmatpush1.bf16.msra.mxu0 0
      %3060 = vmatprep.subr.bf16.mxu0 0
      %3061 = vmatpush1.bf16.msra.mxu0 0
      %3062 = vmatprep.subr.bf16.mxu0 0
      %3063 = vmatpush1.bf16.msra.mxu0 0
      %3064 = vmatprep.subr.bf16.mxu0 0
      %3065 = vmatpush1.bf16.msra.mxu0 0
      %3066 = vmatprep.subr.bf16.mxu0 0
      %3067 = vmatpush1.bf16.msra.mxu0 0
      %3068 = vmatprep.subr.bf16.mxu0 0
      %3069 = vmatpush1.bf16.msra.mxu0 0
      %3070 = vmatprep.subr.bf16.mxu0 0
      %3071 = vmatpush1.bf16.msra.mxu0 0
      %3072 = vmatprep.subr.bf16.mxu0 0
      %3073 = vmatpush1.bf16.msra.mxu0 0
      %3074 = vmatprep.subr.bf16.mxu0 0
      %3075 = vmatpush1.bf16.msra.mxu0 0
      %3076 = vmatprep.subr.bf16.mxu0 0
      %3077 = vmatpush1.bf16.msra.mxu0 0
      %3078 = vmatprep.mubr.bf16.mxu0 0
      %3079 = vmatmul.mubr.bf16.gmra.mrb[0].mxu0 %v2921
      %v3080 = vpop.f32.mrb[0].mxu0
      %v3081 = vadd.f32 0.0, %v3080
      %v3082 = vpop.f32.mrb[0].mxu0
      %v3083 = vadd.f32 0.0, %v3082
      %v3084 = vpop.f32.mrb[0].mxu0
      %v3085 = vpop.f32.mrb[0].mxu0
      %3086 = vdwg.mxu0
      %3087 = vmatprep.subr.bf16.mxu0 %v2865
      %3088 = vmatpush1.bf16.msra.mxu0 %v2864
      %3089 = vmatprep.subr.bf16.mxu0 %v2881
      %3090 = vmatpush1.bf16.msra.mxu0 %v2880
      %3091 = vmatprep.subr.bf16.mxu0 0
      %3092 = vmatpush1.bf16.msra.mxu0 0
      %3093 = vmatprep.subr.bf16.mxu0 0
      %3094 = vmatpush1.bf16.msra.mxu0 0
      %3095 = vmatprep.subr.bf16.mxu0 0
      %3096 = vmatpush1.bf16.msra.mxu0 0
      %3097 = vmatprep.subr.bf16.mxu0 0
      %3098 = vmatpush1.bf16.msra.mxu0 0
      %3099 = vmatprep.subr.bf16.mxu0 0
      %3100 = vmatpush1.bf16.msra.mxu0 0
      %3101 = vmatprep.subr.bf16.mxu0 0
      %3102 = vmatpush1.bf16.msra.mxu0 0
      %3103 = vmatprep.subr.bf16.mxu0 0
      %3104 = vmatpush1.bf16.msra.mxu0 0
      %3105 = vmatprep.subr.bf16.mxu0 0
      %3106 = vmatpush1.bf16.msra.mxu0 0
      %3107 = vmatprep.subr.bf16.mxu0 0
      %3108 = vmatpush1.bf16.msra.mxu0 0
      %3109 = vmatprep.subr.bf16.mxu0 0
      %3110 = vmatpush1.bf16.msra.mxu0 0
      %3111 = vmatprep.subr.bf16.mxu0 0
      %3112 = vmatpush1.bf16.msra.mxu0 0
      %3113 = vmatprep.subr.bf16.mxu0 0
      %3114 = vmatpush1.bf16.msra.mxu0 0
      %3115 = vmatprep.subr.bf16.mxu0 0
      %3116 = vmatpush1.bf16.msra.mxu0 0
      %3117 = vmatprep.subr.bf16.mxu0 0
      %3118 = vmatpush1.bf16.msra.mxu0 0
      %3119 = vmatprep.mubr.bf16.mxu0 0
      %3120 = vmatmul.mubr.bf16.gmra.mrb[0].mxu0 %v2921
      %v3121 = vpop.f32.mrb[0].mxu0
      %v3122 = vadd.f32 0.0, %v3121
      %v3123 = vpop.f32.mrb[0].mxu0
      %v3124 = vadd.f32 0.0, %v3123
      %v3125 = vpop.f32.mrb[0].mxu0
      %v3126 = vpop.f32.mrb[0].mxu0
      %3127 = vdwg.mxu0
      %3128 = vmatprep.subr.bf16.mxu0 %v2867
      %3129 = vmatpush1.bf16.msra.mxu0 %v2866
      %3130 = vmatprep.subr.bf16.mxu0 %v2883
      %3131 = vmatpush1.bf16.msra.mxu0 %v2882
      %3132 = vmatprep.subr.bf16.mxu0 0
      %3133 = vmatpush1.bf16.msra.mxu0 0
      %3134 = vmatprep.subr.bf16.mxu0 0
      %3135 = vmatpush1.bf16.msra.mxu0 0
      %3136 = vmatprep.subr.bf16.mxu0 0
      %3137 = vmatpush1.bf16.msra.mxu0 0
      %3138 = vmatprep.subr.bf16.mxu0 0
      %3139 = vmatpush1.bf16.msra.mxu0 0
      %3140 = vmatprep.subr.bf16.mxu0 0
      %3141 = vmatpush1.bf16.msra.mxu0 0
      %3142 = vmatprep.subr.bf16.mxu0 0
      %3143 = vmatpush1.bf16.msra.mxu0 0
      %3144 = vmatprep.subr.bf16.mxu0 0
      %3145 = vmatpush1.bf16.msra.mxu0 0
      %3146 = vmatprep.subr.bf16.mxu0 0
      %3147 = vmatpush1.bf16.msra.mxu0 0
      %3148 = vmatprep.subr.bf16.mxu0 0
      %3149 = vmatpush1.bf16.msra.mxu0 0
      %3150 = vmatprep.subr.bf16.mxu0 0
      %3151 = vmatpush1.bf16.msra.mxu0 0
      %3152 = vmatprep.subr.bf16.mxu0 0
      %3153 = vmatpush1.bf16.msra.mxu0 0
      %3154 = vmatprep.subr.bf16.mxu0 0
      %3155 = vmatpush1.bf16.msra.mxu0 0
      %3156 = vmatprep.subr.bf16.mxu0 0
      %3157 = vmatpush1.bf16.msra.mxu0 0
      %3158 = vmatprep.subr.bf16.mxu0 0
      %3159 = vmatpush1.bf16.msra.mxu0 0
      %3160 = vmatprep.mubr.bf16.mxu0 0
      %3161 = vmatmul.mubr.bf16.gmra.mrb[0].mxu0 %v2921
      %v3162 = vpop.f32.mrb[0].mxu0
      %v3163 = vadd.f32 0.0, %v3162
      %v3164 = vpop.f32.mrb[0].mxu0
      %v3165 = vadd.f32 0.0, %v3164
      %v3166 = vpop.f32.mrb[0].mxu0
      %v3167 = vpop.f32.mrb[0].mxu0
      %3168 = vdwg.mxu0
      %3169 = vmatprep.subr.bf16.mxu0 %v2869
      %3170 = vmatpush1.bf16.msra.mxu0 %v2868
      %3171 = vmatprep.subr.bf16.mxu0 %v2885
      %3172 = vmatpush1.bf16.msra.mxu0 %v2884
      %3173 = vmatprep.subr.bf16.mxu0 0
      %3174 = vmatpush1.bf16.msra.mxu0 0
      %3175 = vmatprep.subr.bf16.mxu0 0
      %3176 = vmatpush1.bf16.msra.mxu0 0
      %3177 = vmatprep.subr.bf16.mxu0 0
      %3178 = vmatpush1.bf16.msra.mxu0 0
      %3179 = vmatprep.subr.bf16.mxu0 0
      %3180 = vmatpush1.bf16.msra.mxu0 0
      %3181 = vmatprep.subr.bf16.mxu0 0
      %3182 = vmatpush1.bf16.msra.mxu0 0
      %3183 = vmatprep.subr.bf16.mxu0 0
      %3184 = vmatpush1.bf16.msra.mxu0 0
      %3185 = vmatprep.subr.bf16.mxu0 0
      %3186 = vmatpush1.bf16.msra.mxu0 0
      %3187 = vmatprep.subr.bf16.mxu0 0
      %3188 = vmatpush1.bf16.msra.mxu0 0
      %3189 = vmatprep.subr.bf16.mxu0 0
      %3190 = vmatpush1.bf16.msra.mxu0 0
      %3191 = vmatprep.subr.bf16.mxu0 0
      %3192 = vmatpush1.bf16.msra.mxu0 0
      %3193 = vmatprep.subr.bf16.mxu0 0
      %3194 = vmatpush1.bf16.msra.mxu0 0
      %3195 = vmatprep.subr.bf16.mxu0 0
      %3196 = vmatpush1.bf16.msra.mxu0 0
      %3197 = vmatprep.subr.bf16.mxu0 0
      %3198 = vmatpush1.bf16.msra.mxu0 0
      %3199 = vmatprep.subr.bf16.mxu0 0
      %3200 = vmatpush1.bf16.msra.mxu0 0
      %3201 = vmatprep.mubr.bf16.mxu0 0
      %3202 = vmatmul.mubr.bf16.gmra.mrb[0].mxu0 %v2921
      %v3203 = vpop.f32.mrb[0].mxu0
      %v3204 = vadd.f32 0.0, %v3203
      %v3205 = vpop.f32.mrb[0].mxu0
      %v3206 = vadd.f32 0.0, %v3205
      %v3207 = vpop.f32.mrb[0].mxu0
      %v3208 = vpop.f32.mrb[0].mxu0
      %3209 = vdwg.mxu0
      %3210 = vmatprep.subr.bf16.mxu0 %v2871
      %3211 = vmatpush1.bf16.msra.mxu0 %v2870
      %3212 = vmatprep.subr.bf16.mxu0 %v2887
      %3213 = vmatpush1.bf16.msra.mxu0 %v2886
      %3214 = vmatprep.subr.bf16.mxu0 0
      %3215 = vmatpush1.bf16.msra.mxu0 0
      %3216 = vmatprep.subr.bf16.mxu0 0
      %3217 = vmatpush1.bf16.msra.mxu0 0
      %3218 = vmatprep.subr.bf16.mxu0 0
      %3219 = vmatpush1.bf16.msra.mxu0 0
      %3220 = vmatprep.subr.bf16.mxu0 0
      %3221 = vmatpush1.bf16.msra.mxu0 0
      %3222 = vmatprep.subr.bf16.mxu0 0
      %3223 = vmatpush1.bf16.msra.mxu0 0
      %3224 = vmatprep.subr.bf16.mxu0 0
      %3225 = vmatpush1.bf16.msra.mxu0 0
      %3226 = vmatprep.subr.bf16.mxu0 0
      %3227 = vmatpush1.bf16.msra.mxu0 0
      %3228 = vmatprep.subr.bf16.mxu0 0
      %3229 = vmatpush1.bf16.msra.mxu0 0
      %3230 = vmatprep.subr.bf16.mxu0 0
      %3231 = vmatpush1.bf16.msra.mxu0 0
      %3232 = vmatprep.subr.bf16.mxu0 0
      %3233 = vmatpush1.bf16.msra.mxu0 0
      %3234 = vmatprep.subr.bf16.mxu0 0
      %3235 = vmatpush1.bf16.msra.mxu0 0
      %3236 = vmatprep.subr.bf16.mxu0 0
      %3237 = vmatpush1.bf16.msra.mxu0 0
      %3238 = vmatprep.subr.bf16.mxu0 0
      %3239 = vmatpush1.bf16.msra.mxu0 0
      %3240 = vmatprep.subr.bf16.mxu0 0
      %3241 = vmatpush1.bf16.msra.mxu0 0
      %3242 = vmatprep.mubr.bf16.mxu0 0
      %3243 = vmatmul.mubr.bf16.gmra.mrb[0].mxu0 %v2921
      %v3244 = vpop.f32.mrb[0].mxu0
      %v3245 = vadd.f32 0.0, %v3244
      %v3246 = vpop.f32.mrb[0].mxu0
      %v3247 = vadd.f32 0.0, %v3246
      %v3248 = vpop.f32.mrb[0].mxu0
      %v3249 = vpop.f32.mrb[0].mxu0
      %3250 = vdwg.mxu0
      %v3253 = vcombine.low %v2465, %v2467
      %v3255 = vunpack.c.l.s4 1966171168
      %v3256 = vunpack.c.0.s8 %v3255
      %v3257 = vlaneseq
      %v3258 = vshrl.u32 %v3257, 7
      %v3259 = vsub.s32 %v3256, %v3258
      %v3260 = vrot.slane %v3253, %v3259
      %v3262 = vunpack.c.l.s4 1966171168
      %v3263 = vunpack.c.0.s8 %v3262
      %v3264 = vlaneseq
      %v3265 = vshrl.u32 %v3264, 7
      %v3266 = vsub.s32 %v3263, %v3265
      %v3267 = vrot.slane %v3260, %v3266
      %v3269 = vadd.f32 %v2232, %v3267
      %v3272 = vcombine.low %v2958, %v2960
      %v3274 = vunpack.c.l.s4 1966171168
      %v3275 = vunpack.c.0.s8 %v3274
      %v3276 = vlaneseq
      %v3277 = vshrl.u32 %v3276, 7
      %v3278 = vsub.s32 %v3275, %v3277
      %v3279 = vrot.slane %v3272, %v3278
      %v3281 = vunpack.c.l.s4 1966171168
      %v3282 = vunpack.c.0.s8 %v3281
      %v3283 = vlaneseq
      %v3284 = vshrl.u32 %v3283, 7
      %v3285 = vsub.s32 %v3282, %v3284
      %v3286 = vrot.slane %v3279, %v3285
      %v3288 = vadd.f32 %v2265, %v3286
      %v3291 = vcombine.low %v2506, %v2508
      %v3293 = vunpack.c.l.s4 1966171168
      %v3294 = vunpack.c.0.s8 %v3293
      %v3295 = vlaneseq
      %v3296 = vshrl.u32 %v3295, 7
      %v3297 = vsub.s32 %v3294, %v3296
      %v3298 = vrot.slane %v3291, %v3297
      %v3299 = vcombine.high %v3298, %v3298
      %v3301 = vunpack.c.l.s4 1966171168
      %v3302 = vunpack.c.0.s8 %v3301
      %v3303 = vlaneseq
      %v3304 = vshrl.u32 %v3303, 7
      %v3305 = vsub.s32 %v3302, %v3304
      %v3306 = vrot.slane %v3299, %v3305
      %v3308 = vadd.f32 %v3269, %v3306
      %v3311 = vcombine.low %v2999, %v3001
      %v3313 = vunpack.c.l.s4 1966171168
      %v3314 = vunpack.c.0.s8 %v3313
      %v3315 = vlaneseq
      %v3316 = vshrl.u32 %v3315, 7
      %v3317 = vsub.s32 %v3314, %v3316
      %v3318 = vrot.slane %v3311, %v3317
      %v3319 = vcombine.high %v3318, %v3318
      %v3321 = vunpack.c.l.s4 1966171168
      %v3322 = vunpack.c.0.s8 %v3321
      %v3323 = vlaneseq
      %v3324 = vshrl.u32 %v3323, 7
      %v3325 = vsub.s32 %v3322, %v3324
      %v3326 = vrot.slane %v3319, %v3325
      %v3328 = vadd.f32 %v3288, %v3326
      %v3331 = vcombine.low %v2547, %v2549
      %v3333 = vunpack.c.l.s4 1966171168
      %v3334 = vunpack.c.0.s8 %v3333
      %v3335 = vlaneseq
      %v3336 = vshrl.u32 %v3335, 7
      %v3337 = vsub.s32 %v3334, %v3336
      %v3338 = vrot.slane %v3331, %v3337
      %v3340 = vunpack.c.l.s4 1966171168
      %v3341 = vunpack.c.0.s8 %v3340
      %v3342 = vlaneseq
      %v3343 = vshrl.u32 %v3342, 7
      %v3344 = vsub.s32 %v3341, %v3343
      %v3345 = vrot.slane %v3338, %v3344
      %v3346 = vcombine.high %v3345, %v3345
      %v3348 = vadd.f32 %v3308, %v3346
      %v3351 = vcombine.low %v3040, %v3042
      %v3353 = vunpack.c.l.s4 1966171168
      %v3354 = vunpack.c.0.s8 %v3353
      %v3355 = vlaneseq
      %v3356 = vshrl.u32 %v3355, 7
      %v3357 = vsub.s32 %v3354, %v3356
      %v3358 = vrot.slane %v3351, %v3357
      %v3360 = vunpack.c.l.s4 1966171168
      %v3361 = vunpack.c.0.s8 %v3360
      %v3362 = vlaneseq
      %v3363 = vshrl.u32 %v3362, 7
      %v3364 = vsub.s32 %v3361, %v3363
      %v3365 = vrot.slane %v3358, %v3364
      %v3366 = vcombine.high %v3365, %v3365
      %v3368 = vadd.f32 %v3328, %v3366
      %v3371 = vcombine.low %v2588, %v2590
      %v3373 = vunpack.c.l.s4 1966171168
      %v3374 = vunpack.c.0.s8 %v3373
      %v3375 = vlaneseq
      %v3376 = vshrl.u32 %v3375, 7
      %v3377 = vsub.s32 %v3374, %v3376
      %v3378 = vrot.slane %v3371, %v3377
      %v3379 = vcombine.high %v3378, %v3378
      %v3381 = vunpack.c.l.s4 1966171168
      %v3382 = vunpack.c.0.s8 %v3381
      %v3383 = vlaneseq
      %v3384 = vshrl.u32 %v3383, 7
      %v3385 = vsub.s32 %v3382, %v3384
      %v3386 = vrot.slane %v3379, %v3385
      %v3387 = vcombine.high %v3386, %v3386
      %v3389 = vadd.f32 %v3348, %v3387
      %v3392 = vcombine.low %v3081, %v3083
      %v3394 = vunpack.c.l.s4 1966171168
      %v3395 = vunpack.c.0.s8 %v3394
      %v3396 = vlaneseq
      %v3397 = vshrl.u32 %v3396, 7
      %v3398 = vsub.s32 %v3395, %v3397
      %v3399 = vrot.slane %v3392, %v3398
      %v3400 = vcombine.high %v3399, %v3399
      %v3402 = vunpack.c.l.s4 1966171168
      %v3403 = vunpack.c.0.s8 %v3402
      %v3404 = vlaneseq
      %v3405 = vshrl.u32 %v3404, 7
      %v3406 = vsub.s32 %v3403, %v3405
      %v3407 = vrot.slane %v3400, %v3406
      %v3408 = vcombine.high %v3407, %v3407
      %v3410 = vadd.f32 %v3368, %v3408
      %v3413 = vcombine.high %v2629, %v2631
      %v3415 = vunpack.c.l.s4 1966171168
      %v3416 = vunpack.c.0.s8 %v3415
      %v3417 = vlaneseq
      %v3418 = vshrl.u32 %v3417, 7
      %v3419 = vsub.s32 %v3416, %v3418
      %v3420 = vrot.slane %v3413, %v3419
      %v3422 = vunpack.c.l.s4 1966171168
      %v3423 = vunpack.c.0.s8 %v3422
      %v3424 = vlaneseq
      %v3425 = vshrl.u32 %v3424, 7
      %v3426 = vsub.s32 %v3423, %v3425
      %v3427 = vrot.slane %v3420, %v3426
      %v3429 = vadd.f32 %v3389, %v3427
      %v3432 = vcombine.high %v3122, %v3124
      %v3434 = vunpack.c.l.s4 1966171168
      %v3435 = vunpack.c.0.s8 %v3434
      %v3436 = vlaneseq
      %v3437 = vshrl.u32 %v3436, 7
      %v3438 = vsub.s32 %v3435, %v3437
      %v3439 = vrot.slane %v3432, %v3438
      %v3441 = vunpack.c.l.s4 1966171168
      %v3442 = vunpack.c.0.s8 %v3441
      %v3443 = vlaneseq
      %v3444 = vshrl.u32 %v3443, 7
      %v3445 = vsub.s32 %v3442, %v3444
      %v3446 = vrot.slane %v3439, %v3445
      %v3448 = vadd.f32 %v3410, %v3446
      %v3451 = vcombine.high %v2670, %v2672
      %v3453 = vunpack.c.l.s4 1966171168
      %v3454 = vunpack.c.0.s8 %v3453
      %v3455 = vlaneseq
      %v3456 = vshrl.u32 %v3455, 7
      %v3457 = vsub.s32 %v3454, %v3456
      %v3458 = vrot.slane %v3451, %v3457
      %v3459 = vcombine.high %v3458, %v3458
      %v3461 = vunpack.c.l.s4 1966171168
      %v3462 = vunpack.c.0.s8 %v3461
      %v3463 = vlaneseq
      %v3464 = vshrl.u32 %v3463, 7
      %v3465 = vsub.s32 %v3462, %v3464
      %v3466 = vrot.slane %v3459, %v3465
      %v3468 = vadd.f32 %v3429, %v3466
      %v3471 = vcombine.high %v3163, %v3165
      %v3473 = vunpack.c.l.s4 1966171168
      %v3474 = vunpack.c.0.s8 %v3473
      %v3475 = vlaneseq
      %v3476 = vshrl.u32 %v3475, 7
      %v3477 = vsub.s32 %v3474, %v3476
      %v3478 = vrot.slane %v3471, %v3477
      %v3479 = vcombine.high %v3478, %v3478
      %v3481 = vunpack.c.l.s4 1966171168
      %v3482 = vunpack.c.0.s8 %v3481
      %v3483 = vlaneseq
      %v3484 = vshrl.u32 %v3483, 7
      %v3485 = vsub.s32 %v3482, %v3484
      %v3486 = vrot.slane %v3479, %v3485
      %v3488 = vadd.f32 %v3448, %v3486
      %v3491 = vcombine.high %v2711, %v2713
      %v3493 = vunpack.c.l.s4 1966171168
      %v3494 = vunpack.c.0.s8 %v3493
      %v3495 = vlaneseq
      %v3496 = vshrl.u32 %v3495, 7
      %v3497 = vsub.s32 %v3494, %v3496
      %v3498 = vrot.slane %v3491, %v3497
      %v3500 = vunpack.c.l.s4 1966171168
      %v3501 = vunpack.c.0.s8 %v3500
      %v3502 = vlaneseq
      %v3503 = vshrl.u32 %v3502, 7
      %v3504 = vsub.s32 %v3501, %v3503
      %v3505 = vrot.slane %v3498, %v3504
      %v3506 = vcombine.high %v3505, %v3505
      %v3508 = vadd.f32 %v3468, %v3506
      %v3511 = vcombine.high %v3204, %v3206
      %v3513 = vunpack.c.l.s4 1966171168
      %v3514 = vunpack.c.0.s8 %v3513
      %v3515 = vlaneseq
      %v3516 = vshrl.u32 %v3515, 7
      %v3517 = vsub.s32 %v3514, %v3516
      %v3518 = vrot.slane %v3511, %v3517
      %v3520 = vunpack.c.l.s4 1966171168
      %v3521 = vunpack.c.0.s8 %v3520
      %v3522 = vlaneseq
      %v3523 = vshrl.u32 %v3522, 7
      %v3524 = vsub.s32 %v3521, %v3523
      %v3525 = vrot.slane %v3518, %v3524
      %v3526 = vcombine.high %v3525, %v3525
      %v3528 = vadd.f32 %v3488, %v3526
      %v3531 = vcombine.high %v2752, %v2754
      %v3533 = vunpack.c.l.s4 1966171168
      %v3534 = vunpack.c.0.s8 %v3533
      %v3535 = vlaneseq
      %v3536 = vshrl.u32 %v3535, 7
      %v3537 = vsub.s32 %v3534, %v3536
      %v3538 = vrot.slane %v3531, %v3537
      %v3539 = vcombine.high %v3538, %v3538
      %v3541 = vunpack.c.l.s4 1966171168
      %v3542 = vunpack.c.0.s8 %v3541
      %v3543 = vlaneseq
      %v3544 = vshrl.u32 %v3543, 7
      %v3545 = vsub.s32 %v3542, %v3544
      %v3546 = vrot.slane %v3539, %v3545
      %v3547 = vcombine.high %v3546, %v3546
      %v3549 = vadd.f32 %v3508, %v3547
      %v3552 = vcombine.high %v3245, %v3247
      %v3554 = vunpack.c.l.s4 1966171168
      %v3555 = vunpack.c.0.s8 %v3554
      %v3556 = vlaneseq
      %v3557 = vshrl.u32 %v3556, 7
      %v3558 = vsub.s32 %v3555, %v3557
      %v3559 = vrot.slane %v3552, %v3558
      %v3560 = vcombine.high %v3559, %v3559
      %v3562 = vunpack.c.l.s4 1966171168
      %v3563 = vunpack.c.0.s8 %v3562
      %v3564 = vlaneseq
      %v3565 = vshrl.u32 %v3564, 7
      %v3566 = vsub.s32 %v3563, %v3565
      %v3567 = vrot.slane %v3560, %v3566
      %v3568 = vcombine.high %v3567, %v3567
      %v3570 = vadd.f32 %v3528, %v3568
      %v3571 = vlaneseq
      %vm3572 = vcmp.ge.s32.totalorder %v3571, 0
      %vm3573 = vcmp.lt.s32.totalorder %v3571, 256
      %vm3574 = vmand %vm3572, %vm3573
      %3575 = vst.msk [vmem:[%s991] sm:$0x3] %vm3574, %v3549
      %3576 = vst.msk [vmem:[%s995] sm:$0x3] %vm3574, %v3570
      %p3577 = scmp.lt.s32.totalorder %s77, 1
      %s3578 = scalar_select %p3577, %s77, 1
      %s3579 = smul.addr %s3578, 2
      %s3580 = scalar_lea.vmem %s63, %s3579
      %p3581 = scmp.lt.s32.totalorder %s77, 1
      %s3582 = scalar_select %p3581, %s77, 1
      %s3583 = smul.addr %s3582, 2
      %s3584 = scalar_lea.vmem %s65, %s3583
      // Predicated region
      $region145: #{mixmlp_forward.1} parent=143 // pred_check
        %p3585 = pneg %p751
      $region146: #{mixmlp_forward.1} parent=143 // pred_check_branch
        %3587 = sbr.rel (%p3585) target = $region148
      $region147: #{mixmlp_forward.1} parent=143 // pred_region
        _
      $region148: #{mixmlp_forward.1} parent=143 // pred_fallthru
        _
      // Predicated region
      $region149: #{mixmlp_forward.1} parent=143 // pred_check
        %p3588 = pneg %p777
      $region150: #{mixmlp_forward.1} parent=143 // pred_check_branch
        %3590 = sbr.rel (%p3588) target = $region152
      $region151: #{mixmlp_forward.1} parent=143 // pred_region
        _
      $region152: #{mixmlp_forward.1} parent=143 // pred_fallthru
        _
    $region144: #{mixmlp_forward.1} parent=5 // pred_fallthru
      _
    %p3591 = scmp.le.s32.totalorder 2, %s72
    // Predicated region
    $region153: #{mixmlp_forward.1} parent=5 // pred_check
      %p3592 = pneg %p3591
    $region154: #{mixmlp_forward.1} parent=5 // pred_check_branch
      %3594 = sbr.rel (%p3592) target = $region156
    $region155: #{mixmlp_forward.1} parent=5 // pred_region
      %s3595 = ssub.s32 %s72, 2
      // Predicated region
      $region157: #{mixmlp_forward.1} parent=155 // pred_check
        %p3596 = pneg %p757
      $region158: #{mixmlp_forward.1} parent=155 // pred_check_branch
        %3598 = sbr.rel (%p3596) target = $region160
      $region159: #{mixmlp_forward.1} parent=155 // pred_region
        %p3599 = scmp.lt.s32.totalorder %s78, 1
        %s3600 = scalar_select %p3599, %s78, 1
        %s3601 = smul.addr %s3600, 2
        %s3602 = scalar_lea.vmem %s63, %s3601
      $region160: #{mixmlp_forward.1} parent=155 // pred_fallthru
        _
      // Predicated region
      $region161: #{mixmlp_forward.1} parent=155 // pred_check
        %p3603 = pneg %p783
      $region162: #{mixmlp_forward.1} parent=155 // pred_check_branch
        %3605 = sbr.rel (%p3603) target = $region164
      $region163: #{mixmlp_forward.1} parent=155 // pred_region
        %p3606 = scmp.lt.s32.totalorder %s78, 1
        %s3607 = scalar_select %p3606, %s78, 1
        %s3608 = smul.addr %s3607, 2
        %s3609 = scalar_lea.vmem %s65, %s3608
      $region164: #{mixmlp_forward.1} parent=155 // pred_fallthru
        _
    $region156: #{mixmlp_forward.1} parent=5 // pred_fallthru
      _
  $region6: #{mixmlp_forward.1} parent=0 // loop_footer
    %s76 = sadd.s32 1, %s72
  $region7: #{mixmlp_forward.1} parent=0 // loop_footer_branch
    %71 = sbr.rel target = $region3
  $region8: #{mixmlp_forward.1} parent=0 // loop_exit
    _

</llo_original>
